<compile_context>
chip_gen: v7x
topology: tpu7x:2x2x1
jax: 0.10.0
libtpu: 0.0.40
codegen_flags: <defaults>
</compile_context>

<pallas_src>
import jax
import jax.numpy as jnp
from jax.experimental import pallas as pl
from jax.experimental.pallas import tpu as pltpu

DT = 1e-3
TAU_MEM_INV = 100.0               # 1 / 1e-2
TAU_SYN_INV = 200.0               # 1 / 5e-3
ALPHA = DT * TAU_MEM_INV          # 0.1   membrane integration step
GAMMA = 1.0 - DT * TAU_SYN_INV    # 0.8   synaptic current retention
ENC_V_TH = 1.0                    # encoder built WITHOUT custom params -> norse default
LIF_V_TH = 0.33                   # hidden LIF cells use LIFParameters(v_th=0.33)
SEQ_LEN = 24

# Collapsed LI readout: v_out[T-1] = sum_t c_t * (s3_t @ Wo^T), where
#   i_jump_t = i_{t-1} + r_t ; v_t = (1-ALPHA) v_{t-1} + ALPHA i_jump_t ; i_t = GAMMA i_jump_t
# gives the closed form below (compile-time Python constants).
_LI_COEFFS = tuple(
    ALPHA
    * ((1.0 - ALPHA) ** (SEQ_LEN - t) - GAMMA ** (SEQ_LEN - t))
    / ((1.0 - ALPHA) - GAMMA)
    for t in range(SEQ_LEN)
)


def _lif_recurrence(a_buf, s_buf, tile_b, hidden):
    """Feed-forward LIF recurrence over all timesteps (norse lif_feed_forward_step,
    v_leak = v_reset = 0).  Reads per-step input currents from `a_buf`, writes 0/1
    spikes into `s_buf`.  Per-step working set is just (tile_b, hidden) v and i."""
    v = jnp.zeros((tile_b, hidden), jnp.float32)
    i = jnp.zeros((tile_b, hidden), jnp.float32)
    for t in range(SEQ_LEN):
        lo, hi = t * tile_b, (t + 1) * tile_b
        v_dec = v + ALPHA * (i - v)                 # voltage update uses OLD current
        spk = v_dec > LIF_V_TH
        s_buf[lo:hi, :] = jnp.where(spk, 1.0, 0.0)
        v = jnp.where(spk, 0.0, v_dec)              # reset via select
        i = GAMMA * i + a_buf[lo:hi, :]             # decay old current, add input jump


def _lif_recurrence_readout(a_buf, tile_b, hidden):
    """Layer-3 LIF recurrence; instead of storing spikes it accumulates the
    LI-readout-weighted spike sum  acc = sum_t c_t * s3_t  (collapsed readout)."""
    v = jnp.zeros((tile_b, hidden), jnp.float32)
    i = jnp.zeros((tile_b, hidden), jnp.float32)
    acc = jnp.zeros((tile_b, hidden), jnp.float32)
    for t in range(SEQ_LEN):
        lo, hi = t * tile_b, (t + 1) * tile_b
        v_dec = v + ALPHA * (i - v)
        spk = v_dec > LIF_V_TH
        acc = acc + jnp.where(spk, _LI_COEFFS[t], 0.0)
        v = jnp.where(spk, 0.0, v_dec)
        i = GAMMA * i + a_buf[lo:hi, :]
    return acc


def _snn_kernel(scal_ref, x_ref, w1_ref, w2_ref, w3_ref, wo_ref, out_ref,
                zenc_buf, a_buf, s_buf):
    """Full 24-step SNN forward for one (padded) batch tile, all-VMEM resident."""
    fs = scal_ref[0]                       # feature_scalar
    es = scal_ref[1]                       # encoder_scalar

    x = x_ref[...]
    B = x.shape[0]                         # batch tile (multiple of 8), static
    H = w1_ref.shape[1]                    # padded hidden

    # ---- Phase 1: constant-current LIF encoder (elementwise), all SEQ_LEN steps ----
    # forward(): spikes = encoder(2*fs*x); layer-1 drive = 1.2*lin1(5*es*spikes)
    #          = spikes_scaled @ W1^T with spike value 6*es  (folded here for free).
    inp_cur = (2.0 * fs) * x
    zero_f = jnp.zeros_like(x)
    spike_val = zero_f + 6.0 * es          # broadcast once, hoisted out of the loop
    v_enc = zero_f
    for t in range(SEQ_LEN):
        lo, hi = t * B, (t + 1) * B
        v_enc = v_enc + ALPHA * (inp_cur - v_enc)
        spk = v_enc > ENC_V_TH             # encoder threshold is the norse DEFAULT 1.0
        zenc_buf[lo:hi, :] = jnp.where(spk, spike_val, zero_f)
        v_enc = jnp.where(spk, zero_f, v_enc)

    # ---- Phase 2: layer 1 — ONE time-stacked matmul covering all timesteps ----
    a_buf[...] = jnp.dot(zenc_buf[...], w1_ref[...], preferred_element_type=jnp.float32)

    # ---- Phase 3: per-layer elementwise recurrences + one matmul per layer ----
    _lif_recurrence(a_buf, s_buf, B, H)                       # lif1: a1 -> s1
    a_buf[...] = jnp.dot(s_buf[...], w2_ref[...], preferred_element_type=jnp.float32)
    _lif_recurrence(a_buf, s_buf, B, H)                       # lif2: a2 -> s2
    a_buf[...] = jnp.dot(s_buf[...], w3_ref[...], preferred_element_type=jnp.float32)
    acc = _lif_recurrence_readout(a_buf, B, H)                # lif3 + collapsed LI readout

    # ---- Phase 4: one small readout matmul: v_out[T-1] = (sum_t c_t s3_t) @ Wo^T ----
    out_ref[...] = jnp.dot(acc, wo_ref[...],
                           preferred_element_type=jnp.float32).astype(out_ref.dtype)


def _round_up(n, m):
    return -(-n // m) * m


def _choose_tile_b(b_pad8):
    # batch <= 8: a single 8-row tile; never pad a tiny batch just to split it.
    if b_pad8 <= 8:
        return b_pad8
    # otherwise: at least two tiles (so the "parallel" batch axis feeds both v7x
    # TensorCores), capped at 32 so per-step recurrence state (v, i, acc) stays in
    # vregs and the time-stacked scratch stays well inside v5e's 16 MiB scoped VMEM.
    half = _round_up(-(-b_pad8 // 2), 8)
    return min(32, half)


def mix_classification_big_snn(x, w1, w2, w3, wo, feature_scalar, encoder_scalar):
    """x: (B, 2*input_size) f32.  Weights are (in, out).  Returns (B, n_classes)."""
    B, F = x.shape
    H = w1.shape[1]
    C = wo.shape[1]

    Bp8 = _round_up(max(B, 1), 8)
    TILE_B = _choose_tile_b(Bp8)
    Bp = _round_up(Bp8, TILE_B)
    Fp = _round_up(F, 128)
    Hp = _round_up(H, 128)
    Cp = _round_up(C, 128)

    f32 = jnp.float32
    x_p = jnp.zeros((Bp, Fp), f32).at[:B, :F].set(x.astype(f32))
    w1_p = jnp.zeros((Fp, Hp), f32).at[:F, :H].set(w1.astype(f32))
    # 1.2 * lin{2,3}(z) == z @ (1.2*W^T): fold the compile-time constant ONCE, in the
    # wrapper, so no weight matrix is rescaled / re-materialized inside the kernel.
    w2_p = jnp.zeros((Hp, Hp), f32).at[:H, :H].set(1.2 * w2.astype(f32))
    w3_p = jnp.zeros((Hp, Hp), f32).at[:H, :H].set(1.2 * w3.astype(f32))
    wo_p = jnp.zeros((Hp, Cp), f32).at[:H, :C].set(wo.astype(f32))

    scal = jnp.stack([jnp.asarray(feature_scalar, f32).reshape(()),
                      jnp.asarray(encoder_scalar, f32).reshape(())])

    rows = SEQ_LEN * TILE_B
    grid_spec = pltpu.PrefetchScalarGridSpec(
        num_scalar_prefetch=0,
        grid=(Bp // TILE_B,),
        in_specs=[
            pl.BlockSpec(memory_space=pltpu.MemorySpace.SMEM),   # [feature, encoder] scalars
            pl.BlockSpec((TILE_B, Fp), lambda b: (b, 0)),        # x, batch-tiled
            pl.BlockSpec((Fp, Hp), lambda b: (0, 0)),            # w1 (replicated)
            pl.BlockSpec((Hp, Hp), lambda b: (0, 0)),            # 1.2*w2
            pl.BlockSpec((Hp, Hp), lambda b: (0, 0)),            # 1.2*w3
            pl.BlockSpec((Hp, Cp), lambda b: (0, 0)),            # wo
        ],
        out_specs=pl.BlockSpec((TILE_B, Cp), lambda b: (b, 0)),
        scratch_shapes=[
            pltpu.VMEM((rows, Fp), f32),   # stacked (6*es-scaled) encoder spikes
            pltpu.VMEM((rows, Hp), f32),   # ping: per-layer input currents a_k
            pltpu.VMEM((rows, Hp), f32),   # pong: per-layer spikes s_k
        ],
    )

    out = pl.pallas_call(
        _snn_kernel,
        out_shape=jax.ShapeDtypeStruct((Bp, Cp), f32),
        grid_spec=grid_spec,
        compiler_params=pltpu.CompilerParams(
            dimension_semantics=("parallel",)),
    )(scal, x_p, w1_p, w2_p, w3_p, wo_p)

    return out[:B, :C]


if __name__ == "__main__":
    key = jax.random.PRNGKey(0)
    k_x, k1, k2, k3, k4 = jax.random.split(key, 5)

    batch = 2
    input_size = 16            # module takes 2*input_size features
    n_classes = 10
    F = 2 * input_size
    H = 256

    x = jax.random.normal(k_x, (batch, F), dtype=jnp.float32)

    # Deterministic parameter init (shapes from __init__); stored as (in, out).
    w1 = jax.random.normal(k1, (F, H), dtype=jnp.float32) / jnp.sqrt(F)
    w2 = jax.random.normal(k2, (H, H), dtype=jnp.float32) / jnp.sqrt(H)
    w3 = jax.random.normal(k3, (H, H), dtype=jnp.float32) / jnp.sqrt(H)
    wo = jax.random.normal(k4, (H, n_classes), dtype=jnp.float32) / jnp.sqrt(H)

    feature_scalar = jnp.ones((1,), jnp.float32)
    encoder_scalar = jnp.ones((1,), jnp.float32)

    # TODO(synk): Dropout(0.2) layers are treated as identity (eval-mode); training-mode
    # stochastic masking is not implemented.
    out = mix_classification_big_snn(x, w1, w2, w3, wo, feature_scalar, encoder_scalar)
    out = jax.block_until_ready(out)
    assert out.shape == (batch, n_classes)
    assert bool(jnp.all(jnp.isfinite(out)))
    print("KERNEL_OK")
</pallas_src>

<mosaic_0001>
module attributes {stable_mosaic.version = 11 : i64} {
  func.func @_snn_kernel(%arg0: i32, %arg1: memref<2xf32, #tpu.memory_space<smem>>, %arg2: memref<8x128xf32, #tpu.memory_space<vmem>>, %arg3: memref<128x256xf32, #tpu.memory_space<vmem>>, %arg4: memref<256x256xf32, #tpu.memory_space<vmem>>, %arg5: memref<256x256xf32, #tpu.memory_space<vmem>>, %arg6: memref<256x128xf32, #tpu.memory_space<vmem>>, %arg7: memref<8x128xf32, #tpu.memory_space<vmem>>, %arg8: memref<192x128xf32, #tpu.memory_space<vmem>>, %arg9: memref<192x256xf32, #tpu.memory_space<vmem>>, %arg10: memref<192x256xf32, #tpu.memory_space<vmem>>) attributes {dimension_semantics = [#tpu.dimension_semantics<parallel>], iteration_bounds = array<i64: 1>, scalar_prefetch = 0 : i64, scratch_operands = 3 : i64, tpu.core_type = #tpu.core_type<tc>, window_params = [{transform_indices = @transform_0, window_bounds = array<i64: 2>}, {transform_indices = @transform_1, window_bounds = array<i64: 8, 128>}, {pipeline_mode = #tpu.pipeline_mode<synchronous>, transform_indices = @transform_2, window_bounds = array<i64: 128, 256>}, {pipeline_mode = #tpu.pipeline_mode<synchronous>, transform_indices = @transform_3, window_bounds = array<i64: 256, 256>}, {pipeline_mode = #tpu.pipeline_mode<synchronous>, transform_indices = @transform_4, window_bounds = array<i64: 256, 256>}, {pipeline_mode = #tpu.pipeline_mode<synchronous>, transform_indices = @transform_5, window_bounds = array<i64: 256, 128>}, {transform_indices = @transform_6, window_bounds = array<i64: 8, 128>}]} {
    %c0 = arith.constant 0 : index
    %0 = memref.load %arg1[%c0] : memref<2xf32, #tpu.memory_space<smem>>
    %c1 = arith.constant 1 : index
    %1 = memref.load %arg1[%c1] : memref<2xf32, #tpu.memory_space<smem>>
    %c0_0 = arith.constant 0 : index
    %c0_1 = arith.constant 0 : index
    %2 = vector.load %arg2[%c0_0, %c0_1] : memref<8x128xf32, #tpu.memory_space<vmem>>, vector<8x128xf32>
    %cst = arith.constant 2.000000e+00 : f32
    %3 = arith.mulf %cst, %0 : f32
    %4 = vector.broadcast %3 : f32 to vector<8x128xf32>
    %5 = arith.mulf %4, %2 : vector<8x128xf32>
    %cst_2 = arith.constant 0.000000e+00 : f32
    %6 = vector.broadcast %cst_2 : f32 to vector<8x128xf32>
    %cst_3 = arith.constant 6.000000e+00 : f32
    %7 = arith.mulf %cst_3, %1 : f32
    %8 = vector.broadcast %7 : f32 to vector<8x128xf32>
    %9 = arith.addf %6, %8 : vector<8x128xf32>
    %10 = arith.subf %5, %6 : vector<8x128xf32>
    %cst_4 = arith.constant 1.000000e-01 : f32
    %11 = vector.broadcast %cst_4 : f32 to vector<8x128xf32>
    %12 = arith.mulf %11, %10 : vector<8x128xf32>
    %13 = arith.addf %6, %12 : vector<8x128xf32>
    %cst_5 = arith.constant 1.000000e+00 : f32
    %14 = vector.broadcast %cst_5 : f32 to vector<8x128xf32>
    %15 = arith.cmpf ogt, %13, %14 : vector<8x128xf32>
    %16 = arith.select %15, %9, %6 : vector<8x128xi1>, vector<8x128xf32>
    %c0_6 = arith.constant 0 : index
    %c0_7 = arith.constant 0 : index
    %17 = vector.load %arg8[%c0_6, %c0_7] : memref<192x128xf32, #tpu.memory_space<vmem>>, vector<8x128xf32>
    tpu.vector_store %arg8[%c0_6, %c0_7], %16 {strides = array<i32>} : memref<192x128xf32, #tpu.memory_space<vmem>>, vector<8x128xf32>,
    %18 = arith.select %15, %6, %13 : vector<8x128xi1>, vector<8x128xf32>
    %19 = arith.subf %5, %18 : vector<8x128xf32>
    %cst_8 = arith.constant 1.000000e-01 : f32
    %20 = vector.broadcast %cst_8 : f32 to vector<8x128xf32>
    %21 = arith.mulf %20, %19 : vector<8x128xf32>
    %22 = arith.addf %18, %21 : vector<8x128xf32>
    %cst_9 = arith.constant 1.000000e+00 : f32
    %23 = vector.broadcast %cst_9 : f32 to vector<8x128xf32>
    %24 = arith.cmpf ogt, %22, %23 : vector<8x128xf32>
    %25 = arith.select %24, %9, %6 : vector<8x128xi1>, vector<8x128xf32>
    %c8 = arith.constant 8 : index
    %c0_10 = arith.constant 0 : index
    %26 = vector.load %arg8[%c8, %c0_10] : memref<192x128xf32, #tpu.memory_space<vmem>>, vector<8x128xf32>
    tpu.vector_store %arg8[%c8, %c0_10], %25 {strides = array<i32>} : memref<192x128xf32, #tpu.memory_space<vmem>>, vector<8x128xf32>,
    %27 = arith.select %24, %6, %22 : vector<8x128xi1>, vector<8x128xf32>
    %28 = arith.subf %5, %27 : vector<8x128xf32>
    %cst_11 = arith.constant 1.000000e-01 : f32
    %29 = vector.broadcast %cst_11 : f32 to vector<8x128xf32>
    %30 = arith.mulf %29, %28 : vector<8x128xf32>
    %31 = arith.addf %27, %30 : vector<8x128xf32>
    %cst_12 = arith.constant 1.000000e+00 : f32
    %32 = vector.broadcast %cst_12 : f32 to vector<8x128xf32>
    %33 = arith.cmpf ogt, %31, %32 : vector<8x128xf32>
    %34 = arith.select %33, %9, %6 : vector<8x128xi1>, vector<8x128xf32>
    %c16 = arith.constant 16 : index
    %c0_13 = arith.constant 0 : index
    %35 = vector.load %arg8[%c16, %c0_13] : memref<192x128xf32, #tpu.memory_space<vmem>>, vector<8x128xf32>
    tpu.vector_store %arg8[%c16, %c0_13], %34 {strides = array<i32>} : memref<192x128xf32, #tpu.memory_space<vmem>>, vector<8x128xf32>,
    %36 = arith.select %33, %6, %31 : vector<8x128xi1>, vector<8x128xf32>
    %37 = arith.subf %5, %36 : vector<8x128xf32>
    %cst_14 = arith.constant 1.000000e-01 : f32
    %38 = vector.broadcast %cst_14 : f32 to vector<8x128xf32>
    %39 = arith.mulf %38, %37 : vector<8x128xf32>
    %40 = arith.addf %36, %39 : vector<8x128xf32>
    %cst_15 = arith.constant 1.000000e+00 : f32
    %41 = vector.broadcast %cst_15 : f32 to vector<8x128xf32>
    %42 = arith.cmpf ogt, %40, %41 : vector<8x128xf32>
    %43 = arith.select %42, %9, %6 : vector<8x128xi1>, vector<8x128xf32>
    %c24 = arith.constant 24 : index
    %c0_16 = arith.constant 0 : index
    %44 = vector.load %arg8[%c24, %c0_16] : memref<192x128xf32, #tpu.memory_space<vmem>>, vector<8x128xf32>
    tpu.vector_store %arg8[%c24, %c0_16], %43 {strides = array<i32>} : memref<192x128xf32, #tpu.memory_space<vmem>>, vector<8x128xf32>,
    %45 = arith.select %42, %6, %40 : vector<8x128xi1>, vector<8x128xf32>
    %46 = arith.subf %5, %45 : vector<8x128xf32>
    %cst_17 = arith.constant 1.000000e-01 : f32
    %47 = vector.broadcast %cst_17 : f32 to vector<8x128xf32>
    %48 = arith.mulf %47, %46 : vector<8x128xf32>
    %49 = arith.addf %45, %48 : vector<8x128xf32>
    %cst_18 = arith.constant 1.000000e+00 : f32
    %50 = vector.broadcast %cst_18 : f32 to vector<8x128xf32>
    %51 = arith.cmpf ogt, %49, %50 : vector<8x128xf32>
    %52 = arith.select %51, %9, %6 : vector<8x128xi1>, vector<8x128xf32>
    %c32 = arith.constant 32 : index
    %c0_19 = arith.constant 0 : index
    %53 = vector.load %arg8[%c32, %c0_19] : memref<192x128xf32, #tpu.memory_space<vmem>>, vector<8x128xf32>
    tpu.vector_store %arg8[%c32, %c0_19], %52 {strides = array<i32>} : memref<192x128xf32, #tpu.memory_space<vmem>>, vector<8x128xf32>,
    %54 = arith.select %51, %6, %49 : vector<8x128xi1>, vector<8x128xf32>
    %55 = arith.subf %5, %54 : vector<8x128xf32>
    %cst_20 = arith.constant 1.000000e-01 : f32
    %56 = vector.broadcast %cst_20 : f32 to vector<8x128xf32>
    %57 = arith.mulf %56, %55 : vector<8x128xf32>
    %58 = arith.addf %54, %57 : vector<8x128xf32>
    %cst_21 = arith.constant 1.000000e+00 : f32
    %59 = vector.broadcast %cst_21 : f32 to vector<8x128xf32>
    %60 = arith.cmpf ogt, %58, %59 : vector<8x128xf32>
    %61 = arith.select %60, %9, %6 : vector<8x128xi1>, vector<8x128xf32>
    %c40 = arith.constant 40 : index
    %c0_22 = arith.constant 0 : index
    %62 = vector.load %arg8[%c40, %c0_22] : memref<192x128xf32, #tpu.memory_space<vmem>>, vector<8x128xf32>
    tpu.vector_store %arg8[%c40, %c0_22], %61 {strides = array<i32>} : memref<192x128xf32, #tpu.memory_space<vmem>>, vector<8x128xf32>,
    %63 = arith.select %60, %6, %58 : vector<8x128xi1>, vector<8x128xf32>
    %64 = arith.subf %5, %63 : vector<8x128xf32>
    %cst_23 = arith.constant 1.000000e-01 : f32
    %65 = vector.broadcast %cst_23 : f32 to vector<8x128xf32>
    %66 = arith.mulf %65, %64 : vector<8x128xf32>
    %67 = arith.addf %63, %66 : vector<8x128xf32>
    %cst_24 = arith.constant 1.000000e+00 : f32
    %68 = vector.broadcast %cst_24 : f32 to vector<8x128xf32>
    %69 = arith.cmpf ogt, %67, %68 : vector<8x128xf32>
    %70 = arith.select %69, %9, %6 : vector<8x128xi1>, vector<8x128xf32>
    %c48 = arith.constant 48 : index
    %c0_25 = arith.constant 0 : index
    %71 = vector.load %arg8[%c48, %c0_25] : memref<192x128xf32, #tpu.memory_space<vmem>>, vector<8x128xf32>
    tpu.vector_store %arg8[%c48, %c0_25], %70 {strides = array<i32>} : memref<192x128xf32, #tpu.memory_space<vmem>>, vector<8x128xf32>,
    %72 = arith.select %69, %6, %67 : vector<8x128xi1>, vector<8x128xf32>
    %73 = arith.subf %5, %72 : vector<8x128xf32>
    %cst_26 = arith.constant 1.000000e-01 : f32
    %74 = vector.broadcast %cst_26 : f32 to vector<8x128xf32>
    %75 = arith.mulf %74, %73 : vector<8x128xf32>
    %76 = arith.addf %72, %75 : vector<8x128xf32>
    %cst_27 = arith.constant 1.000000e+00 : f32
    %77 = vector.broadcast %cst_27 : f32 to vector<8x128xf32>
    %78 = arith.cmpf ogt, %76, %77 : vector<8x128xf32>
    %79 = arith.select %78, %9, %6 : vector<8x128xi1>, vector<8x128xf32>
    %c56 = arith.constant 56 : index
    %c0_28 = arith.constant 0 : index
    %80 = vector.load %arg8[%c56, %c0_28] : memref<192x128xf32, #tpu.memory_space<vmem>>, vector<8x128xf32>
    tpu.vector_store %arg8[%c56, %c0_28], %79 {strides = array<i32>} : memref<192x128xf32, #tpu.memory_space<vmem>>, vector<8x128xf32>,
    %81 = arith.select %78, %6, %76 : vector<8x128xi1>, vector<8x128xf32>
    %82 = arith.subf %5, %81 : vector<8x128xf32>
    %cst_29 = arith.constant 1.000000e-01 : f32
    %83 = vector.broadcast %cst_29 : f32 to vector<8x128xf32>
    %84 = arith.mulf %83, %82 : vector<8x128xf32>
    %85 = arith.addf %81, %84 : vector<8x128xf32>
    %cst_30 = arith.constant 1.000000e+00 : f32
    %86 = vector.broadcast %cst_30 : f32 to vector<8x128xf32>
    %87 = arith.cmpf ogt, %85, %86 : vector<8x128xf32>
    %88 = arith.select %87, %9, %6 : vector<8x128xi1>, vector<8x128xf32>
    %c64 = arith.constant 64 : index
    %c0_31 = arith.constant 0 : index
    %89 = vector.load %arg8[%c64, %c0_31] : memref<192x128xf32, #tpu.memory_space<vmem>>, vector<8x128xf32>
    tpu.vector_store %arg8[%c64, %c0_31], %88 {strides = array<i32>} : memref<192x128xf32, #tpu.memory_space<vmem>>, vector<8x128xf32>,
    %90 = arith.select %87, %6, %85 : vector<8x128xi1>, vector<8x128xf32>
    %91 = arith.subf %5, %90 : vector<8x128xf32>
    %cst_32 = arith.constant 1.000000e-01 : f32
    %92 = vector.broadcast %cst_32 : f32 to vector<8x128xf32>
    %93 = arith.mulf %92, %91 : vector<8x128xf32>
    %94 = arith.addf %90, %93 : vector<8x128xf32>
    %cst_33 = arith.constant 1.000000e+00 : f32
    %95 = vector.broadcast %cst_33 : f32 to vector<8x128xf32>
    %96 = arith.cmpf ogt, %94, %95 : vector<8x128xf32>
    %97 = arith.select %96, %9, %6 : vector<8x128xi1>, vector<8x128xf32>
    %c72 = arith.constant 72 : index
    %c0_34 = arith.constant 0 : index
    %98 = vector.load %arg8[%c72, %c0_34] : memref<192x128xf32, #tpu.memory_space<vmem>>, vector<8x128xf32>
    tpu.vector_store %arg8[%c72, %c0_34], %97 {strides = array<i32>} : memref<192x128xf32, #tpu.memory_space<vmem>>, vector<8x128xf32>,
    %99 = arith.select %96, %6, %94 : vector<8x128xi1>, vector<8x128xf32>
    %100 = arith.subf %5, %99 : vector<8x128xf32>
    %cst_35 = arith.constant 1.000000e-01 : f32
    %101 = vector.broadcast %cst_35 : f32 to vector<8x128xf32>
    %102 = arith.mulf %101, %100 : vector<8x128xf32>
    %103 = arith.addf %99, %102 : vector<8x128xf32>
    %cst_36 = arith.constant 1.000000e+00 : f32
    %104 = vector.broadcast %cst_36 : f32 to vector<8x128xf32>
    %105 = arith.cmpf ogt, %103, %104 : vector<8x128xf32>
    %106 = arith.select %105, %9, %6 : vector<8x128xi1>, vector<8x128xf32>
    %c80 = arith.constant 80 : index
    %c0_37 = arith.constant 0 : index
    %107 = vector.load %arg8[%c80, %c0_37] : memref<192x128xf32, #tpu.memory_space<vmem>>, vector<8x128xf32>
    tpu.vector_store %arg8[%c80, %c0_37], %106 {strides = array<i32>} : memref<192x128xf32, #tpu.memory_space<vmem>>, vector<8x128xf32>,
    %108 = arith.select %105, %6, %103 : vector<8x128xi1>, vector<8x128xf32>
    %109 = arith.subf %5, %108 : vector<8x128xf32>
    %cst_38 = arith.constant 1.000000e-01 : f32
    %110 = vector.broadcast %cst_38 : f32 to vector<8x128xf32>
    %111 = arith.mulf %110, %109 : vector<8x128xf32>
    %112 = arith.addf %108, %111 : vector<8x128xf32>
    %cst_39 = arith.constant 1.000000e+00 : f32
    %113 = vector.broadcast %cst_39 : f32 to vector<8x128xf32>
    %114 = arith.cmpf ogt, %112, %113 : vector<8x128xf32>
    %115 = arith.select %114, %9, %6 : vector<8x128xi1>, vector<8x128xf32>
    %c88 = arith.constant 88 : index
    %c0_40 = arith.constant 0 : index
    %116 = vector.load %arg8[%c88, %c0_40] : memref<192x128xf32, #tpu.memory_space<vmem>>, vector<8x128xf32>
    tpu.vector_store %arg8[%c88, %c0_40], %115 {strides = array<i32>} : memref<192x128xf32, #tpu.memory_space<vmem>>, vector<8x128xf32>,
    %117 = arith.select %114, %6, %112 : vector<8x128xi1>, vector<8x128xf32>
    %118 = arith.subf %5, %117 : vector<8x128xf32>
    %cst_41 = arith.constant 1.000000e-01 : f32
    %119 = vector.broadcast %cst_41 : f32 to vector<8x128xf32>
    %120 = arith.mulf %119, %118 : vector<8x128xf32>
    %121 = arith.addf %117, %120 : vector<8x128xf32>
    %cst_42 = arith.constant 1.000000e+00 : f32
    %122 = vector.broadcast %cst_42 : f32 to vector<8x128xf32>
    %123 = arith.cmpf ogt, %121, %122 : vector<8x128xf32>
    %124 = arith.select %123, %9, %6 : vector<8x128xi1>, vector<8x128xf32>
    %c96 = arith.constant 96 : index
    %c0_43 = arith.constant 0 : index
    %125 = vector.load %arg8[%c96, %c0_43] : memref<192x128xf32, #tpu.memory_space<vmem>>, vector<8x128xf32>
    tpu.vector_store %arg8[%c96, %c0_43], %124 {strides = array<i32>} : memref<192x128xf32, #tpu.memory_space<vmem>>, vector<8x128xf32>,
    %126 = arith.select %123, %6, %121 : vector<8x128xi1>, vector<8x128xf32>
    %127 = arith.subf %5, %126 : vector<8x128xf32>
    %cst_44 = arith.constant 1.000000e-01 : f32
    %128 = vector.broadcast %cst_44 : f32 to vector<8x128xf32>
    %129 = arith.mulf %128, %127 : vector<8x128xf32>
    %130 = arith.addf %126, %129 : vector<8x128xf32>
    %cst_45 = arith.constant 1.000000e+00 : f32
    %131 = vector.broadcast %cst_45 : f32 to vector<8x128xf32>
    %132 = arith.cmpf ogt, %130, %131 : vector<8x128xf32>
    %133 = arith.select %132, %9, %6 : vector<8x128xi1>, vector<8x128xf32>
    %c104 = arith.constant 104 : index
    %c0_46 = arith.constant 0 : index
    %134 = vector.load %arg8[%c104, %c0_46] : memref<192x128xf32, #tpu.memory_space<vmem>>, vector<8x128xf32>
    tpu.vector_store %arg8[%c104, %c0_46], %133 {strides = array<i32>} : memref<192x128xf32, #tpu.memory_space<vmem>>, vector<8x128xf32>,
    %135 = arith.select %132, %6, %130 : vector<8x128xi1>, vector<8x128xf32>
    %136 = arith.subf %5, %135 : vector<8x128xf32>
    %cst_47 = arith.constant 1.000000e-01 : f32
    %137 = vector.broadcast %cst_47 : f32 to vector<8x128xf32>
    %138 = arith.mulf %137, %136 : vector<8x128xf32>
    %139 = arith.addf %135, %138 : vector<8x128xf32>
    %cst_48 = arith.constant 1.000000e+00 : f32
    %140 = vector.broadcast %cst_48 : f32 to vector<8x128xf32>
    %141 = arith.cmpf ogt, %139, %140 : vector<8x128xf32>
    %142 = arith.select %141, %9, %6 : vector<8x128xi1>, vector<8x128xf32>
    %c112 = arith.constant 112 : index
    %c0_49 = arith.constant 0 : index
    %143 = vector.load %arg8[%c112, %c0_49] : memref<192x128xf32, #tpu.memory_space<vmem>>, vector<8x128xf32>
    tpu.vector_store %arg8[%c112, %c0_49], %142 {strides = array<i32>} : memref<192x128xf32, #tpu.memory_space<vmem>>, vector<8x128xf32>,
    %144 = arith.select %141, %6, %139 : vector<8x128xi1>, vector<8x128xf32>
    %145 = arith.subf %5, %144 : vector<8x128xf32>
    %cst_50 = arith.constant 1.000000e-01 : f32
    %146 = vector.broadcast %cst_50 : f32 to vector<8x128xf32>
    %147 = arith.mulf %146, %145 : vector<8x128xf32>
    %148 = arith.addf %144, %147 : vector<8x128xf32>
    %cst_51 = arith.constant 1.000000e+00 : f32
    %149 = vector.broadcast %cst_51 : f32 to vector<8x128xf32>
    %150 = arith.cmpf ogt, %148, %149 : vector<8x128xf32>
    %151 = arith.select %150, %9, %6 : vector<8x128xi1>, vector<8x128xf32>
    %c120 = arith.constant 120 : index
    %c0_52 = arith.constant 0 : index
    %152 = vector.load %arg8[%c120, %c0_52] : memref<192x128xf32, #tpu.memory_space<vmem>>, vector<8x128xf32>
    tpu.vector_store %arg8[%c120, %c0_52], %151 {strides = array<i32>} : memref<192x128xf32, #tpu.memory_space<vmem>>, vector<8x128xf32>,
    %153 = arith.select %150, %6, %148 : vector<8x128xi1>, vector<8x128xf32>
    %154 = arith.subf %5, %153 : vector<8x128xf32>
    %cst_53 = arith.constant 1.000000e-01 : f32
    %155 = vector.broadcast %cst_53 : f32 to vector<8x128xf32>
    %156 = arith.mulf %155, %154 : vector<8x128xf32>
    %157 = arith.addf %153, %156 : vector<8x128xf32>
    %cst_54 = arith.constant 1.000000e+00 : f32
    %158 = vector.broadcast %cst_54 : f32 to vector<8x128xf32>
    %159 = arith.cmpf ogt, %157, %158 : vector<8x128xf32>
    %160 = arith.select %159, %9, %6 : vector<8x128xi1>, vector<8x128xf32>
    %c128 = arith.constant 128 : index
    %c0_55 = arith.constant 0 : index
    %161 = vector.load %arg8[%c128, %c0_55] : memref<192x128xf32, #tpu.memory_space<vmem>>, vector<8x128xf32>
    tpu.vector_store %arg8[%c128, %c0_55], %160 {strides = array<i32>} : memref<192x128xf32, #tpu.memory_space<vmem>>, vector<8x128xf32>,
    %162 = arith.select %159, %6, %157 : vector<8x128xi1>, vector<8x128xf32>
    %163 = arith.subf %5, %162 : vector<8x128xf32>
    %cst_56 = arith.constant 1.000000e-01 : f32
    %164 = vector.broadcast %cst_56 : f32 to vector<8x128xf32>
    %165 = arith.mulf %164, %163 : vector<8x128xf32>
    %166 = arith.addf %162, %165 : vector<8x128xf32>
    %cst_57 = arith.constant 1.000000e+00 : f32
    %167 = vector.broadcast %cst_57 : f32 to vector<8x128xf32>
    %168 = arith.cmpf ogt, %166, %167 : vector<8x128xf32>
    %169 = arith.select %168, %9, %6 : vector<8x128xi1>, vector<8x128xf32>
    %c136 = arith.constant 136 : index
    %c0_58 = arith.constant 0 : index
    %170 = vector.load %arg8[%c136, %c0_58] : memref<192x128xf32, #tpu.memory_space<vmem>>, vector<8x128xf32>
    tpu.vector_store %arg8[%c136, %c0_58], %169 {strides = array<i32>} : memref<192x128xf32, #tpu.memory_space<vmem>>, vector<8x128xf32>,
    %171 = arith.select %168, %6, %166 : vector<8x128xi1>, vector<8x128xf32>
    %172 = arith.subf %5, %171 : vector<8x128xf32>
    %cst_59 = arith.constant 1.000000e-01 : f32
    %173 = vector.broadcast %cst_59 : f32 to vector<8x128xf32>
    %174 = arith.mulf %173, %172 : vector<8x128xf32>
    %175 = arith.addf %171, %174 : vector<8x128xf32>
    %cst_60 = arith.constant 1.000000e+00 : f32
    %176 = vector.broadcast %cst_60 : f32 to vector<8x128xf32>
    %177 = arith.cmpf ogt, %175, %176 : vector<8x128xf32>
    %178 = arith.select %177, %9, %6 : vector<8x128xi1>, vector<8x128xf32>
    %c144 = arith.constant 144 : index
    %c0_61 = arith.constant 0 : index
    %179 = vector.load %arg8[%c144, %c0_61] : memref<192x128xf32, #tpu.memory_space<vmem>>, vector<8x128xf32>
    tpu.vector_store %arg8[%c144, %c0_61], %178 {strides = array<i32>} : memref<192x128xf32, #tpu.memory_space<vmem>>, vector<8x128xf32>,
    %180 = arith.select %177, %6, %175 : vector<8x128xi1>, vector<8x128xf32>
    %181 = arith.subf %5, %180 : vector<8x128xf32>
    %cst_62 = arith.constant 1.000000e-01 : f32
    %182 = vector.broadcast %cst_62 : f32 to vector<8x128xf32>
    %183 = arith.mulf %182, %181 : vector<8x128xf32>
    %184 = arith.addf %180, %183 : vector<8x128xf32>
    %cst_63 = arith.constant 1.000000e+00 : f32
    %185 = vector.broadcast %cst_63 : f32 to vector<8x128xf32>
    %186 = arith.cmpf ogt, %184, %185 : vector<8x128xf32>
    %187 = arith.select %186, %9, %6 : vector<8x128xi1>, vector<8x128xf32>
    %c152 = arith.constant 152 : index
    %c0_64 = arith.constant 0 : index
    %188 = vector.load %arg8[%c152, %c0_64] : memref<192x128xf32, #tpu.memory_space<vmem>>, vector<8x128xf32>
    tpu.vector_store %arg8[%c152, %c0_64], %187 {strides = array<i32>} : memref<192x128xf32, #tpu.memory_space<vmem>>, vector<8x128xf32>,
    %189 = arith.select %186, %6, %184 : vector<8x128xi1>, vector<8x128xf32>
    %190 = arith.subf %5, %189 : vector<8x128xf32>
    %cst_65 = arith.constant 1.000000e-01 : f32
    %191 = vector.broadcast %cst_65 : f32 to vector<8x128xf32>
    %192 = arith.mulf %191, %190 : vector<8x128xf32>
    %193 = arith.addf %189, %192 : vector<8x128xf32>
    %cst_66 = arith.constant 1.000000e+00 : f32
    %194 = vector.broadcast %cst_66 : f32 to vector<8x128xf32>
    %195 = arith.cmpf ogt, %193, %194 : vector<8x128xf32>
    %196 = arith.select %195, %9, %6 : vector<8x128xi1>, vector<8x128xf32>
    %c160 = arith.constant 160 : index
    %c0_67 = arith.constant 0 : index
    %197 = vector.load %arg8[%c160, %c0_67] : memref<192x128xf32, #tpu.memory_space<vmem>>, vector<8x128xf32>
    tpu.vector_store %arg8[%c160, %c0_67], %196 {strides = array<i32>} : memref<192x128xf32, #tpu.memory_space<vmem>>, vector<8x128xf32>,
    %198 = arith.select %195, %6, %193 : vector<8x128xi1>, vector<8x128xf32>
    %199 = arith.subf %5, %198 : vector<8x128xf32>
    %cst_68 = arith.constant 1.000000e-01 : f32
    %200 = vector.broadcast %cst_68 : f32 to vector<8x128xf32>
    %201 = arith.mulf %200, %199 : vector<8x128xf32>
    %202 = arith.addf %198, %201 : vector<8x128xf32>
    %cst_69 = arith.constant 1.000000e+00 : f32
    %203 = vector.broadcast %cst_69 : f32 to vector<8x128xf32>
    %204 = arith.cmpf ogt, %202, %203 : vector<8x128xf32>
    %205 = arith.select %204, %9, %6 : vector<8x128xi1>, vector<8x128xf32>
    %c168 = arith.constant 168 : index
    %c0_70 = arith.constant 0 : index
    %206 = vector.load %arg8[%c168, %c0_70] : memref<192x128xf32, #tpu.memory_space<vmem>>, vector<8x128xf32>
    tpu.vector_store %arg8[%c168, %c0_70], %205 {strides = array<i32>} : memref<192x128xf32, #tpu.memory_space<vmem>>, vector<8x128xf32>,
    %207 = arith.select %204, %6, %202 : vector<8x128xi1>, vector<8x128xf32>
    %208 = arith.subf %5, %207 : vector<8x128xf32>
    %cst_71 = arith.constant 1.000000e-01 : f32
    %209 = vector.broadcast %cst_71 : f32 to vector<8x128xf32>
    %210 = arith.mulf %209, %208 : vector<8x128xf32>
    %211 = arith.addf %207, %210 : vector<8x128xf32>
    %cst_72 = arith.constant 1.000000e+00 : f32
    %212 = vector.broadcast %cst_72 : f32 to vector<8x128xf32>
    %213 = arith.cmpf ogt, %211, %212 : vector<8x128xf32>
    %214 = arith.select %213, %9, %6 : vector<8x128xi1>, vector<8x128xf32>
    %c176 = arith.constant 176 : index
    %c0_73 = arith.constant 0 : index
    %215 = vector.load %arg8[%c176, %c0_73] : memref<192x128xf32, #tpu.memory_space<vmem>>, vector<8x128xf32>
    tpu.vector_store %arg8[%c176, %c0_73], %214 {strides = array<i32>} : memref<192x128xf32, #tpu.memory_space<vmem>>, vector<8x128xf32>,
    %216 = arith.select %213, %6, %211 : vector<8x128xi1>, vector<8x128xf32>
    %217 = arith.subf %5, %216 : vector<8x128xf32>
    %cst_74 = arith.constant 1.000000e-01 : f32
    %218 = vector.broadcast %cst_74 : f32 to vector<8x128xf32>
    %219 = arith.mulf %218, %217 : vector<8x128xf32>
    %220 = arith.addf %216, %219 : vector<8x128xf32>
    %cst_75 = arith.constant 1.000000e+00 : f32
    %221 = vector.broadcast %cst_75 : f32 to vector<8x128xf32>
    %222 = arith.cmpf ogt, %220, %221 : vector<8x128xf32>
    %223 = arith.select %222, %9, %6 : vector<8x128xi1>, vector<8x128xf32>
    %c184 = arith.constant 184 : index
    %c0_76 = arith.constant 0 : index
    %224 = vector.load %arg8[%c184, %c0_76] : memref<192x128xf32, #tpu.memory_space<vmem>>, vector<8x128xf32>
    tpu.vector_store %arg8[%c184, %c0_76], %223 {strides = array<i32>} : memref<192x128xf32, #tpu.memory_space<vmem>>, vector<8x128xf32>,
    %c0_77 = arith.constant 0 : index
    %c0_78 = arith.constant 0 : index
    %225 = vector.load %arg8[%c0_77, %c0_78] : memref<192x128xf32, #tpu.memory_space<vmem>>, vector<192x128xf32>
    %c0_79 = arith.constant 0 : index
    %c0_80 = arith.constant 0 : index
    %226 = vector.load %arg3[%c0_79, %c0_80] : memref<128x256xf32, #tpu.memory_space<vmem>>, vector<128x256xf32>
    %cst_81 = arith.constant dense<0.000000e+00> : vector<192x256xf32>
    %227 = tpu.matmul %225, %226, %cst_81 {dimension_numbers = #tpu.dot_dimension_numbers<[1], [0], [0], [1], [0, 0, 1, 1], [], []>} : vector<192x128xf32>, vector<128x256xf32>, vector<192x256xf32> -> vector<192x256xf32>
    %c0_82 = arith.constant 0 : index
    %c0_83 = arith.constant 0 : index
    %228 = vector.load %arg9[%c0_82, %c0_83] : memref<192x256xf32, #tpu.memory_space<vmem>>, vector<192x256xf32>
    tpu.vector_store %arg9[%c0_82, %c0_83], %227 {strides = array<i32>} : memref<192x256xf32, #tpu.memory_space<vmem>>, vector<192x256xf32>,
    %cst_84 = arith.constant 0.000000e+00 : f32
    %229 = vector.broadcast %cst_84 : f32 to vector<8x256xf32>
    %cst_85 = arith.constant 0.000000e+00 : f32
    %230 = vector.broadcast %cst_85 : f32 to vector<8x256xf32>
    %231 = arith.subf %230, %229 : vector<8x256xf32>
    %cst_86 = arith.constant 1.000000e-01 : f32
    %232 = vector.broadcast %cst_86 : f32 to vector<8x256xf32>
    %233 = arith.mulf %232, %231 : vector<8x256xf32>
    %234 = arith.addf %229, %233 : vector<8x256xf32>
    %cst_87 = arith.constant 3.300000e-01 : f32
    %235 = vector.broadcast %cst_87 : f32 to vector<8x256xf32>
    %236 = arith.cmpf ogt, %234, %235 : vector<8x256xf32>
    %cst_88 = arith.constant 1.000000e+00 : f32
    %cst_89 = arith.constant 0.000000e+00 : f32
    %237 = vector.broadcast %cst_88 : f32 to vector<8x256xf32>
    %238 = vector.broadcast %cst_89 : f32 to vector<8x256xf32>
    %239 = arith.select %236, %237, %238 : vector<8x256xi1>, vector<8x256xf32>
    %c0_90 = arith.constant 0 : index
    %c0_91 = arith.constant 0 : index
    %240 = vector.load %arg10[%c0_90, %c0_91] : memref<192x256xf32, #tpu.memory_space<vmem>>, vector<8x256xf32>
    tpu.vector_store %arg10[%c0_90, %c0_91], %239 {strides = array<i32>} : memref<192x256xf32, #tpu.memory_space<vmem>>, vector<8x256xf32>,
    %cst_92 = arith.constant 0.000000e+00 : f32
    %241 = vector.broadcast %cst_92 : f32 to vector<8x256xf32>
    %242 = arith.select %236, %241, %234 : vector<8x256xi1>, vector<8x256xf32>
    %cst_93 = arith.constant 8.000000e-01 : f32
    %243 = vector.broadcast %cst_93 : f32 to vector<8x256xf32>
    %244 = arith.mulf %243, %230 : vector<8x256xf32>
    %c0_94 = arith.constant 0 : index
    %c0_95 = arith.constant 0 : index
    %245 = vector.load %arg9[%c0_94, %c0_95] : memref<192x256xf32, #tpu.memory_space<vmem>>, vector<8x256xf32>
    %246 = arith.addf %244, %245 : vector<8x256xf32>
    %247 = arith.subf %246, %242 : vector<8x256xf32>
    %cst_96 = arith.constant 1.000000e-01 : f32
    %248 = vector.broadcast %cst_96 : f32 to vector<8x256xf32>
    %249 = arith.mulf %248, %247 : vector<8x256xf32>
    %250 = arith.addf %242, %249 : vector<8x256xf32>
    %cst_97 = arith.constant 3.300000e-01 : f32
    %251 = vector.broadcast %cst_97 : f32 to vector<8x256xf32>
    %252 = arith.cmpf ogt, %250, %251 : vector<8x256xf32>
    %cst_98 = arith.constant 1.000000e+00 : f32
    %cst_99 = arith.constant 0.000000e+00 : f32
    %253 = vector.broadcast %cst_98 : f32 to vector<8x256xf32>
    %254 = vector.broadcast %cst_99 : f32 to vector<8x256xf32>
    %255 = arith.select %252, %253, %254 : vector<8x256xi1>, vector<8x256xf32>
    %c8_100 = arith.constant 8 : index
    %c0_101 = arith.constant 0 : index
    %256 = vector.load %arg10[%c8_100, %c0_101] : memref<192x256xf32, #tpu.memory_space<vmem>>, vector<8x256xf32>
    tpu.vector_store %arg10[%c8_100, %c0_101], %255 {strides = array<i32>} : memref<192x256xf32, #tpu.memory_space<vmem>>, vector<8x256xf32>,
    %cst_102 = arith.constant 0.000000e+00 : f32
    %257 = vector.broadcast %cst_102 : f32 to vector<8x256xf32>
    %258 = arith.select %252, %257, %250 : vector<8x256xi1>, vector<8x256xf32>
    %cst_103 = arith.constant 8.000000e-01 : f32
    %259 = vector.broadcast %cst_103 : f32 to vector<8x256xf32>
    %260 = arith.mulf %259, %246 : vector<8x256xf32>
    %c8_104 = arith.constant 8 : index
    %c0_105 = arith.constant 0 : index
    %261 = vector.load %arg9[%c8_104, %c0_105] : memref<192x256xf32, #tpu.memory_space<vmem>>, vector<8x256xf32>
    %262 = arith.addf %260, %261 : vector<8x256xf32>
    %263 = arith.subf %262, %258 : vector<8x256xf32>
    %cst_106 = arith.constant 1.000000e-01 : f32
    %264 = vector.broadcast %cst_106 : f32 to vector<8x256xf32>
    %265 = arith.mulf %264, %263 : vector<8x256xf32>
    %266 = arith.addf %258, %265 : vector<8x256xf32>
    %cst_107 = arith.constant 3.300000e-01 : f32
    %267 = vector.broadcast %cst_107 : f32 to vector<8x256xf32>
    %268 = arith.cmpf ogt, %266, %267 : vector<8x256xf32>
    %cst_108 = arith.constant 1.000000e+00 : f32
    %cst_109 = arith.constant 0.000000e+00 : f32
    %269 = vector.broadcast %cst_108 : f32 to vector<8x256xf32>
    %270 = vector.broadcast %cst_109 : f32 to vector<8x256xf32>
    %271 = arith.select %268, %269, %270 : vector<8x256xi1>, vector<8x256xf32>
    %c16_110 = arith.constant 16 : index
    %c0_111 = arith.constant 0 : index
    %272 = vector.load %arg10[%c16_110, %c0_111] : memref<192x256xf32, #tpu.memory_space<vmem>>, vector<8x256xf32>
    tpu.vector_store %arg10[%c16_110, %c0_111], %271 {strides = array<i32>} : memref<192x256xf32, #tpu.memory_space<vmem>>, vector<8x256xf32>,
    %cst_112 = arith.constant 0.000000e+00 : f32
    %273 = vector.broadcast %cst_112 : f32 to vector<8x256xf32>
    %274 = arith.select %268, %273, %266 : vector<8x256xi1>, vector<8x256xf32>
    %cst_113 = arith.constant 8.000000e-01 : f32
    %275 = vector.broadcast %cst_113 : f32 to vector<8x256xf32>
    %276 = arith.mulf %275, %262 : vector<8x256xf32>
    %c16_114 = arith.constant 16 : index
    %c0_115 = arith.constant 0 : index
    %277 = vector.load %arg9[%c16_114, %c0_115] : memref<192x256xf32, #tpu.memory_space<vmem>>, vector<8x256xf32>
    %278 = arith.addf %276, %277 : vector<8x256xf32>
    %279 = arith.subf %278, %274 : vector<8x256xf32>
    %cst_116 = arith.constant 1.000000e-01 : f32
    %280 = vector.broadcast %cst_116 : f32 to vector<8x256xf32>
    %281 = arith.mulf %280, %279 : vector<8x256xf32>
    %282 = arith.addf %274, %281 : vector<8x256xf32>
    %cst_117 = arith.constant 3.300000e-01 : f32
    %283 = vector.broadcast %cst_117 : f32 to vector<8x256xf32>
    %284 = arith.cmpf ogt, %282, %283 : vector<8x256xf32>
    %cst_118 = arith.constant 1.000000e+00 : f32
    %cst_119 = arith.constant 0.000000e+00 : f32
    %285 = vector.broadcast %cst_118 : f32 to vector<8x256xf32>
    %286 = vector.broadcast %cst_119 : f32 to vector<8x256xf32>
    %287 = arith.select %284, %285, %286 : vector<8x256xi1>, vector<8x256xf32>
    %c24_120 = arith.constant 24 : index
    %c0_121 = arith.constant 0 : index
    %288 = vector.load %arg10[%c24_120, %c0_121] : memref<192x256xf32, #tpu.memory_space<vmem>>, vector<8x256xf32>
    tpu.vector_store %arg10[%c24_120, %c0_121], %287 {strides = array<i32>} : memref<192x256xf32, #tpu.memory_space<vmem>>, vector<8x256xf32>,
    %cst_122 = arith.constant 0.000000e+00 : f32
    %289 = vector.broadcast %cst_122 : f32 to vector<8x256xf32>
    %290 = arith.select %284, %289, %282 : vector<8x256xi1>, vector<8x256xf32>
    %cst_123 = arith.constant 8.000000e-01 : f32
    %291 = vector.broadcast %cst_123 : f32 to vector<8x256xf32>
    %292 = arith.mulf %291, %278 : vector<8x256xf32>
    %c24_124 = arith.constant 24 : index
    %c0_125 = arith.constant 0 : index
    %293 = vector.load %arg9[%c24_124, %c0_125] : memref<192x256xf32, #tpu.memory_space<vmem>>, vector<8x256xf32>
    %294 = arith.addf %292, %293 : vector<8x256xf32>
    %295 = arith.subf %294, %290 : vector<8x256xf32>
    %cst_126 = arith.constant 1.000000e-01 : f32
    %296 = vector.broadcast %cst_126 : f32 to vector<8x256xf32>
    %297 = arith.mulf %296, %295 : vector<8x256xf32>
    %298 = arith.addf %290, %297 : vector<8x256xf32>
    %cst_127 = arith.constant 3.300000e-01 : f32
    %299 = vector.broadcast %cst_127 : f32 to vector<8x256xf32>
    %300 = arith.cmpf ogt, %298, %299 : vector<8x256xf32>
    %cst_128 = arith.constant 1.000000e+00 : f32
    %cst_129 = arith.constant 0.000000e+00 : f32
    %301 = vector.broadcast %cst_128 : f32 to vector<8x256xf32>
    %302 = vector.broadcast %cst_129 : f32 to vector<8x256xf32>
    %303 = arith.select %300, %301, %302 : vector<8x256xi1>, vector<8x256xf32>
    %c32_130 = arith.constant 32 : index
    %c0_131 = arith.constant 0 : index
    %304 = vector.load %arg10[%c32_130, %c0_131] : memref<192x256xf32, #tpu.memory_space<vmem>>, vector<8x256xf32>
    tpu.vector_store %arg10[%c32_130, %c0_131], %303 {strides = array<i32>} : memref<192x256xf32, #tpu.memory_space<vmem>>, vector<8x256xf32>,
    %cst_132 = arith.constant 0.000000e+00 : f32
    %305 = vector.broadcast %cst_132 : f32 to vector<8x256xf32>
    %306 = arith.select %300, %305, %298 : vector<8x256xi1>, vector<8x256xf32>
    %cst_133 = arith.constant 8.000000e-01 : f32
    %307 = vector.broadcast %cst_133 : f32 to vector<8x256xf32>
    %308 = arith.mulf %307, %294 : vector<8x256xf32>
    %c32_134 = arith.constant 32 : index
    %c0_135 = arith.constant 0 : index
    %309 = vector.load %arg9[%c32_134, %c0_135] : memref<192x256xf32, #tpu.memory_space<vmem>>, vector<8x256xf32>
    %310 = arith.addf %308, %309 : vector<8x256xf32>
    %311 = arith.subf %310, %306 : vector<8x256xf32>
    %cst_136 = arith.constant 1.000000e-01 : f32
    %312 = vector.broadcast %cst_136 : f32 to vector<8x256xf32>
    %313 = arith.mulf %312, %311 : vector<8x256xf32>
    %314 = arith.addf %306, %313 : vector<8x256xf32>
    %cst_137 = arith.constant 3.300000e-01 : f32
    %315 = vector.broadcast %cst_137 : f32 to vector<8x256xf32>
    %316 = arith.cmpf ogt, %314, %315 : vector<8x256xf32>
    %cst_138 = arith.constant 1.000000e+00 : f32
    %cst_139 = arith.constant 0.000000e+00 : f32
    %317 = vector.broadcast %cst_138 : f32 to vector<8x256xf32>
    %318 = vector.broadcast %cst_139 : f32 to vector<8x256xf32>
    %319 = arith.select %316, %317, %318 : vector<8x256xi1>, vector<8x256xf32>
    %c40_140 = arith.constant 40 : index
    %c0_141 = arith.constant 0 : index
    %320 = vector.load %arg10[%c40_140, %c0_141] : memref<192x256xf32, #tpu.memory_space<vmem>>, vector<8x256xf32>
    tpu.vector_store %arg10[%c40_140, %c0_141], %319 {strides = array<i32>} : memref<192x256xf32, #tpu.memory_space<vmem>>, vector<8x256xf32>,
    %cst_142 = arith.constant 0.000000e+00 : f32
    %321 = vector.broadcast %cst_142 : f32 to vector<8x256xf32>
    %322 = arith.select %316, %321, %314 : vector<8x256xi1>, vector<8x256xf32>
    %cst_143 = arith.constant 8.000000e-01 : f32
    %323 = vector.broadcast %cst_143 : f32 to vector<8x256xf32>
    %324 = arith.mulf %323, %310 : vector<8x256xf32>
    %c40_144 = arith.constant 40 : index
    %c0_145 = arith.constant 0 : index
    %325 = vector.load %arg9[%c40_144, %c0_145] : memref<192x256xf32, #tpu.memory_space<vmem>>, vector<8x256xf32>
    %326 = arith.addf %324, %325 : vector<8x256xf32>
    %327 = arith.subf %326, %322 : vector<8x256xf32>
    %cst_146 = arith.constant 1.000000e-01 : f32
    %328 = vector.broadcast %cst_146 : f32 to vector<8x256xf32>
    %329 = arith.mulf %328, %327 : vector<8x256xf32>
    %330 = arith.addf %322, %329 : vector<8x256xf32>
    %cst_147 = arith.constant 3.300000e-01 : f32
    %331 = vector.broadcast %cst_147 : f32 to vector<8x256xf32>
    %332 = arith.cmpf ogt, %330, %331 : vector<8x256xf32>
    %cst_148 = arith.constant 1.000000e+00 : f32
    %cst_149 = arith.constant 0.000000e+00 : f32
    %333 = vector.broadcast %cst_148 : f32 to vector<8x256xf32>
    %334 = vector.broadcast %cst_149 : f32 to vector<8x256xf32>
    %335 = arith.select %332, %333, %334 : vector<8x256xi1>, vector<8x256xf32>
    %c48_150 = arith.constant 48 : index
    %c0_151 = arith.constant 0 : index
    %336 = vector.load %arg10[%c48_150, %c0_151] : memref<192x256xf32, #tpu.memory_space<vmem>>, vector<8x256xf32>
    tpu.vector_store %arg10[%c48_150, %c0_151], %335 {strides = array<i32>} : memref<192x256xf32, #tpu.memory_space<vmem>>, vector<8x256xf32>,
    %cst_152 = arith.constant 0.000000e+00 : f32
    %337 = vector.broadcast %cst_152 : f32 to vector<8x256xf32>
    %338 = arith.select %332, %337, %330 : vector<8x256xi1>, vector<8x256xf32>
    %cst_153 = arith.constant 8.000000e-01 : f32
    %339 = vector.broadcast %cst_153 : f32 to vector<8x256xf32>
    %340 = arith.mulf %339, %326 : vector<8x256xf32>
    %c48_154 = arith.constant 48 : index
    %c0_155 = arith.constant 0 : index
    %341 = vector.load %arg9[%c48_154, %c0_155] : memref<192x256xf32, #tpu.memory_space<vmem>>, vector<8x256xf32>
    %342 = arith.addf %340, %341 : vector<8x256xf32>
    %343 = arith.subf %342, %338 : vector<8x256xf32>
    %cst_156 = arith.constant 1.000000e-01 : f32
    %344 = vector.broadcast %cst_156 : f32 to vector<8x256xf32>
    %345 = arith.mulf %344, %343 : vector<8x256xf32>
    %346 = arith.addf %338, %345 : vector<8x256xf32>
    %cst_157 = arith.constant 3.300000e-01 : f32
    %347 = vector.broadcast %cst_157 : f32 to vector<8x256xf32>
    %348 = arith.cmpf ogt, %346, %347 : vector<8x256xf32>
    %cst_158 = arith.constant 1.000000e+00 : f32
    %cst_159 = arith.constant 0.000000e+00 : f32
    %349 = vector.broadcast %cst_158 : f32 to vector<8x256xf32>
    %350 = vector.broadcast %cst_159 : f32 to vector<8x256xf32>
    %351 = arith.select %348, %349, %350 : vector<8x256xi1>, vector<8x256xf32>
    %c56_160 = arith.constant 56 : index
    %c0_161 = arith.constant 0 : index
    %352 = vector.load %arg10[%c56_160, %c0_161] : memref<192x256xf32, #tpu.memory_space<vmem>>, vector<8x256xf32>
    tpu.vector_store %arg10[%c56_160, %c0_161], %351 {strides = array<i32>} : memref<192x256xf32, #tpu.memory_space<vmem>>, vector<8x256xf32>,
    %cst_162 = arith.constant 0.000000e+00 : f32
    %353 = vector.broadcast %cst_162 : f32 to vector<8x256xf32>
    %354 = arith.select %348, %353, %346 : vector<8x256xi1>, vector<8x256xf32>
    %cst_163 = arith.constant 8.000000e-01 : f32
    %355 = vector.broadcast %cst_163 : f32 to vector<8x256xf32>
    %356 = arith.mulf %355, %342 : vector<8x256xf32>
    %c56_164 = arith.constant 56 : index
    %c0_165 = arith.constant 0 : index
    %357 = vector.load %arg9[%c56_164, %c0_165] : memref<192x256xf32, #tpu.memory_space<vmem>>, vector<8x256xf32>
    %358 = arith.addf %356, %357 : vector<8x256xf32>
    %359 = arith.subf %358, %354 : vector<8x256xf32>
    %cst_166 = arith.constant 1.000000e-01 : f32
    %360 = vector.broadcast %cst_166 : f32 to vector<8x256xf32>
    %361 = arith.mulf %360, %359 : vector<8x256xf32>
    %362 = arith.addf %354, %361 : vector<8x256xf32>
    %cst_167 = arith.constant 3.300000e-01 : f32
    %363 = vector.broadcast %cst_167 : f32 to vector<8x256xf32>
    %364 = arith.cmpf ogt, %362, %363 : vector<8x256xf32>
    %cst_168 = arith.constant 1.000000e+00 : f32
    %cst_169 = arith.constant 0.000000e+00 : f32
    %365 = vector.broadcast %cst_168 : f32 to vector<8x256xf32>
    %366 = vector.broadcast %cst_169 : f32 to vector<8x256xf32>
    %367 = arith.select %364, %365, %366 : vector<8x256xi1>, vector<8x256xf32>
    %c64_170 = arith.constant 64 : index
    %c0_171 = arith.constant 0 : index
    %368 = vector.load %arg10[%c64_170, %c0_171] : memref<192x256xf32, #tpu.memory_space<vmem>>, vector<8x256xf32>
    tpu.vector_store %arg10[%c64_170, %c0_171], %367 {strides = array<i32>} : memref<192x256xf32, #tpu.memory_space<vmem>>, vector<8x256xf32>,
    %cst_172 = arith.constant 0.000000e+00 : f32
    %369 = vector.broadcast %cst_172 : f32 to vector<8x256xf32>
    %370 = arith.select %364, %369, %362 : vector<8x256xi1>, vector<8x256xf32>
    %cst_173 = arith.constant 8.000000e-01 : f32
    %371 = vector.broadcast %cst_173 : f32 to vector<8x256xf32>
    %372 = arith.mulf %371, %358 : vector<8x256xf32>
    %c64_174 = arith.constant 64 : index
    %c0_175 = arith.constant 0 : index
    %373 = vector.load %arg9[%c64_174, %c0_175] : memref<192x256xf32, #tpu.memory_space<vmem>>, vector<8x256xf32>
    %374 = arith.addf %372, %373 : vector<8x256xf32>
    %375 = arith.subf %374, %370 : vector<8x256xf32>
    %cst_176 = arith.constant 1.000000e-01 : f32
    %376 = vector.broadcast %cst_176 : f32 to vector<8x256xf32>
    %377 = arith.mulf %376, %375 : vector<8x256xf32>
    %378 = arith.addf %370, %377 : vector<8x256xf32>
    %cst_177 = arith.constant 3.300000e-01 : f32
    %379 = vector.broadcast %cst_177 : f32 to vector<8x256xf32>
    %380 = arith.cmpf ogt, %378, %379 : vector<8x256xf32>
    %cst_178 = arith.constant 1.000000e+00 : f32
    %cst_179 = arith.constant 0.000000e+00 : f32
    %381 = vector.broadcast %cst_178 : f32 to vector<8x256xf32>
    %382 = vector.broadcast %cst_179 : f32 to vector<8x256xf32>
    %383 = arith.select %380, %381, %382 : vector<8x256xi1>, vector<8x256xf32>
    %c72_180 = arith.constant 72 : index
    %c0_181 = arith.constant 0 : index
    %384 = vector.load %arg10[%c72_180, %c0_181] : memref<192x256xf32, #tpu.memory_space<vmem>>, vector<8x256xf32>
    tpu.vector_store %arg10[%c72_180, %c0_181], %383 {strides = array<i32>} : memref<192x256xf32, #tpu.memory_space<vmem>>, vector<8x256xf32>,
    %cst_182 = arith.constant 0.000000e+00 : f32
    %385 = vector.broadcast %cst_182 : f32 to vector<8x256xf32>
    %386 = arith.select %380, %385, %378 : vector<8x256xi1>, vector<8x256xf32>
    %cst_183 = arith.constant 8.000000e-01 : f32
    %387 = vector.broadcast %cst_183 : f32 to vector<8x256xf32>
    %388 = arith.mulf %387, %374 : vector<8x256xf32>
    %c72_184 = arith.constant 72 : index
    %c0_185 = arith.constant 0 : index
    %389 = vector.load %arg9[%c72_184, %c0_185] : memref<192x256xf32, #tpu.memory_space<vmem>>, vector<8x256xf32>
    %390 = arith.addf %388, %389 : vector<8x256xf32>
    %391 = arith.subf %390, %386 : vector<8x256xf32>
    %cst_186 = arith.constant 1.000000e-01 : f32
    %392 = vector.broadcast %cst_186 : f32 to vector<8x256xf32>
    %393 = arith.mulf %392, %391 : vector<8x256xf32>
    %394 = arith.addf %386, %393 : vector<8x256xf32>
    %cst_187 = arith.constant 3.300000e-01 : f32
    %395 = vector.broadcast %cst_187 : f32 to vector<8x256xf32>
    %396 = arith.cmpf ogt, %394, %395 : vector<8x256xf32>
    %cst_188 = arith.constant 1.000000e+00 : f32
    %cst_189 = arith.constant 0.000000e+00 : f32
    %397 = vector.broadcast %cst_188 : f32 to vector<8x256xf32>
    %398 = vector.broadcast %cst_189 : f32 to vector<8x256xf32>
    %399 = arith.select %396, %397, %398 : vector<8x256xi1>, vector<8x256xf32>
    %c80_190 = arith.constant 80 : index
    %c0_191 = arith.constant 0 : index
    %400 = vector.load %arg10[%c80_190, %c0_191] : memref<192x256xf32, #tpu.memory_space<vmem>>, vector<8x256xf32>
    tpu.vector_store %arg10[%c80_190, %c0_191], %399 {strides = array<i32>} : memref<192x256xf32, #tpu.memory_space<vmem>>, vector<8x256xf32>,
    %cst_192 = arith.constant 0.000000e+00 : f32
    %401 = vector.broadcast %cst_192 : f32 to vector<8x256xf32>
    %402 = arith.select %396, %401, %394 : vector<8x256xi1>, vector<8x256xf32>
    %cst_193 = arith.constant 8.000000e-01 : f32
    %403 = vector.broadcast %cst_193 : f32 to vector<8x256xf32>
    %404 = arith.mulf %403, %390 : vector<8x256xf32>
    %c80_194 = arith.constant 80 : index
    %c0_195 = arith.constant 0 : index
    %405 = vector.load %arg9[%c80_194, %c0_195] : memref<192x256xf32, #tpu.memory_space<vmem>>, vector<8x256xf32>
    %406 = arith.addf %404, %405 : vector<8x256xf32>
    %407 = arith.subf %406, %402 : vector<8x256xf32>
    %cst_196 = arith.constant 1.000000e-01 : f32
    %408 = vector.broadcast %cst_196 : f32 to vector<8x256xf32>
    %409 = arith.mulf %408, %407 : vector<8x256xf32>
    %410 = arith.addf %402, %409 : vector<8x256xf32>
    %cst_197 = arith.constant 3.300000e-01 : f32
    %411 = vector.broadcast %cst_197 : f32 to vector<8x256xf32>
    %412 = arith.cmpf ogt, %410, %411 : vector<8x256xf32>
    %cst_198 = arith.constant 1.000000e+00 : f32
    %cst_199 = arith.constant 0.000000e+00 : f32
    %413 = vector.broadcast %cst_198 : f32 to vector<8x256xf32>
    %414 = vector.broadcast %cst_199 : f32 to vector<8x256xf32>
    %415 = arith.select %412, %413, %414 : vector<8x256xi1>, vector<8x256xf32>
    %c88_200 = arith.constant 88 : index
    %c0_201 = arith.constant 0 : index
    %416 = vector.load %arg10[%c88_200, %c0_201] : memref<192x256xf32, #tpu.memory_space<vmem>>, vector<8x256xf32>
    tpu.vector_store %arg10[%c88_200, %c0_201], %415 {strides = array<i32>} : memref<192x256xf32, #tpu.memory_space<vmem>>, vector<8x256xf32>,
    %cst_202 = arith.constant 0.000000e+00 : f32
    %417 = vector.broadcast %cst_202 : f32 to vector<8x256xf32>
    %418 = arith.select %412, %417, %410 : vector<8x256xi1>, vector<8x256xf32>
    %cst_203 = arith.constant 8.000000e-01 : f32
    %419 = vector.broadcast %cst_203 : f32 to vector<8x256xf32>
    %420 = arith.mulf %419, %406 : vector<8x256xf32>
    %c88_204 = arith.constant 88 : index
    %c0_205 = arith.constant 0 : index
    %421 = vector.load %arg9[%c88_204, %c0_205] : memref<192x256xf32, #tpu.memory_space<vmem>>, vector<8x256xf32>
    %422 = arith.addf %420, %421 : vector<8x256xf32>
    %423 = arith.subf %422, %418 : vector<8x256xf32>
    %cst_206 = arith.constant 1.000000e-01 : f32
    %424 = vector.broadcast %cst_206 : f32 to vector<8x256xf32>
    %425 = arith.mulf %424, %423 : vector<8x256xf32>
    %426 = arith.addf %418, %425 : vector<8x256xf32>
    %cst_207 = arith.constant 3.300000e-01 : f32
    %427 = vector.broadcast %cst_207 : f32 to vector<8x256xf32>
    %428 = arith.cmpf ogt, %426, %427 : vector<8x256xf32>
    %cst_208 = arith.constant 1.000000e+00 : f32
    %cst_209 = arith.constant 0.000000e+00 : f32
    %429 = vector.broadcast %cst_208 : f32 to vector<8x256xf32>
    %430 = vector.broadcast %cst_209 : f32 to vector<8x256xf32>
    %431 = arith.select %428, %429, %430 : vector<8x256xi1>, vector<8x256xf32>
    %c96_210 = arith.constant 96 : index
    %c0_211 = arith.constant 0 : index
    %432 = vector.load %arg10[%c96_210, %c0_211] : memref<192x256xf32, #tpu.memory_space<vmem>>, vector<8x256xf32>
    tpu.vector_store %arg10[%c96_210, %c0_211], %431 {strides = array<i32>} : memref<192x256xf32, #tpu.memory_space<vmem>>, vector<8x256xf32>,
    %cst_212 = arith.constant 0.000000e+00 : f32
    %433 = vector.broadcast %cst_212 : f32 to vector<8x256xf32>
    %434 = arith.select %428, %433, %426 : vector<8x256xi1>, vector<8x256xf32>
    %cst_213 = arith.constant 8.000000e-01 : f32
    %435 = vector.broadcast %cst_213 : f32 to vector<8x256xf32>
    %436 = arith.mulf %435, %422 : vector<8x256xf32>
    %c96_214 = arith.constant 96 : index
    %c0_215 = arith.constant 0 : index
    %437 = vector.load %arg9[%c96_214, %c0_215] : memref<192x256xf32, #tpu.memory_space<vmem>>, vector<8x256xf32>
    %438 = arith.addf %436, %437 : vector<8x256xf32>
    %439 = arith.subf %438, %434 : vector<8x256xf32>
    %cst_216 = arith.constant 1.000000e-01 : f32
    %440 = vector.broadcast %cst_216 : f32 to vector<8x256xf32>
    %441 = arith.mulf %440, %439 : vector<8x256xf32>
    %442 = arith.addf %434, %441 : vector<8x256xf32>
    %cst_217 = arith.constant 3.300000e-01 : f32
    %443 = vector.broadcast %cst_217 : f32 to vector<8x256xf32>
    %444 = arith.cmpf ogt, %442, %443 : vector<8x256xf32>
    %cst_218 = arith.constant 1.000000e+00 : f32
    %cst_219 = arith.constant 0.000000e+00 : f32
    %445 = vector.broadcast %cst_218 : f32 to vector<8x256xf32>
    %446 = vector.broadcast %cst_219 : f32 to vector<8x256xf32>
    %447 = arith.select %444, %445, %446 : vector<8x256xi1>, vector<8x256xf32>
    %c104_220 = arith.constant 104 : index
    %c0_221 = arith.constant 0 : index
    %448 = vector.load %arg10[%c104_220, %c0_221] : memref<192x256xf32, #tpu.memory_space<vmem>>, vector<8x256xf32>
    tpu.vector_store %arg10[%c104_220, %c0_221], %447 {strides = array<i32>} : memref<192x256xf32, #tpu.memory_space<vmem>>, vector<8x256xf32>,
    %cst_222 = arith.constant 0.000000e+00 : f32
    %449 = vector.broadcast %cst_222 : f32 to vector<8x256xf32>
    %450 = arith.select %444, %449, %442 : vector<8x256xi1>, vector<8x256xf32>
    %cst_223 = arith.constant 8.000000e-01 : f32
    %451 = vector.broadcast %cst_223 : f32 to vector<8x256xf32>
    %452 = arith.mulf %451, %438 : vector<8x256xf32>
    %c104_224 = arith.constant 104 : index
    %c0_225 = arith.constant 0 : index
    %453 = vector.load %arg9[%c104_224, %c0_225] : memref<192x256xf32, #tpu.memory_space<vmem>>, vector<8x256xf32>
    %454 = arith.addf %452, %453 : vector<8x256xf32>
    %455 = arith.subf %454, %450 : vector<8x256xf32>
    %cst_226 = arith.constant 1.000000e-01 : f32
    %456 = vector.broadcast %cst_226 : f32 to vector<8x256xf32>
    %457 = arith.mulf %456, %455 : vector<8x256xf32>
    %458 = arith.addf %450, %457 : vector<8x256xf32>
    %cst_227 = arith.constant 3.300000e-01 : f32
    %459 = vector.broadcast %cst_227 : f32 to vector<8x256xf32>
    %460 = arith.cmpf ogt, %458, %459 : vector<8x256xf32>
    %cst_228 = arith.constant 1.000000e+00 : f32
    %cst_229 = arith.constant 0.000000e+00 : f32
    %461 = vector.broadcast %cst_228 : f32 to vector<8x256xf32>
    %462 = vector.broadcast %cst_229 : f32 to vector<8x256xf32>
    %463 = arith.select %460, %461, %462 : vector<8x256xi1>, vector<8x256xf32>
    %c112_230 = arith.constant 112 : index
    %c0_231 = arith.constant 0 : index
    %464 = vector.load %arg10[%c112_230, %c0_231] : memref<192x256xf32, #tpu.memory_space<vmem>>, vector<8x256xf32>
    tpu.vector_store %arg10[%c112_230, %c0_231], %463 {strides = array<i32>} : memref<192x256xf32, #tpu.memory_space<vmem>>, vector<8x256xf32>,
    %cst_232 = arith.constant 0.000000e+00 : f32
    %465 = vector.broadcast %cst_232 : f32 to vector<8x256xf32>
    %466 = arith.select %460, %465, %458 : vector<8x256xi1>, vector<8x256xf32>
    %cst_233 = arith.constant 8.000000e-01 : f32
    %467 = vector.broadcast %cst_233 : f32 to vector<8x256xf32>
    %468 = arith.mulf %467, %454 : vector<8x256xf32>
    %c112_234 = arith.constant 112 : index
    %c0_235 = arith.constant 0 : index
    %469 = vector.load %arg9[%c112_234, %c0_235] : memref<192x256xf32, #tpu.memory_space<vmem>>, vector<8x256xf32>
    %470 = arith.addf %468, %469 : vector<8x256xf32>
    %471 = arith.subf %470, %466 : vector<8x256xf32>
    %cst_236 = arith.constant 1.000000e-01 : f32
    %472 = vector.broadcast %cst_236 : f32 to vector<8x256xf32>
    %473 = arith.mulf %472, %471 : vector<8x256xf32>
    %474 = arith.addf %466, %473 : vector<8x256xf32>
    %cst_237 = arith.constant 3.300000e-01 : f32
    %475 = vector.broadcast %cst_237 : f32 to vector<8x256xf32>
    %476 = arith.cmpf ogt, %474, %475 : vector<8x256xf32>
    %cst_238 = arith.constant 1.000000e+00 : f32
    %cst_239 = arith.constant 0.000000e+00 : f32
    %477 = vector.broadcast %cst_238 : f32 to vector<8x256xf32>
    %478 = vector.broadcast %cst_239 : f32 to vector<8x256xf32>
    %479 = arith.select %476, %477, %478 : vector<8x256xi1>, vector<8x256xf32>
    %c120_240 = arith.constant 120 : index
    %c0_241 = arith.constant 0 : index
    %480 = vector.load %arg10[%c120_240, %c0_241] : memref<192x256xf32, #tpu.memory_space<vmem>>, vector<8x256xf32>
    tpu.vector_store %arg10[%c120_240, %c0_241], %479 {strides = array<i32>} : memref<192x256xf32, #tpu.memory_space<vmem>>, vector<8x256xf32>,
    %cst_242 = arith.constant 0.000000e+00 : f32
    %481 = vector.broadcast %cst_242 : f32 to vector<8x256xf32>
    %482 = arith.select %476, %481, %474 : vector<8x256xi1>, vector<8x256xf32>
    %cst_243 = arith.constant 8.000000e-01 : f32
    %483 = vector.broadcast %cst_243 : f32 to vector<8x256xf32>
    %484 = arith.mulf %483, %470 : vector<8x256xf32>
    %c120_244 = arith.constant 120 : index
    %c0_245 = arith.constant 0 : index
    %485 = vector.load %arg9[%c120_244, %c0_245] : memref<192x256xf32, #tpu.memory_space<vmem>>, vector<8x256xf32>
    %486 = arith.addf %484, %485 : vector<8x256xf32>
    %487 = arith.subf %486, %482 : vector<8x256xf32>
    %cst_246 = arith.constant 1.000000e-01 : f32
    %488 = vector.broadcast %cst_246 : f32 to vector<8x256xf32>
    %489 = arith.mulf %488, %487 : vector<8x256xf32>
    %490 = arith.addf %482, %489 : vector<8x256xf32>
    %cst_247 = arith.constant 3.300000e-01 : f32
    %491 = vector.broadcast %cst_247 : f32 to vector<8x256xf32>
    %492 = arith.cmpf ogt, %490, %491 : vector<8x256xf32>
    %cst_248 = arith.constant 1.000000e+00 : f32
    %cst_249 = arith.constant 0.000000e+00 : f32
    %493 = vector.broadcast %cst_248 : f32 to vector<8x256xf32>
    %494 = vector.broadcast %cst_249 : f32 to vector<8x256xf32>
    %495 = arith.select %492, %493, %494 : vector<8x256xi1>, vector<8x256xf32>
    %c128_250 = arith.constant 128 : index
    %c0_251 = arith.constant 0 : index
    %496 = vector.load %arg10[%c128_250, %c0_251] : memref<192x256xf32, #tpu.memory_space<vmem>>, vector<8x256xf32>
    tpu.vector_store %arg10[%c128_250, %c0_251], %495 {strides = array<i32>} : memref<192x256xf32, #tpu.memory_space<vmem>>, vector<8x256xf32>,
    %cst_252 = arith.constant 0.000000e+00 : f32
    %497 = vector.broadcast %cst_252 : f32 to vector<8x256xf32>
    %498 = arith.select %492, %497, %490 : vector<8x256xi1>, vector<8x256xf32>
    %cst_253 = arith.constant 8.000000e-01 : f32
    %499 = vector.broadcast %cst_253 : f32 to vector<8x256xf32>
    %500 = arith.mulf %499, %486 : vector<8x256xf32>
    %c128_254 = arith.constant 128 : index
    %c0_255 = arith.constant 0 : index
    %501 = vector.load %arg9[%c128_254, %c0_255] : memref<192x256xf32, #tpu.memory_space<vmem>>, vector<8x256xf32>
    %502 = arith.addf %500, %501 : vector<8x256xf32>
    %503 = arith.subf %502, %498 : vector<8x256xf32>
    %cst_256 = arith.constant 1.000000e-01 : f32
    %504 = vector.broadcast %cst_256 : f32 to vector<8x256xf32>
    %505 = arith.mulf %504, %503 : vector<8x256xf32>
    %506 = arith.addf %498, %505 : vector<8x256xf32>
    %cst_257 = arith.constant 3.300000e-01 : f32
    %507 = vector.broadcast %cst_257 : f32 to vector<8x256xf32>
    %508 = arith.cmpf ogt, %506, %507 : vector<8x256xf32>
    %cst_258 = arith.constant 1.000000e+00 : f32
    %cst_259 = arith.constant 0.000000e+00 : f32
    %509 = vector.broadcast %cst_258 : f32 to vector<8x256xf32>
    %510 = vector.broadcast %cst_259 : f32 to vector<8x256xf32>
    %511 = arith.select %508, %509, %510 : vector<8x256xi1>, vector<8x256xf32>
    %c136_260 = arith.constant 136 : index
    %c0_261 = arith.constant 0 : index
    %512 = vector.load %arg10[%c136_260, %c0_261] : memref<192x256xf32, #tpu.memory_space<vmem>>, vector<8x256xf32>
    tpu.vector_store %arg10[%c136_260, %c0_261], %511 {strides = array<i32>} : memref<192x256xf32, #tpu.memory_space<vmem>>, vector<8x256xf32>,
    %cst_262 = arith.constant 0.000000e+00 : f32
    %513 = vector.broadcast %cst_262 : f32 to vector<8x256xf32>
    %514 = arith.select %508, %513, %506 : vector<8x256xi1>, vector<8x256xf32>
    %cst_263 = arith.constant 8.000000e-01 : f32
    %515 = vector.broadcast %cst_263 : f32 to vector<8x256xf32>
    %516 = arith.mulf %515, %502 : vector<8x256xf32>
    %c136_264 = arith.constant 136 : index
    %c0_265 = arith.constant 0 : index
    %517 = vector.load %arg9[%c136_264, %c0_265] : memref<192x256xf32, #tpu.memory_space<vmem>>, vector<8x256xf32>
    %518 = arith.addf %516, %517 : vector<8x256xf32>
    %519 = arith.subf %518, %514 : vector<8x256xf32>
    %cst_266 = arith.constant 1.000000e-01 : f32
    %520 = vector.broadcast %cst_266 : f32 to vector<8x256xf32>
    %521 = arith.mulf %520, %519 : vector<8x256xf32>
    %522 = arith.addf %514, %521 : vector<8x256xf32>
    %cst_267 = arith.constant 3.300000e-01 : f32
    %523 = vector.broadcast %cst_267 : f32 to vector<8x256xf32>
    %524 = arith.cmpf ogt, %522, %523 : vector<8x256xf32>
    %cst_268 = arith.constant 1.000000e+00 : f32
    %cst_269 = arith.constant 0.000000e+00 : f32
    %525 = vector.broadcast %cst_268 : f32 to vector<8x256xf32>
    %526 = vector.broadcast %cst_269 : f32 to vector<8x256xf32>
    %527 = arith.select %524, %525, %526 : vector<8x256xi1>, vector<8x256xf32>
    %c144_270 = arith.constant 144 : index
    %c0_271 = arith.constant 0 : index
    %528 = vector.load %arg10[%c144_270, %c0_271] : memref<192x256xf32, #tpu.memory_space<vmem>>, vector<8x256xf32>
    tpu.vector_store %arg10[%c144_270, %c0_271], %527 {strides = array<i32>} : memref<192x256xf32, #tpu.memory_space<vmem>>, vector<8x256xf32>,
    %cst_272 = arith.constant 0.000000e+00 : f32
    %529 = vector.broadcast %cst_272 : f32 to vector<8x256xf32>
    %530 = arith.select %524, %529, %522 : vector<8x256xi1>, vector<8x256xf32>
    %cst_273 = arith.constant 8.000000e-01 : f32
    %531 = vector.broadcast %cst_273 : f32 to vector<8x256xf32>
    %532 = arith.mulf %531, %518 : vector<8x256xf32>
    %c144_274 = arith.constant 144 : index
    %c0_275 = arith.constant 0 : index
    %533 = vector.load %arg9[%c144_274, %c0_275] : memref<192x256xf32, #tpu.memory_space<vmem>>, vector<8x256xf32>
    %534 = arith.addf %532, %533 : vector<8x256xf32>
    %535 = arith.subf %534, %530 : vector<8x256xf32>
    %cst_276 = arith.constant 1.000000e-01 : f32
    %536 = vector.broadcast %cst_276 : f32 to vector<8x256xf32>
    %537 = arith.mulf %536, %535 : vector<8x256xf32>
    %538 = arith.addf %530, %537 : vector<8x256xf32>
    %cst_277 = arith.constant 3.300000e-01 : f32
    %539 = vector.broadcast %cst_277 : f32 to vector<8x256xf32>
    %540 = arith.cmpf ogt, %538, %539 : vector<8x256xf32>
    %cst_278 = arith.constant 1.000000e+00 : f32
    %cst_279 = arith.constant 0.000000e+00 : f32
    %541 = vector.broadcast %cst_278 : f32 to vector<8x256xf32>
    %542 = vector.broadcast %cst_279 : f32 to vector<8x256xf32>
    %543 = arith.select %540, %541, %542 : vector<8x256xi1>, vector<8x256xf32>
    %c152_280 = arith.constant 152 : index
    %c0_281 = arith.constant 0 : index
    %544 = vector.load %arg10[%c152_280, %c0_281] : memref<192x256xf32, #tpu.memory_space<vmem>>, vector<8x256xf32>
    tpu.vector_store %arg10[%c152_280, %c0_281], %543 {strides = array<i32>} : memref<192x256xf32, #tpu.memory_space<vmem>>, vector<8x256xf32>,
    %cst_282 = arith.constant 0.000000e+00 : f32
    %545 = vector.broadcast %cst_282 : f32 to vector<8x256xf32>
    %546 = arith.select %540, %545, %538 : vector<8x256xi1>, vector<8x256xf32>
    %cst_283 = arith.constant 8.000000e-01 : f32
    %547 = vector.broadcast %cst_283 : f32 to vector<8x256xf32>
    %548 = arith.mulf %547, %534 : vector<8x256xf32>
    %c152_284 = arith.constant 152 : index
    %c0_285 = arith.constant 0 : index
    %549 = vector.load %arg9[%c152_284, %c0_285] : memref<192x256xf32, #tpu.memory_space<vmem>>, vector<8x256xf32>
    %550 = arith.addf %548, %549 : vector<8x256xf32>
    %551 = arith.subf %550, %546 : vector<8x256xf32>
    %cst_286 = arith.constant 1.000000e-01 : f32
    %552 = vector.broadcast %cst_286 : f32 to vector<8x256xf32>
    %553 = arith.mulf %552, %551 : vector<8x256xf32>
    %554 = arith.addf %546, %553 : vector<8x256xf32>
    %cst_287 = arith.constant 3.300000e-01 : f32
    %555 = vector.broadcast %cst_287 : f32 to vector<8x256xf32>
    %556 = arith.cmpf ogt, %554, %555 : vector<8x256xf32>
    %cst_288 = arith.constant 1.000000e+00 : f32
    %cst_289 = arith.constant 0.000000e+00 : f32
    %557 = vector.broadcast %cst_288 : f32 to vector<8x256xf32>
    %558 = vector.broadcast %cst_289 : f32 to vector<8x256xf32>
    %559 = arith.select %556, %557, %558 : vector<8x256xi1>, vector<8x256xf32>
    %c160_290 = arith.constant 160 : index
    %c0_291 = arith.constant 0 : index
    %560 = vector.load %arg10[%c160_290, %c0_291] : memref<192x256xf32, #tpu.memory_space<vmem>>, vector<8x256xf32>
    tpu.vector_store %arg10[%c160_290, %c0_291], %559 {strides = array<i32>} : memref<192x256xf32, #tpu.memory_space<vmem>>, vector<8x256xf32>,
    %cst_292 = arith.constant 0.000000e+00 : f32
    %561 = vector.broadcast %cst_292 : f32 to vector<8x256xf32>
    %562 = arith.select %556, %561, %554 : vector<8x256xi1>, vector<8x256xf32>
    %cst_293 = arith.constant 8.000000e-01 : f32
    %563 = vector.broadcast %cst_293 : f32 to vector<8x256xf32>
    %564 = arith.mulf %563, %550 : vector<8x256xf32>
    %c160_294 = arith.constant 160 : index
    %c0_295 = arith.constant 0 : index
    %565 = vector.load %arg9[%c160_294, %c0_295] : memref<192x256xf32, #tpu.memory_space<vmem>>, vector<8x256xf32>
    %566 = arith.addf %564, %565 : vector<8x256xf32>
    %567 = arith.subf %566, %562 : vector<8x256xf32>
    %cst_296 = arith.constant 1.000000e-01 : f32
    %568 = vector.broadcast %cst_296 : f32 to vector<8x256xf32>
    %569 = arith.mulf %568, %567 : vector<8x256xf32>
    %570 = arith.addf %562, %569 : vector<8x256xf32>
    %cst_297 = arith.constant 3.300000e-01 : f32
    %571 = vector.broadcast %cst_297 : f32 to vector<8x256xf32>
    %572 = arith.cmpf ogt, %570, %571 : vector<8x256xf32>
    %cst_298 = arith.constant 1.000000e+00 : f32
    %cst_299 = arith.constant 0.000000e+00 : f32
    %573 = vector.broadcast %cst_298 : f32 to vector<8x256xf32>
    %574 = vector.broadcast %cst_299 : f32 to vector<8x256xf32>
    %575 = arith.select %572, %573, %574 : vector<8x256xi1>, vector<8x256xf32>
    %c168_300 = arith.constant 168 : index
    %c0_301 = arith.constant 0 : index
    %576 = vector.load %arg10[%c168_300, %c0_301] : memref<192x256xf32, #tpu.memory_space<vmem>>, vector<8x256xf32>
    tpu.vector_store %arg10[%c168_300, %c0_301], %575 {strides = array<i32>} : memref<192x256xf32, #tpu.memory_space<vmem>>, vector<8x256xf32>,
    %cst_302 = arith.constant 0.000000e+00 : f32
    %577 = vector.broadcast %cst_302 : f32 to vector<8x256xf32>
    %578 = arith.select %572, %577, %570 : vector<8x256xi1>, vector<8x256xf32>
    %cst_303 = arith.constant 8.000000e-01 : f32
    %579 = vector.broadcast %cst_303 : f32 to vector<8x256xf32>
    %580 = arith.mulf %579, %566 : vector<8x256xf32>
    %c168_304 = arith.constant 168 : index
    %c0_305 = arith.constant 0 : index
    %581 = vector.load %arg9[%c168_304, %c0_305] : memref<192x256xf32, #tpu.memory_space<vmem>>, vector<8x256xf32>
    %582 = arith.addf %580, %581 : vector<8x256xf32>
    %583 = arith.subf %582, %578 : vector<8x256xf32>
    %cst_306 = arith.constant 1.000000e-01 : f32
    %584 = vector.broadcast %cst_306 : f32 to vector<8x256xf32>
    %585 = arith.mulf %584, %583 : vector<8x256xf32>
    %586 = arith.addf %578, %585 : vector<8x256xf32>
    %cst_307 = arith.constant 3.300000e-01 : f32
    %587 = vector.broadcast %cst_307 : f32 to vector<8x256xf32>
    %588 = arith.cmpf ogt, %586, %587 : vector<8x256xf32>
    %cst_308 = arith.constant 1.000000e+00 : f32
    %cst_309 = arith.constant 0.000000e+00 : f32
    %589 = vector.broadcast %cst_308 : f32 to vector<8x256xf32>
    %590 = vector.broadcast %cst_309 : f32 to vector<8x256xf32>
    %591 = arith.select %588, %589, %590 : vector<8x256xi1>, vector<8x256xf32>
    %c176_310 = arith.constant 176 : index
    %c0_311 = arith.constant 0 : index
    %592 = vector.load %arg10[%c176_310, %c0_311] : memref<192x256xf32, #tpu.memory_space<vmem>>, vector<8x256xf32>
    tpu.vector_store %arg10[%c176_310, %c0_311], %591 {strides = array<i32>} : memref<192x256xf32, #tpu.memory_space<vmem>>, vector<8x256xf32>,
    %cst_312 = arith.constant 0.000000e+00 : f32
    %593 = vector.broadcast %cst_312 : f32 to vector<8x256xf32>
    %594 = arith.select %588, %593, %586 : vector<8x256xi1>, vector<8x256xf32>
    %cst_313 = arith.constant 8.000000e-01 : f32
    %595 = vector.broadcast %cst_313 : f32 to vector<8x256xf32>
    %596 = arith.mulf %595, %582 : vector<8x256xf32>
    %c176_314 = arith.constant 176 : index
    %c0_315 = arith.constant 0 : index
    %597 = vector.load %arg9[%c176_314, %c0_315] : memref<192x256xf32, #tpu.memory_space<vmem>>, vector<8x256xf32>
    %598 = arith.addf %596, %597 : vector<8x256xf32>
    %599 = arith.subf %598, %594 : vector<8x256xf32>
    %cst_316 = arith.constant 1.000000e-01 : f32
    %600 = vector.broadcast %cst_316 : f32 to vector<8x256xf32>
    %601 = arith.mulf %600, %599 : vector<8x256xf32>
    %602 = arith.addf %594, %601 : vector<8x256xf32>
    %cst_317 = arith.constant 3.300000e-01 : f32
    %603 = vector.broadcast %cst_317 : f32 to vector<8x256xf32>
    %604 = arith.cmpf ogt, %602, %603 : vector<8x256xf32>
    %cst_318 = arith.constant 1.000000e+00 : f32
    %cst_319 = arith.constant 0.000000e+00 : f32
    %605 = vector.broadcast %cst_318 : f32 to vector<8x256xf32>
    %606 = vector.broadcast %cst_319 : f32 to vector<8x256xf32>
    %607 = arith.select %604, %605, %606 : vector<8x256xi1>, vector<8x256xf32>
    %c184_320 = arith.constant 184 : index
    %c0_321 = arith.constant 0 : index
    %608 = vector.load %arg10[%c184_320, %c0_321] : memref<192x256xf32, #tpu.memory_space<vmem>>, vector<8x256xf32>
    tpu.vector_store %arg10[%c184_320, %c0_321], %607 {strides = array<i32>} : memref<192x256xf32, #tpu.memory_space<vmem>>, vector<8x256xf32>,
    %c0_322 = arith.constant 0 : index
    %c0_323 = arith.constant 0 : index
    %609 = vector.load %arg10[%c0_322, %c0_323] : memref<192x256xf32, #tpu.memory_space<vmem>>, vector<192x256xf32>
    %c0_324 = arith.constant 0 : index
    %c0_325 = arith.constant 0 : index
    %610 = vector.load %arg4[%c0_324, %c0_325] : memref<256x256xf32, #tpu.memory_space<vmem>>, vector<256x256xf32>
    %cst_326 = arith.constant dense<0.000000e+00> : vector<192x256xf32>
    %611 = tpu.matmul %609, %610, %cst_326 {dimension_numbers = #tpu.dot_dimension_numbers<[1], [0], [0], [1], [0, 0, 1, 1], [], []>} : vector<192x256xf32>, vector<256x256xf32>, vector<192x256xf32> -> vector<192x256xf32>
    %c0_327 = arith.constant 0 : index
    %c0_328 = arith.constant 0 : index
    %612 = vector.load %arg9[%c0_327, %c0_328] : memref<192x256xf32, #tpu.memory_space<vmem>>, vector<192x256xf32>
    tpu.vector_store %arg9[%c0_327, %c0_328], %611 {strides = array<i32>} : memref<192x256xf32, #tpu.memory_space<vmem>>, vector<192x256xf32>,
    %cst_329 = arith.constant 0.000000e+00 : f32
    %613 = vector.broadcast %cst_329 : f32 to vector<8x256xf32>
    %cst_330 = arith.constant 0.000000e+00 : f32
    %614 = vector.broadcast %cst_330 : f32 to vector<8x256xf32>
    %615 = arith.subf %614, %613 : vector<8x256xf32>
    %cst_331 = arith.constant 1.000000e-01 : f32
    %616 = vector.broadcast %cst_331 : f32 to vector<8x256xf32>
    %617 = arith.mulf %616, %615 : vector<8x256xf32>
    %618 = arith.addf %613, %617 : vector<8x256xf32>
    %cst_332 = arith.constant 3.300000e-01 : f32
    %619 = vector.broadcast %cst_332 : f32 to vector<8x256xf32>
    %620 = arith.cmpf ogt, %618, %619 : vector<8x256xf32>
    %cst_333 = arith.constant 1.000000e+00 : f32
    %cst_334 = arith.constant 0.000000e+00 : f32
    %621 = vector.broadcast %cst_333 : f32 to vector<8x256xf32>
    %622 = vector.broadcast %cst_334 : f32 to vector<8x256xf32>
    %623 = arith.select %620, %621, %622 : vector<8x256xi1>, vector<8x256xf32>
    %c0_335 = arith.constant 0 : index
    %c0_336 = arith.constant 0 : index
    %624 = vector.load %arg10[%c0_335, %c0_336] : memref<192x256xf32, #tpu.memory_space<vmem>>, vector<8x256xf32>
    tpu.vector_store %arg10[%c0_335, %c0_336], %623 {strides = array<i32>} : memref<192x256xf32, #tpu.memory_space<vmem>>, vector<8x256xf32>,
    %cst_337 = arith.constant 0.000000e+00 : f32
    %625 = vector.broadcast %cst_337 : f32 to vector<8x256xf32>
    %626 = arith.select %620, %625, %618 : vector<8x256xi1>, vector<8x256xf32>
    %cst_338 = arith.constant 8.000000e-01 : f32
    %627 = vector.broadcast %cst_338 : f32 to vector<8x256xf32>
    %628 = arith.mulf %627, %614 : vector<8x256xf32>
    %c0_339 = arith.constant 0 : index
    %c0_340 = arith.constant 0 : index
    %629 = vector.load %arg9[%c0_339, %c0_340] : memref<192x256xf32, #tpu.memory_space<vmem>>, vector<8x256xf32>
    %630 = arith.addf %628, %629 : vector<8x256xf32>
    %631 = arith.subf %630, %626 : vector<8x256xf32>
    %cst_341 = arith.constant 1.000000e-01 : f32
    %632 = vector.broadcast %cst_341 : f32 to vector<8x256xf32>
    %633 = arith.mulf %632, %631 : vector<8x256xf32>
    %634 = arith.addf %626, %633 : vector<8x256xf32>
    %cst_342 = arith.constant 3.300000e-01 : f32
    %635 = vector.broadcast %cst_342 : f32 to vector<8x256xf32>
    %636 = arith.cmpf ogt, %634, %635 : vector<8x256xf32>
    %cst_343 = arith.constant 1.000000e+00 : f32
    %cst_344 = arith.constant 0.000000e+00 : f32
    %637 = vector.broadcast %cst_343 : f32 to vector<8x256xf32>
    %638 = vector.broadcast %cst_344 : f32 to vector<8x256xf32>
    %639 = arith.select %636, %637, %638 : vector<8x256xi1>, vector<8x256xf32>
    %c8_345 = arith.constant 8 : index
    %c0_346 = arith.constant 0 : index
    %640 = vector.load %arg10[%c8_345, %c0_346] : memref<192x256xf32, #tpu.memory_space<vmem>>, vector<8x256xf32>
    tpu.vector_store %arg10[%c8_345, %c0_346], %639 {strides = array<i32>} : memref<192x256xf32, #tpu.memory_space<vmem>>, vector<8x256xf32>,
    %cst_347 = arith.constant 0.000000e+00 : f32
    %641 = vector.broadcast %cst_347 : f32 to vector<8x256xf32>
    %642 = arith.select %636, %641, %634 : vector<8x256xi1>, vector<8x256xf32>
    %cst_348 = arith.constant 8.000000e-01 : f32
    %643 = vector.broadcast %cst_348 : f32 to vector<8x256xf32>
    %644 = arith.mulf %643, %630 : vector<8x256xf32>
    %c8_349 = arith.constant 8 : index
    %c0_350 = arith.constant 0 : index
    %645 = vector.load %arg9[%c8_349, %c0_350] : memref<192x256xf32, #tpu.memory_space<vmem>>, vector<8x256xf32>
    %646 = arith.addf %644, %645 : vector<8x256xf32>
    %647 = arith.subf %646, %642 : vector<8x256xf32>
    %cst_351 = arith.constant 1.000000e-01 : f32
    %648 = vector.broadcast %cst_351 : f32 to vector<8x256xf32>
    %649 = arith.mulf %648, %647 : vector<8x256xf32>
    %650 = arith.addf %642, %649 : vector<8x256xf32>
    %cst_352 = arith.constant 3.300000e-01 : f32
    %651 = vector.broadcast %cst_352 : f32 to vector<8x256xf32>
    %652 = arith.cmpf ogt, %650, %651 : vector<8x256xf32>
    %cst_353 = arith.constant 1.000000e+00 : f32
    %cst_354 = arith.constant 0.000000e+00 : f32
    %653 = vector.broadcast %cst_353 : f32 to vector<8x256xf32>
    %654 = vector.broadcast %cst_354 : f32 to vector<8x256xf32>
    %655 = arith.select %652, %653, %654 : vector<8x256xi1>, vector<8x256xf32>
    %c16_355 = arith.constant 16 : index
    %c0_356 = arith.constant 0 : index
    %656 = vector.load %arg10[%c16_355, %c0_356] : memref<192x256xf32, #tpu.memory_space<vmem>>, vector<8x256xf32>
    tpu.vector_store %arg10[%c16_355, %c0_356], %655 {strides = array<i32>} : memref<192x256xf32, #tpu.memory_space<vmem>>, vector<8x256xf32>,
    %cst_357 = arith.constant 0.000000e+00 : f32
    %657 = vector.broadcast %cst_357 : f32 to vector<8x256xf32>
    %658 = arith.select %652, %657, %650 : vector<8x256xi1>, vector<8x256xf32>
    %cst_358 = arith.constant 8.000000e-01 : f32
    %659 = vector.broadcast %cst_358 : f32 to vector<8x256xf32>
    %660 = arith.mulf %659, %646 : vector<8x256xf32>
    %c16_359 = arith.constant 16 : index
    %c0_360 = arith.constant 0 : index
    %661 = vector.load %arg9[%c16_359, %c0_360] : memref<192x256xf32, #tpu.memory_space<vmem>>, vector<8x256xf32>
    %662 = arith.addf %660, %661 : vector<8x256xf32>
    %663 = arith.subf %662, %658 : vector<8x256xf32>
    %cst_361 = arith.constant 1.000000e-01 : f32
    %664 = vector.broadcast %cst_361 : f32 to vector<8x256xf32>
    %665 = arith.mulf %664, %663 : vector<8x256xf32>
    %666 = arith.addf %658, %665 : vector<8x256xf32>
    %cst_362 = arith.constant 3.300000e-01 : f32
    %667 = vector.broadcast %cst_362 : f32 to vector<8x256xf32>
    %668 = arith.cmpf ogt, %666, %667 : vector<8x256xf32>
    %cst_363 = arith.constant 1.000000e+00 : f32
    %cst_364 = arith.constant 0.000000e+00 : f32
    %669 = vector.broadcast %cst_363 : f32 to vector<8x256xf32>
    %670 = vector.broadcast %cst_364 : f32 to vector<8x256xf32>
    %671 = arith.select %668, %669, %670 : vector<8x256xi1>, vector<8x256xf32>
    %c24_365 = arith.constant 24 : index
    %c0_366 = arith.constant 0 : index
    %672 = vector.load %arg10[%c24_365, %c0_366] : memref<192x256xf32, #tpu.memory_space<vmem>>, vector<8x256xf32>
    tpu.vector_store %arg10[%c24_365, %c0_366], %671 {strides = array<i32>} : memref<192x256xf32, #tpu.memory_space<vmem>>, vector<8x256xf32>,
    %cst_367 = arith.constant 0.000000e+00 : f32
    %673 = vector.broadcast %cst_367 : f32 to vector<8x256xf32>
    %674 = arith.select %668, %673, %666 : vector<8x256xi1>, vector<8x256xf32>
    %cst_368 = arith.constant 8.000000e-01 : f32
    %675 = vector.broadcast %cst_368 : f32 to vector<8x256xf32>
    %676 = arith.mulf %675, %662 : vector<8x256xf32>
    %c24_369 = arith.constant 24 : index
    %c0_370 = arith.constant 0 : index
    %677 = vector.load %arg9[%c24_369, %c0_370] : memref<192x256xf32, #tpu.memory_space<vmem>>, vector<8x256xf32>
    %678 = arith.addf %676, %677 : vector<8x256xf32>
    %679 = arith.subf %678, %674 : vector<8x256xf32>
    %cst_371 = arith.constant 1.000000e-01 : f32
    %680 = vector.broadcast %cst_371 : f32 to vector<8x256xf32>
    %681 = arith.mulf %680, %679 : vector<8x256xf32>
    %682 = arith.addf %674, %681 : vector<8x256xf32>
    %cst_372 = arith.constant 3.300000e-01 : f32
    %683 = vector.broadcast %cst_372 : f32 to vector<8x256xf32>
    %684 = arith.cmpf ogt, %682, %683 : vector<8x256xf32>
    %cst_373 = arith.constant 1.000000e+00 : f32
    %cst_374 = arith.constant 0.000000e+00 : f32
    %685 = vector.broadcast %cst_373 : f32 to vector<8x256xf32>
    %686 = vector.broadcast %cst_374 : f32 to vector<8x256xf32>
    %687 = arith.select %684, %685, %686 : vector<8x256xi1>, vector<8x256xf32>
    %c32_375 = arith.constant 32 : index
    %c0_376 = arith.constant 0 : index
    %688 = vector.load %arg10[%c32_375, %c0_376] : memref<192x256xf32, #tpu.memory_space<vmem>>, vector<8x256xf32>
    tpu.vector_store %arg10[%c32_375, %c0_376], %687 {strides = array<i32>} : memref<192x256xf32, #tpu.memory_space<vmem>>, vector<8x256xf32>,
    %cst_377 = arith.constant 0.000000e+00 : f32
    %689 = vector.broadcast %cst_377 : f32 to vector<8x256xf32>
    %690 = arith.select %684, %689, %682 : vector<8x256xi1>, vector<8x256xf32>
    %cst_378 = arith.constant 8.000000e-01 : f32
    %691 = vector.broadcast %cst_378 : f32 to vector<8x256xf32>
    %692 = arith.mulf %691, %678 : vector<8x256xf32>
    %c32_379 = arith.constant 32 : index
    %c0_380 = arith.constant 0 : index
    %693 = vector.load %arg9[%c32_379, %c0_380] : memref<192x256xf32, #tpu.memory_space<vmem>>, vector<8x256xf32>
    %694 = arith.addf %692, %693 : vector<8x256xf32>
    %695 = arith.subf %694, %690 : vector<8x256xf32>
    %cst_381 = arith.constant 1.000000e-01 : f32
    %696 = vector.broadcast %cst_381 : f32 to vector<8x256xf32>
    %697 = arith.mulf %696, %695 : vector<8x256xf32>
    %698 = arith.addf %690, %697 : vector<8x256xf32>
    %cst_382 = arith.constant 3.300000e-01 : f32
    %699 = vector.broadcast %cst_382 : f32 to vector<8x256xf32>
    %700 = arith.cmpf ogt, %698, %699 : vector<8x256xf32>
    %cst_383 = arith.constant 1.000000e+00 : f32
    %cst_384 = arith.constant 0.000000e+00 : f32
    %701 = vector.broadcast %cst_383 : f32 to vector<8x256xf32>
    %702 = vector.broadcast %cst_384 : f32 to vector<8x256xf32>
    %703 = arith.select %700, %701, %702 : vector<8x256xi1>, vector<8x256xf32>
    %c40_385 = arith.constant 40 : index
    %c0_386 = arith.constant 0 : index
    %704 = vector.load %arg10[%c40_385, %c0_386] : memref<192x256xf32, #tpu.memory_space<vmem>>, vector<8x256xf32>
    tpu.vector_store %arg10[%c40_385, %c0_386], %703 {strides = array<i32>} : memref<192x256xf32, #tpu.memory_space<vmem>>, vector<8x256xf32>,
    %cst_387 = arith.constant 0.000000e+00 : f32
    %705 = vector.broadcast %cst_387 : f32 to vector<8x256xf32>
    %706 = arith.select %700, %705, %698 : vector<8x256xi1>, vector<8x256xf32>
    %cst_388 = arith.constant 8.000000e-01 : f32
    %707 = vector.broadcast %cst_388 : f32 to vector<8x256xf32>
    %708 = arith.mulf %707, %694 : vector<8x256xf32>
    %c40_389 = arith.constant 40 : index
    %c0_390 = arith.constant 0 : index
    %709 = vector.load %arg9[%c40_389, %c0_390] : memref<192x256xf32, #tpu.memory_space<vmem>>, vector<8x256xf32>
    %710 = arith.addf %708, %709 : vector<8x256xf32>
    %711 = arith.subf %710, %706 : vector<8x256xf32>
    %cst_391 = arith.constant 1.000000e-01 : f32
    %712 = vector.broadcast %cst_391 : f32 to vector<8x256xf32>
    %713 = arith.mulf %712, %711 : vector<8x256xf32>
    %714 = arith.addf %706, %713 : vector<8x256xf32>
    %cst_392 = arith.constant 3.300000e-01 : f32
    %715 = vector.broadcast %cst_392 : f32 to vector<8x256xf32>
    %716 = arith.cmpf ogt, %714, %715 : vector<8x256xf32>
    %cst_393 = arith.constant 1.000000e+00 : f32
    %cst_394 = arith.constant 0.000000e+00 : f32
    %717 = vector.broadcast %cst_393 : f32 to vector<8x256xf32>
    %718 = vector.broadcast %cst_394 : f32 to vector<8x256xf32>
    %719 = arith.select %716, %717, %718 : vector<8x256xi1>, vector<8x256xf32>
    %c48_395 = arith.constant 48 : index
    %c0_396 = arith.constant 0 : index
    %720 = vector.load %arg10[%c48_395, %c0_396] : memref<192x256xf32, #tpu.memory_space<vmem>>, vector<8x256xf32>
    tpu.vector_store %arg10[%c48_395, %c0_396], %719 {strides = array<i32>} : memref<192x256xf32, #tpu.memory_space<vmem>>, vector<8x256xf32>,
    %cst_397 = arith.constant 0.000000e+00 : f32
    %721 = vector.broadcast %cst_397 : f32 to vector<8x256xf32>
    %722 = arith.select %716, %721, %714 : vector<8x256xi1>, vector<8x256xf32>
    %cst_398 = arith.constant 8.000000e-01 : f32
    %723 = vector.broadcast %cst_398 : f32 to vector<8x256xf32>
    %724 = arith.mulf %723, %710 : vector<8x256xf32>
    %c48_399 = arith.constant 48 : index
    %c0_400 = arith.constant 0 : index
    %725 = vector.load %arg9[%c48_399, %c0_400] : memref<192x256xf32, #tpu.memory_space<vmem>>, vector<8x256xf32>
    %726 = arith.addf %724, %725 : vector<8x256xf32>
    %727 = arith.subf %726, %722 : vector<8x256xf32>
    %cst_401 = arith.constant 1.000000e-01 : f32
    %728 = vector.broadcast %cst_401 : f32 to vector<8x256xf32>
    %729 = arith.mulf %728, %727 : vector<8x256xf32>
    %730 = arith.addf %722, %729 : vector<8x256xf32>
    %cst_402 = arith.constant 3.300000e-01 : f32
    %731 = vector.broadcast %cst_402 : f32 to vector<8x256xf32>
    %732 = arith.cmpf ogt, %730, %731 : vector<8x256xf32>
    %cst_403 = arith.constant 1.000000e+00 : f32
    %cst_404 = arith.constant 0.000000e+00 : f32
    %733 = vector.broadcast %cst_403 : f32 to vector<8x256xf32>
    %734 = vector.broadcast %cst_404 : f32 to vector<8x256xf32>
    %735 = arith.select %732, %733, %734 : vector<8x256xi1>, vector<8x256xf32>
    %c56_405 = arith.constant 56 : index
    %c0_406 = arith.constant 0 : index
    %736 = vector.load %arg10[%c56_405, %c0_406] : memref<192x256xf32, #tpu.memory_space<vmem>>, vector<8x256xf32>
    tpu.vector_store %arg10[%c56_405, %c0_406], %735 {strides = array<i32>} : memref<192x256xf32, #tpu.memory_space<vmem>>, vector<8x256xf32>,
    %cst_407 = arith.constant 0.000000e+00 : f32
    %737 = vector.broadcast %cst_407 : f32 to vector<8x256xf32>
    %738 = arith.select %732, %737, %730 : vector<8x256xi1>, vector<8x256xf32>
    %cst_408 = arith.constant 8.000000e-01 : f32
    %739 = vector.broadcast %cst_408 : f32 to vector<8x256xf32>
    %740 = arith.mulf %739, %726 : vector<8x256xf32>
    %c56_409 = arith.constant 56 : index
    %c0_410 = arith.constant 0 : index
    %741 = vector.load %arg9[%c56_409, %c0_410] : memref<192x256xf32, #tpu.memory_space<vmem>>, vector<8x256xf32>
    %742 = arith.addf %740, %741 : vector<8x256xf32>
    %743 = arith.subf %742, %738 : vector<8x256xf32>
    %cst_411 = arith.constant 1.000000e-01 : f32
    %744 = vector.broadcast %cst_411 : f32 to vector<8x256xf32>
    %745 = arith.mulf %744, %743 : vector<8x256xf32>
    %746 = arith.addf %738, %745 : vector<8x256xf32>
    %cst_412 = arith.constant 3.300000e-01 : f32
    %747 = vector.broadcast %cst_412 : f32 to vector<8x256xf32>
    %748 = arith.cmpf ogt, %746, %747 : vector<8x256xf32>
    %cst_413 = arith.constant 1.000000e+00 : f32
    %cst_414 = arith.constant 0.000000e+00 : f32
    %749 = vector.broadcast %cst_413 : f32 to vector<8x256xf32>
    %750 = vector.broadcast %cst_414 : f32 to vector<8x256xf32>
    %751 = arith.select %748, %749, %750 : vector<8x256xi1>, vector<8x256xf32>
    %c64_415 = arith.constant 64 : index
    %c0_416 = arith.constant 0 : index
    %752 = vector.load %arg10[%c64_415, %c0_416] : memref<192x256xf32, #tpu.memory_space<vmem>>, vector<8x256xf32>
    tpu.vector_store %arg10[%c64_415, %c0_416], %751 {strides = array<i32>} : memref<192x256xf32, #tpu.memory_space<vmem>>, vector<8x256xf32>,
    %cst_417 = arith.constant 0.000000e+00 : f32
    %753 = vector.broadcast %cst_417 : f32 to vector<8x256xf32>
    %754 = arith.select %748, %753, %746 : vector<8x256xi1>, vector<8x256xf32>
    %cst_418 = arith.constant 8.000000e-01 : f32
    %755 = vector.broadcast %cst_418 : f32 to vector<8x256xf32>
    %756 = arith.mulf %755, %742 : vector<8x256xf32>
    %c64_419 = arith.constant 64 : index
    %c0_420 = arith.constant 0 : index
    %757 = vector.load %arg9[%c64_419, %c0_420] : memref<192x256xf32, #tpu.memory_space<vmem>>, vector<8x256xf32>
    %758 = arith.addf %756, %757 : vector<8x256xf32>
    %759 = arith.subf %758, %754 : vector<8x256xf32>
    %cst_421 = arith.constant 1.000000e-01 : f32
    %760 = vector.broadcast %cst_421 : f32 to vector<8x256xf32>
    %761 = arith.mulf %760, %759 : vector<8x256xf32>
    %762 = arith.addf %754, %761 : vector<8x256xf32>
    %cst_422 = arith.constant 3.300000e-01 : f32
    %763 = vector.broadcast %cst_422 : f32 to vector<8x256xf32>
    %764 = arith.cmpf ogt, %762, %763 : vector<8x256xf32>
    %cst_423 = arith.constant 1.000000e+00 : f32
    %cst_424 = arith.constant 0.000000e+00 : f32
    %765 = vector.broadcast %cst_423 : f32 to vector<8x256xf32>
    %766 = vector.broadcast %cst_424 : f32 to vector<8x256xf32>
    %767 = arith.select %764, %765, %766 : vector<8x256xi1>, vector<8x256xf32>
    %c72_425 = arith.constant 72 : index
    %c0_426 = arith.constant 0 : index
    %768 = vector.load %arg10[%c72_425, %c0_426] : memref<192x256xf32, #tpu.memory_space<vmem>>, vector<8x256xf32>
    tpu.vector_store %arg10[%c72_425, %c0_426], %767 {strides = array<i32>} : memref<192x256xf32, #tpu.memory_space<vmem>>, vector<8x256xf32>,
    %cst_427 = arith.constant 0.000000e+00 : f32
    %769 = vector.broadcast %cst_427 : f32 to vector<8x256xf32>
    %770 = arith.select %764, %769, %762 : vector<8x256xi1>, vector<8x256xf32>
    %cst_428 = arith.constant 8.000000e-01 : f32
    %771 = vector.broadcast %cst_428 : f32 to vector<8x256xf32>
    %772 = arith.mulf %771, %758 : vector<8x256xf32>
    %c72_429 = arith.constant 72 : index
    %c0_430 = arith.constant 0 : index
    %773 = vector.load %arg9[%c72_429, %c0_430] : memref<192x256xf32, #tpu.memory_space<vmem>>, vector<8x256xf32>
    %774 = arith.addf %772, %773 : vector<8x256xf32>
    %775 = arith.subf %774, %770 : vector<8x256xf32>
    %cst_431 = arith.constant 1.000000e-01 : f32
    %776 = vector.broadcast %cst_431 : f32 to vector<8x256xf32>
    %777 = arith.mulf %776, %775 : vector<8x256xf32>
    %778 = arith.addf %770, %777 : vector<8x256xf32>
    %cst_432 = arith.constant 3.300000e-01 : f32
    %779 = vector.broadcast %cst_432 : f32 to vector<8x256xf32>
    %780 = arith.cmpf ogt, %778, %779 : vector<8x256xf32>
    %cst_433 = arith.constant 1.000000e+00 : f32
    %cst_434 = arith.constant 0.000000e+00 : f32
    %781 = vector.broadcast %cst_433 : f32 to vector<8x256xf32>
    %782 = vector.broadcast %cst_434 : f32 to vector<8x256xf32>
    %783 = arith.select %780, %781, %782 : vector<8x256xi1>, vector<8x256xf32>
    %c80_435 = arith.constant 80 : index
    %c0_436 = arith.constant 0 : index
    %784 = vector.load %arg10[%c80_435, %c0_436] : memref<192x256xf32, #tpu.memory_space<vmem>>, vector<8x256xf32>
    tpu.vector_store %arg10[%c80_435, %c0_436], %783 {strides = array<i32>} : memref<192x256xf32, #tpu.memory_space<vmem>>, vector<8x256xf32>,
    %cst_437 = arith.constant 0.000000e+00 : f32
    %785 = vector.broadcast %cst_437 : f32 to vector<8x256xf32>
    %786 = arith.select %780, %785, %778 : vector<8x256xi1>, vector<8x256xf32>
    %cst_438 = arith.constant 8.000000e-01 : f32
    %787 = vector.broadcast %cst_438 : f32 to vector<8x256xf32>
    %788 = arith.mulf %787, %774 : vector<8x256xf32>
    %c80_439 = arith.constant 80 : index
    %c0_440 = arith.constant 0 : index
    %789 = vector.load %arg9[%c80_439, %c0_440] : memref<192x256xf32, #tpu.memory_space<vmem>>, vector<8x256xf32>
    %790 = arith.addf %788, %789 : vector<8x256xf32>
    %791 = arith.subf %790, %786 : vector<8x256xf32>
    %cst_441 = arith.constant 1.000000e-01 : f32
    %792 = vector.broadcast %cst_441 : f32 to vector<8x256xf32>
    %793 = arith.mulf %792, %791 : vector<8x256xf32>
    %794 = arith.addf %786, %793 : vector<8x256xf32>
    %cst_442 = arith.constant 3.300000e-01 : f32
    %795 = vector.broadcast %cst_442 : f32 to vector<8x256xf32>
    %796 = arith.cmpf ogt, %794, %795 : vector<8x256xf32>
    %cst_443 = arith.constant 1.000000e+00 : f32
    %cst_444 = arith.constant 0.000000e+00 : f32
    %797 = vector.broadcast %cst_443 : f32 to vector<8x256xf32>
    %798 = vector.broadcast %cst_444 : f32 to vector<8x256xf32>
    %799 = arith.select %796, %797, %798 : vector<8x256xi1>, vector<8x256xf32>
    %c88_445 = arith.constant 88 : index
    %c0_446 = arith.constant 0 : index
    %800 = vector.load %arg10[%c88_445, %c0_446] : memref<192x256xf32, #tpu.memory_space<vmem>>, vector<8x256xf32>
    tpu.vector_store %arg10[%c88_445, %c0_446], %799 {strides = array<i32>} : memref<192x256xf32, #tpu.memory_space<vmem>>, vector<8x256xf32>,
    %cst_447 = arith.constant 0.000000e+00 : f32
    %801 = vector.broadcast %cst_447 : f32 to vector<8x256xf32>
    %802 = arith.select %796, %801, %794 : vector<8x256xi1>, vector<8x256xf32>
    %cst_448 = arith.constant 8.000000e-01 : f32
    %803 = vector.broadcast %cst_448 : f32 to vector<8x256xf32>
    %804 = arith.mulf %803, %790 : vector<8x256xf32>
    %c88_449 = arith.constant 88 : index
    %c0_450 = arith.constant 0 : index
    %805 = vector.load %arg9[%c88_449, %c0_450] : memref<192x256xf32, #tpu.memory_space<vmem>>, vector<8x256xf32>
    %806 = arith.addf %804, %805 : vector<8x256xf32>
    %807 = arith.subf %806, %802 : vector<8x256xf32>
    %cst_451 = arith.constant 1.000000e-01 : f32
    %808 = vector.broadcast %cst_451 : f32 to vector<8x256xf32>
    %809 = arith.mulf %808, %807 : vector<8x256xf32>
    %810 = arith.addf %802, %809 : vector<8x256xf32>
    %cst_452 = arith.constant 3.300000e-01 : f32
    %811 = vector.broadcast %cst_452 : f32 to vector<8x256xf32>
    %812 = arith.cmpf ogt, %810, %811 : vector<8x256xf32>
    %cst_453 = arith.constant 1.000000e+00 : f32
    %cst_454 = arith.constant 0.000000e+00 : f32
    %813 = vector.broadcast %cst_453 : f32 to vector<8x256xf32>
    %814 = vector.broadcast %cst_454 : f32 to vector<8x256xf32>
    %815 = arith.select %812, %813, %814 : vector<8x256xi1>, vector<8x256xf32>
    %c96_455 = arith.constant 96 : index
    %c0_456 = arith.constant 0 : index
    %816 = vector.load %arg10[%c96_455, %c0_456] : memref<192x256xf32, #tpu.memory_space<vmem>>, vector<8x256xf32>
    tpu.vector_store %arg10[%c96_455, %c0_456], %815 {strides = array<i32>} : memref<192x256xf32, #tpu.memory_space<vmem>>, vector<8x256xf32>,
    %cst_457 = arith.constant 0.000000e+00 : f32
    %817 = vector.broadcast %cst_457 : f32 to vector<8x256xf32>
    %818 = arith.select %812, %817, %810 : vector<8x256xi1>, vector<8x256xf32>
    %cst_458 = arith.constant 8.000000e-01 : f32
    %819 = vector.broadcast %cst_458 : f32 to vector<8x256xf32>
    %820 = arith.mulf %819, %806 : vector<8x256xf32>
    %c96_459 = arith.constant 96 : index
    %c0_460 = arith.constant 0 : index
    %821 = vector.load %arg9[%c96_459, %c0_460] : memref<192x256xf32, #tpu.memory_space<vmem>>, vector<8x256xf32>
    %822 = arith.addf %820, %821 : vector<8x256xf32>
    %823 = arith.subf %822, %818 : vector<8x256xf32>
    %cst_461 = arith.constant 1.000000e-01 : f32
    %824 = vector.broadcast %cst_461 : f32 to vector<8x256xf32>
    %825 = arith.mulf %824, %823 : vector<8x256xf32>
    %826 = arith.addf %818, %825 : vector<8x256xf32>
    %cst_462 = arith.constant 3.300000e-01 : f32
    %827 = vector.broadcast %cst_462 : f32 to vector<8x256xf32>
    %828 = arith.cmpf ogt, %826, %827 : vector<8x256xf32>
    %cst_463 = arith.constant 1.000000e+00 : f32
    %cst_464 = arith.constant 0.000000e+00 : f32
    %829 = vector.broadcast %cst_463 : f32 to vector<8x256xf32>
    %830 = vector.broadcast %cst_464 : f32 to vector<8x256xf32>
    %831 = arith.select %828, %829, %830 : vector<8x256xi1>, vector<8x256xf32>
    %c104_465 = arith.constant 104 : index
    %c0_466 = arith.constant 0 : index
    %832 = vector.load %arg10[%c104_465, %c0_466] : memref<192x256xf32, #tpu.memory_space<vmem>>, vector<8x256xf32>
    tpu.vector_store %arg10[%c104_465, %c0_466], %831 {strides = array<i32>} : memref<192x256xf32, #tpu.memory_space<vmem>>, vector<8x256xf32>,
    %cst_467 = arith.constant 0.000000e+00 : f32
    %833 = vector.broadcast %cst_467 : f32 to vector<8x256xf32>
    %834 = arith.select %828, %833, %826 : vector<8x256xi1>, vector<8x256xf32>
    %cst_468 = arith.constant 8.000000e-01 : f32
    %835 = vector.broadcast %cst_468 : f32 to vector<8x256xf32>
    %836 = arith.mulf %835, %822 : vector<8x256xf32>
    %c104_469 = arith.constant 104 : index
    %c0_470 = arith.constant 0 : index
    %837 = vector.load %arg9[%c104_469, %c0_470] : memref<192x256xf32, #tpu.memory_space<vmem>>, vector<8x256xf32>
    %838 = arith.addf %836, %837 : vector<8x256xf32>
    %839 = arith.subf %838, %834 : vector<8x256xf32>
    %cst_471 = arith.constant 1.000000e-01 : f32
    %840 = vector.broadcast %cst_471 : f32 to vector<8x256xf32>
    %841 = arith.mulf %840, %839 : vector<8x256xf32>
    %842 = arith.addf %834, %841 : vector<8x256xf32>
    %cst_472 = arith.constant 3.300000e-01 : f32
    %843 = vector.broadcast %cst_472 : f32 to vector<8x256xf32>
    %844 = arith.cmpf ogt, %842, %843 : vector<8x256xf32>
    %cst_473 = arith.constant 1.000000e+00 : f32
    %cst_474 = arith.constant 0.000000e+00 : f32
    %845 = vector.broadcast %cst_473 : f32 to vector<8x256xf32>
    %846 = vector.broadcast %cst_474 : f32 to vector<8x256xf32>
    %847 = arith.select %844, %845, %846 : vector<8x256xi1>, vector<8x256xf32>
    %c112_475 = arith.constant 112 : index
    %c0_476 = arith.constant 0 : index
    %848 = vector.load %arg10[%c112_475, %c0_476] : memref<192x256xf32, #tpu.memory_space<vmem>>, vector<8x256xf32>
    tpu.vector_store %arg10[%c112_475, %c0_476], %847 {strides = array<i32>} : memref<192x256xf32, #tpu.memory_space<vmem>>, vector<8x256xf32>,
    %cst_477 = arith.constant 0.000000e+00 : f32
    %849 = vector.broadcast %cst_477 : f32 to vector<8x256xf32>
    %850 = arith.select %844, %849, %842 : vector<8x256xi1>, vector<8x256xf32>
    %cst_478 = arith.constant 8.000000e-01 : f32
    %851 = vector.broadcast %cst_478 : f32 to vector<8x256xf32>
    %852 = arith.mulf %851, %838 : vector<8x256xf32>
    %c112_479 = arith.constant 112 : index
    %c0_480 = arith.constant 0 : index
    %853 = vector.load %arg9[%c112_479, %c0_480] : memref<192x256xf32, #tpu.memory_space<vmem>>, vector<8x256xf32>
    %854 = arith.addf %852, %853 : vector<8x256xf32>
    %855 = arith.subf %854, %850 : vector<8x256xf32>
    %cst_481 = arith.constant 1.000000e-01 : f32
    %856 = vector.broadcast %cst_481 : f32 to vector<8x256xf32>
    %857 = arith.mulf %856, %855 : vector<8x256xf32>
    %858 = arith.addf %850, %857 : vector<8x256xf32>
    %cst_482 = arith.constant 3.300000e-01 : f32
    %859 = vector.broadcast %cst_482 : f32 to vector<8x256xf32>
    %860 = arith.cmpf ogt, %858, %859 : vector<8x256xf32>
    %cst_483 = arith.constant 1.000000e+00 : f32
    %cst_484 = arith.constant 0.000000e+00 : f32
    %861 = vector.broadcast %cst_483 : f32 to vector<8x256xf32>
    %862 = vector.broadcast %cst_484 : f32 to vector<8x256xf32>
    %863 = arith.select %860, %861, %862 : vector<8x256xi1>, vector<8x256xf32>
    %c120_485 = arith.constant 120 : index
    %c0_486 = arith.constant 0 : index
    %864 = vector.load %arg10[%c120_485, %c0_486] : memref<192x256xf32, #tpu.memory_space<vmem>>, vector<8x256xf32>
    tpu.vector_store %arg10[%c120_485, %c0_486], %863 {strides = array<i32>} : memref<192x256xf32, #tpu.memory_space<vmem>>, vector<8x256xf32>,
    %cst_487 = arith.constant 0.000000e+00 : f32
    %865 = vector.broadcast %cst_487 : f32 to vector<8x256xf32>
    %866 = arith.select %860, %865, %858 : vector<8x256xi1>, vector<8x256xf32>
    %cst_488 = arith.constant 8.000000e-01 : f32
    %867 = vector.broadcast %cst_488 : f32 to vector<8x256xf32>
    %868 = arith.mulf %867, %854 : vector<8x256xf32>
    %c120_489 = arith.constant 120 : index
    %c0_490 = arith.constant 0 : index
    %869 = vector.load %arg9[%c120_489, %c0_490] : memref<192x256xf32, #tpu.memory_space<vmem>>, vector<8x256xf32>
    %870 = arith.addf %868, %869 : vector<8x256xf32>
    %871 = arith.subf %870, %866 : vector<8x256xf32>
    %cst_491 = arith.constant 1.000000e-01 : f32
    %872 = vector.broadcast %cst_491 : f32 to vector<8x256xf32>
    %873 = arith.mulf %872, %871 : vector<8x256xf32>
    %874 = arith.addf %866, %873 : vector<8x256xf32>
    %cst_492 = arith.constant 3.300000e-01 : f32
    %875 = vector.broadcast %cst_492 : f32 to vector<8x256xf32>
    %876 = arith.cmpf ogt, %874, %875 : vector<8x256xf32>
    %cst_493 = arith.constant 1.000000e+00 : f32
    %cst_494 = arith.constant 0.000000e+00 : f32
    %877 = vector.broadcast %cst_493 : f32 to vector<8x256xf32>
    %878 = vector.broadcast %cst_494 : f32 to vector<8x256xf32>
    %879 = arith.select %876, %877, %878 : vector<8x256xi1>, vector<8x256xf32>
    %c128_495 = arith.constant 128 : index
    %c0_496 = arith.constant 0 : index
    %880 = vector.load %arg10[%c128_495, %c0_496] : memref<192x256xf32, #tpu.memory_space<vmem>>, vector<8x256xf32>
    tpu.vector_store %arg10[%c128_495, %c0_496], %879 {strides = array<i32>} : memref<192x256xf32, #tpu.memory_space<vmem>>, vector<8x256xf32>,
    %cst_497 = arith.constant 0.000000e+00 : f32
    %881 = vector.broadcast %cst_497 : f32 to vector<8x256xf32>
    %882 = arith.select %876, %881, %874 : vector<8x256xi1>, vector<8x256xf32>
    %cst_498 = arith.constant 8.000000e-01 : f32
    %883 = vector.broadcast %cst_498 : f32 to vector<8x256xf32>
    %884 = arith.mulf %883, %870 : vector<8x256xf32>
    %c128_499 = arith.constant 128 : index
    %c0_500 = arith.constant 0 : index
    %885 = vector.load %arg9[%c128_499, %c0_500] : memref<192x256xf32, #tpu.memory_space<vmem>>, vector<8x256xf32>
    %886 = arith.addf %884, %885 : vector<8x256xf32>
    %887 = arith.subf %886, %882 : vector<8x256xf32>
    %cst_501 = arith.constant 1.000000e-01 : f32
    %888 = vector.broadcast %cst_501 : f32 to vector<8x256xf32>
    %889 = arith.mulf %888, %887 : vector<8x256xf32>
    %890 = arith.addf %882, %889 : vector<8x256xf32>
    %cst_502 = arith.constant 3.300000e-01 : f32
    %891 = vector.broadcast %cst_502 : f32 to vector<8x256xf32>
    %892 = arith.cmpf ogt, %890, %891 : vector<8x256xf32>
    %cst_503 = arith.constant 1.000000e+00 : f32
    %cst_504 = arith.constant 0.000000e+00 : f32
    %893 = vector.broadcast %cst_503 : f32 to vector<8x256xf32>
    %894 = vector.broadcast %cst_504 : f32 to vector<8x256xf32>
    %895 = arith.select %892, %893, %894 : vector<8x256xi1>, vector<8x256xf32>
    %c136_505 = arith.constant 136 : index
    %c0_506 = arith.constant 0 : index
    %896 = vector.load %arg10[%c136_505, %c0_506] : memref<192x256xf32, #tpu.memory_space<vmem>>, vector<8x256xf32>
    tpu.vector_store %arg10[%c136_505, %c0_506], %895 {strides = array<i32>} : memref<192x256xf32, #tpu.memory_space<vmem>>, vector<8x256xf32>,
    %cst_507 = arith.constant 0.000000e+00 : f32
    %897 = vector.broadcast %cst_507 : f32 to vector<8x256xf32>
    %898 = arith.select %892, %897, %890 : vector<8x256xi1>, vector<8x256xf32>
    %cst_508 = arith.constant 8.000000e-01 : f32
    %899 = vector.broadcast %cst_508 : f32 to vector<8x256xf32>
    %900 = arith.mulf %899, %886 : vector<8x256xf32>
    %c136_509 = arith.constant 136 : index
    %c0_510 = arith.constant 0 : index
    %901 = vector.load %arg9[%c136_509, %c0_510] : memref<192x256xf32, #tpu.memory_space<vmem>>, vector<8x256xf32>
    %902 = arith.addf %900, %901 : vector<8x256xf32>
    %903 = arith.subf %902, %898 : vector<8x256xf32>
    %cst_511 = arith.constant 1.000000e-01 : f32
    %904 = vector.broadcast %cst_511 : f32 to vector<8x256xf32>
    %905 = arith.mulf %904, %903 : vector<8x256xf32>
    %906 = arith.addf %898, %905 : vector<8x256xf32>
    %cst_512 = arith.constant 3.300000e-01 : f32
    %907 = vector.broadcast %cst_512 : f32 to vector<8x256xf32>
    %908 = arith.cmpf ogt, %906, %907 : vector<8x256xf32>
    %cst_513 = arith.constant 1.000000e+00 : f32
    %cst_514 = arith.constant 0.000000e+00 : f32
    %909 = vector.broadcast %cst_513 : f32 to vector<8x256xf32>
    %910 = vector.broadcast %cst_514 : f32 to vector<8x256xf32>
    %911 = arith.select %908, %909, %910 : vector<8x256xi1>, vector<8x256xf32>
    %c144_515 = arith.constant 144 : index
    %c0_516 = arith.constant 0 : index
    %912 = vector.load %arg10[%c144_515, %c0_516] : memref<192x256xf32, #tpu.memory_space<vmem>>, vector<8x256xf32>
    tpu.vector_store %arg10[%c144_515, %c0_516], %911 {strides = array<i32>} : memref<192x256xf32, #tpu.memory_space<vmem>>, vector<8x256xf32>,
    %cst_517 = arith.constant 0.000000e+00 : f32
    %913 = vector.broadcast %cst_517 : f32 to vector<8x256xf32>
    %914 = arith.select %908, %913, %906 : vector<8x256xi1>, vector<8x256xf32>
    %cst_518 = arith.constant 8.000000e-01 : f32
    %915 = vector.broadcast %cst_518 : f32 to vector<8x256xf32>
    %916 = arith.mulf %915, %902 : vector<8x256xf32>
    %c144_519 = arith.constant 144 : index
    %c0_520 = arith.constant 0 : index
    %917 = vector.load %arg9[%c144_519, %c0_520] : memref<192x256xf32, #tpu.memory_space<vmem>>, vector<8x256xf32>
    %918 = arith.addf %916, %917 : vector<8x256xf32>
    %919 = arith.subf %918, %914 : vector<8x256xf32>
    %cst_521 = arith.constant 1.000000e-01 : f32
    %920 = vector.broadcast %cst_521 : f32 to vector<8x256xf32>
    %921 = arith.mulf %920, %919 : vector<8x256xf32>
    %922 = arith.addf %914, %921 : vector<8x256xf32>
    %cst_522 = arith.constant 3.300000e-01 : f32
    %923 = vector.broadcast %cst_522 : f32 to vector<8x256xf32>
    %924 = arith.cmpf ogt, %922, %923 : vector<8x256xf32>
    %cst_523 = arith.constant 1.000000e+00 : f32
    %cst_524 = arith.constant 0.000000e+00 : f32
    %925 = vector.broadcast %cst_523 : f32 to vector<8x256xf32>
    %926 = vector.broadcast %cst_524 : f32 to vector<8x256xf32>
    %927 = arith.select %924, %925, %926 : vector<8x256xi1>, vector<8x256xf32>
    %c152_525 = arith.constant 152 : index
    %c0_526 = arith.constant 0 : index
    %928 = vector.load %arg10[%c152_525, %c0_526] : memref<192x256xf32, #tpu.memory_space<vmem>>, vector<8x256xf32>
    tpu.vector_store %arg10[%c152_525, %c0_526], %927 {strides = array<i32>} : memref<192x256xf32, #tpu.memory_space<vmem>>, vector<8x256xf32>,
    %cst_527 = arith.constant 0.000000e+00 : f32
    %929 = vector.broadcast %cst_527 : f32 to vector<8x256xf32>
    %930 = arith.select %924, %929, %922 : vector<8x256xi1>, vector<8x256xf32>
    %cst_528 = arith.constant 8.000000e-01 : f32
    %931 = vector.broadcast %cst_528 : f32 to vector<8x256xf32>
    %932 = arith.mulf %931, %918 : vector<8x256xf32>
    %c152_529 = arith.constant 152 : index
    %c0_530 = arith.constant 0 : index
    %933 = vector.load %arg9[%c152_529, %c0_530] : memref<192x256xf32, #tpu.memory_space<vmem>>, vector<8x256xf32>
    %934 = arith.addf %932, %933 : vector<8x256xf32>
    %935 = arith.subf %934, %930 : vector<8x256xf32>
    %cst_531 = arith.constant 1.000000e-01 : f32
    %936 = vector.broadcast %cst_531 : f32 to vector<8x256xf32>
    %937 = arith.mulf %936, %935 : vector<8x256xf32>
    %938 = arith.addf %930, %937 : vector<8x256xf32>
    %cst_532 = arith.constant 3.300000e-01 : f32
    %939 = vector.broadcast %cst_532 : f32 to vector<8x256xf32>
    %940 = arith.cmpf ogt, %938, %939 : vector<8x256xf32>
    %cst_533 = arith.constant 1.000000e+00 : f32
    %cst_534 = arith.constant 0.000000e+00 : f32
    %941 = vector.broadcast %cst_533 : f32 to vector<8x256xf32>
    %942 = vector.broadcast %cst_534 : f32 to vector<8x256xf32>
    %943 = arith.select %940, %941, %942 : vector<8x256xi1>, vector<8x256xf32>
    %c160_535 = arith.constant 160 : index
    %c0_536 = arith.constant 0 : index
    %944 = vector.load %arg10[%c160_535, %c0_536] : memref<192x256xf32, #tpu.memory_space<vmem>>, vector<8x256xf32>
    tpu.vector_store %arg10[%c160_535, %c0_536], %943 {strides = array<i32>} : memref<192x256xf32, #tpu.memory_space<vmem>>, vector<8x256xf32>,
    %cst_537 = arith.constant 0.000000e+00 : f32
    %945 = vector.broadcast %cst_537 : f32 to vector<8x256xf32>
    %946 = arith.select %940, %945, %938 : vector<8x256xi1>, vector<8x256xf32>
    %cst_538 = arith.constant 8.000000e-01 : f32
    %947 = vector.broadcast %cst_538 : f32 to vector<8x256xf32>
    %948 = arith.mulf %947, %934 : vector<8x256xf32>
    %c160_539 = arith.constant 160 : index
    %c0_540 = arith.constant 0 : index
    %949 = vector.load %arg9[%c160_539, %c0_540] : memref<192x256xf32, #tpu.memory_space<vmem>>, vector<8x256xf32>
    %950 = arith.addf %948, %949 : vector<8x256xf32>
    %951 = arith.subf %950, %946 : vector<8x256xf32>
    %cst_541 = arith.constant 1.000000e-01 : f32
    %952 = vector.broadcast %cst_541 : f32 to vector<8x256xf32>
    %953 = arith.mulf %952, %951 : vector<8x256xf32>
    %954 = arith.addf %946, %953 : vector<8x256xf32>
    %cst_542 = arith.constant 3.300000e-01 : f32
    %955 = vector.broadcast %cst_542 : f32 to vector<8x256xf32>
    %956 = arith.cmpf ogt, %954, %955 : vector<8x256xf32>
    %cst_543 = arith.constant 1.000000e+00 : f32
    %cst_544 = arith.constant 0.000000e+00 : f32
    %957 = vector.broadcast %cst_543 : f32 to vector<8x256xf32>
    %958 = vector.broadcast %cst_544 : f32 to vector<8x256xf32>
    %959 = arith.select %956, %957, %958 : vector<8x256xi1>, vector<8x256xf32>
    %c168_545 = arith.constant 168 : index
    %c0_546 = arith.constant 0 : index
    %960 = vector.load %arg10[%c168_545, %c0_546] : memref<192x256xf32, #tpu.memory_space<vmem>>, vector<8x256xf32>
    tpu.vector_store %arg10[%c168_545, %c0_546], %959 {strides = array<i32>} : memref<192x256xf32, #tpu.memory_space<vmem>>, vector<8x256xf32>,
    %cst_547 = arith.constant 0.000000e+00 : f32
    %961 = vector.broadcast %cst_547 : f32 to vector<8x256xf32>
    %962 = arith.select %956, %961, %954 : vector<8x256xi1>, vector<8x256xf32>
    %cst_548 = arith.constant 8.000000e-01 : f32
    %963 = vector.broadcast %cst_548 : f32 to vector<8x256xf32>
    %964 = arith.mulf %963, %950 : vector<8x256xf32>
    %c168_549 = arith.constant 168 : index
    %c0_550 = arith.constant 0 : index
    %965 = vector.load %arg9[%c168_549, %c0_550] : memref<192x256xf32, #tpu.memory_space<vmem>>, vector<8x256xf32>
    %966 = arith.addf %964, %965 : vector<8x256xf32>
    %967 = arith.subf %966, %962 : vector<8x256xf32>
    %cst_551 = arith.constant 1.000000e-01 : f32
    %968 = vector.broadcast %cst_551 : f32 to vector<8x256xf32>
    %969 = arith.mulf %968, %967 : vector<8x256xf32>
    %970 = arith.addf %962, %969 : vector<8x256xf32>
    %cst_552 = arith.constant 3.300000e-01 : f32
    %971 = vector.broadcast %cst_552 : f32 to vector<8x256xf32>
    %972 = arith.cmpf ogt, %970, %971 : vector<8x256xf32>
    %cst_553 = arith.constant 1.000000e+00 : f32
    %cst_554 = arith.constant 0.000000e+00 : f32
    %973 = vector.broadcast %cst_553 : f32 to vector<8x256xf32>
    %974 = vector.broadcast %cst_554 : f32 to vector<8x256xf32>
    %975 = arith.select %972, %973, %974 : vector<8x256xi1>, vector<8x256xf32>
    %c176_555 = arith.constant 176 : index
    %c0_556 = arith.constant 0 : index
    %976 = vector.load %arg10[%c176_555, %c0_556] : memref<192x256xf32, #tpu.memory_space<vmem>>, vector<8x256xf32>
    tpu.vector_store %arg10[%c176_555, %c0_556], %975 {strides = array<i32>} : memref<192x256xf32, #tpu.memory_space<vmem>>, vector<8x256xf32>,
    %cst_557 = arith.constant 0.000000e+00 : f32
    %977 = vector.broadcast %cst_557 : f32 to vector<8x256xf32>
    %978 = arith.select %972, %977, %970 : vector<8x256xi1>, vector<8x256xf32>
    %cst_558 = arith.constant 8.000000e-01 : f32
    %979 = vector.broadcast %cst_558 : f32 to vector<8x256xf32>
    %980 = arith.mulf %979, %966 : vector<8x256xf32>
    %c176_559 = arith.constant 176 : index
    %c0_560 = arith.constant 0 : index
    %981 = vector.load %arg9[%c176_559, %c0_560] : memref<192x256xf32, #tpu.memory_space<vmem>>, vector<8x256xf32>
    %982 = arith.addf %980, %981 : vector<8x256xf32>
    %983 = arith.subf %982, %978 : vector<8x256xf32>
    %cst_561 = arith.constant 1.000000e-01 : f32
    %984 = vector.broadcast %cst_561 : f32 to vector<8x256xf32>
    %985 = arith.mulf %984, %983 : vector<8x256xf32>
    %986 = arith.addf %978, %985 : vector<8x256xf32>
    %cst_562 = arith.constant 3.300000e-01 : f32
    %987 = vector.broadcast %cst_562 : f32 to vector<8x256xf32>
    %988 = arith.cmpf ogt, %986, %987 : vector<8x256xf32>
    %cst_563 = arith.constant 1.000000e+00 : f32
    %cst_564 = arith.constant 0.000000e+00 : f32
    %989 = vector.broadcast %cst_563 : f32 to vector<8x256xf32>
    %990 = vector.broadcast %cst_564 : f32 to vector<8x256xf32>
    %991 = arith.select %988, %989, %990 : vector<8x256xi1>, vector<8x256xf32>
    %c184_565 = arith.constant 184 : index
    %c0_566 = arith.constant 0 : index
    %992 = vector.load %arg10[%c184_565, %c0_566] : memref<192x256xf32, #tpu.memory_space<vmem>>, vector<8x256xf32>
    tpu.vector_store %arg10[%c184_565, %c0_566], %991 {strides = array<i32>} : memref<192x256xf32, #tpu.memory_space<vmem>>, vector<8x256xf32>,
    %c0_567 = arith.constant 0 : index
    %c0_568 = arith.constant 0 : index
    %993 = vector.load %arg10[%c0_567, %c0_568] : memref<192x256xf32, #tpu.memory_space<vmem>>, vector<192x256xf32>
    %c0_569 = arith.constant 0 : index
    %c0_570 = arith.constant 0 : index
    %994 = vector.load %arg5[%c0_569, %c0_570] : memref<256x256xf32, #tpu.memory_space<vmem>>, vector<256x256xf32>
    %cst_571 = arith.constant dense<0.000000e+00> : vector<192x256xf32>
    %995 = tpu.matmul %993, %994, %cst_571 {dimension_numbers = #tpu.dot_dimension_numbers<[1], [0], [0], [1], [0, 0, 1, 1], [], []>} : vector<192x256xf32>, vector<256x256xf32>, vector<192x256xf32> -> vector<192x256xf32>
    %c0_572 = arith.constant 0 : index
    %c0_573 = arith.constant 0 : index
    %996 = vector.load %arg9[%c0_572, %c0_573] : memref<192x256xf32, #tpu.memory_space<vmem>>, vector<192x256xf32>
    tpu.vector_store %arg9[%c0_572, %c0_573], %995 {strides = array<i32>} : memref<192x256xf32, #tpu.memory_space<vmem>>, vector<192x256xf32>,
    %cst_574 = arith.constant 0.000000e+00 : f32
    %997 = vector.broadcast %cst_574 : f32 to vector<8x256xf32>
    %cst_575 = arith.constant 0.000000e+00 : f32
    %998 = vector.broadcast %cst_575 : f32 to vector<8x256xf32>
    %cst_576 = arith.constant 0.000000e+00 : f32
    %999 = vector.broadcast %cst_576 : f32 to vector<8x256xf32>
    %1000 = arith.subf %998, %997 : vector<8x256xf32>
    %cst_577 = arith.constant 1.000000e-01 : f32
    %1001 = vector.broadcast %cst_577 : f32 to vector<8x256xf32>
    %1002 = arith.mulf %1001, %1000 : vector<8x256xf32>
    %1003 = arith.addf %997, %1002 : vector<8x256xf32>
    %cst_578 = arith.constant 3.300000e-01 : f32
    %1004 = vector.broadcast %cst_578 : f32 to vector<8x256xf32>
    %1005 = arith.cmpf ogt, %1003, %1004 : vector<8x256xf32>
    %cst_579 = arith.constant 0.0750440732 : f32
    %cst_580 = arith.constant 0.000000e+00 : f32
    %1006 = vector.broadcast %cst_579 : f32 to vector<8x256xf32>
    %1007 = vector.broadcast %cst_580 : f32 to vector<8x256xf32>
    %1008 = arith.select %1005, %1006, %1007 : vector<8x256xi1>, vector<8x256xf32>
    %1009 = arith.addf %999, %1008 : vector<8x256xf32>
    %cst_581 = arith.constant 0.000000e+00 : f32
    %1010 = vector.broadcast %cst_581 : f32 to vector<8x256xf32>
    %1011 = arith.select %1005, %1010, %1003 : vector<8x256xi1>, vector<8x256xf32>
    %cst_582 = arith.constant 8.000000e-01 : f32
    %1012 = vector.broadcast %cst_582 : f32 to vector<8x256xf32>
    %1013 = arith.mulf %1012, %998 : vector<8x256xf32>
    %c0_583 = arith.constant 0 : index
    %c0_584 = arith.constant 0 : index
    %1014 = vector.load %arg9[%c0_583, %c0_584] : memref<192x256xf32, #tpu.memory_space<vmem>>, vector<8x256xf32>
    %1015 = arith.addf %1013, %1014 : vector<8x256xf32>
    %1016 = arith.subf %1015, %1011 : vector<8x256xf32>
    %cst_585 = arith.constant 1.000000e-01 : f32
    %1017 = vector.broadcast %cst_585 : f32 to vector<8x256xf32>
    %1018 = arith.mulf %1017, %1016 : vector<8x256xf32>
    %1019 = arith.addf %1011, %1018 : vector<8x256xf32>
    %cst_586 = arith.constant 3.300000e-01 : f32
    %1020 = vector.broadcast %cst_586 : f32 to vector<8x256xf32>
    %1021 = arith.cmpf ogt, %1019, %1020 : vector<8x256xf32>
    %cst_587 = arith.constant 0.0827264264 : f32
    %cst_588 = arith.constant 0.000000e+00 : f32
    %1022 = vector.broadcast %cst_587 : f32 to vector<8x256xf32>
    %1023 = vector.broadcast %cst_588 : f32 to vector<8x256xf32>
    %1024 = arith.select %1021, %1022, %1023 : vector<8x256xi1>, vector<8x256xf32>
    %1025 = arith.addf %1009, %1024 : vector<8x256xf32>
    %cst_589 = arith.constant 0.000000e+00 : f32
    %1026 = vector.broadcast %cst_589 : f32 to vector<8x256xf32>
    %1027 = arith.select %1021, %1026, %1019 : vector<8x256xi1>, vector<8x256xf32>
    %cst_590 = arith.constant 8.000000e-01 : f32
    %1028 = vector.broadcast %cst_590 : f32 to vector<8x256xf32>
    %1029 = arith.mulf %1028, %1015 : vector<8x256xf32>
    %c8_591 = arith.constant 8 : index
    %c0_592 = arith.constant 0 : index
    %1030 = vector.load %arg9[%c8_591, %c0_592] : memref<192x256xf32, #tpu.memory_space<vmem>>, vector<8x256xf32>
    %1031 = arith.addf %1029, %1030 : vector<8x256xf32>
    %1032 = arith.subf %1031, %1027 : vector<8x256xf32>
    %cst_593 = arith.constant 1.000000e-01 : f32
    %1033 = vector.broadcast %cst_593 : f32 to vector<8x256xf32>
    %1034 = arith.mulf %1033, %1032 : vector<8x256xf32>
    %1035 = arith.addf %1027, %1034 : vector<8x256xf32>
    %cst_594 = arith.constant 3.300000e-01 : f32
    %1036 = vector.broadcast %cst_594 : f32 to vector<8x256xf32>
    %1037 = arith.cmpf ogt, %1035, %1036 : vector<8x256xf32>
    %cst_595 = arith.constant 0.0910983905 : f32
    %cst_596 = arith.constant 0.000000e+00 : f32
    %1038 = vector.broadcast %cst_595 : f32 to vector<8x256xf32>
    %1039 = vector.broadcast %cst_596 : f32 to vector<8x256xf32>
    %1040 = arith.select %1037, %1038, %1039 : vector<8x256xi1>, vector<8x256xf32>
    %1041 = arith.addf %1025, %1040 : vector<8x256xf32>
    %cst_597 = arith.constant 0.000000e+00 : f32
    %1042 = vector.broadcast %cst_597 : f32 to vector<8x256xf32>
    %1043 = arith.select %1037, %1042, %1035 : vector<8x256xi1>, vector<8x256xf32>
    %cst_598 = arith.constant 8.000000e-01 : f32
    %1044 = vector.broadcast %cst_598 : f32 to vector<8x256xf32>
    %1045 = arith.mulf %1044, %1031 : vector<8x256xf32>
    %c16_599 = arith.constant 16 : index
    %c0_600 = arith.constant 0 : index
    %1046 = vector.load %arg9[%c16_599, %c0_600] : memref<192x256xf32, #tpu.memory_space<vmem>>, vector<8x256xf32>
    %1047 = arith.addf %1045, %1046 : vector<8x256xf32>
    %1048 = arith.subf %1047, %1043 : vector<8x256xf32>
    %cst_601 = arith.constant 1.000000e-01 : f32
    %1049 = vector.broadcast %cst_601 : f32 to vector<8x256xf32>
    %1050 = arith.mulf %1049, %1048 : vector<8x256xf32>
    %1051 = arith.addf %1043, %1050 : vector<8x256xf32>
    %cst_602 = arith.constant 3.300000e-01 : f32
    %1052 = vector.broadcast %cst_602 : f32 to vector<8x256xf32>
    %1053 = arith.cmpf ogt, %1051, %1052 : vector<8x256xf32>
    %cst_603 = arith.constant 0.100195616 : f32
    %cst_604 = arith.constant 0.000000e+00 : f32
    %1054 = vector.broadcast %cst_603 : f32 to vector<8x256xf32>
    %1055 = vector.broadcast %cst_604 : f32 to vector<8x256xf32>
    %1056 = arith.select %1053, %1054, %1055 : vector<8x256xi1>, vector<8x256xf32>
    %1057 = arith.addf %1041, %1056 : vector<8x256xf32>
    %cst_605 = arith.constant 0.000000e+00 : f32
    %1058 = vector.broadcast %cst_605 : f32 to vector<8x256xf32>
    %1059 = arith.select %1053, %1058, %1051 : vector<8x256xi1>, vector<8x256xf32>
    %cst_606 = arith.constant 8.000000e-01 : f32
    %1060 = vector.broadcast %cst_606 : f32 to vector<8x256xf32>
    %1061 = arith.mulf %1060, %1047 : vector<8x256xf32>
    %c24_607 = arith.constant 24 : index
    %c0_608 = arith.constant 0 : index
    %1062 = vector.load %arg9[%c24_607, %c0_608] : memref<192x256xf32, #tpu.memory_space<vmem>>, vector<8x256xf32>
    %1063 = arith.addf %1061, %1062 : vector<8x256xf32>
    %1064 = arith.subf %1063, %1059 : vector<8x256xf32>
    %cst_609 = arith.constant 1.000000e-01 : f32
    %1065 = vector.broadcast %cst_609 : f32 to vector<8x256xf32>
    %1066 = arith.mulf %1065, %1064 : vector<8x256xf32>
    %1067 = arith.addf %1059, %1066 : vector<8x256xf32>
    %cst_610 = arith.constant 3.300000e-01 : f32
    %1068 = vector.broadcast %cst_610 : f32 to vector<8x256xf32>
    %1069 = arith.cmpf ogt, %1067, %1068 : vector<8x256xf32>
    %cst_611 = arith.constant 0.110047437 : f32
    %cst_612 = arith.constant 0.000000e+00 : f32
    %1070 = vector.broadcast %cst_611 : f32 to vector<8x256xf32>
    %1071 = vector.broadcast %cst_612 : f32 to vector<8x256xf32>
    %1072 = arith.select %1069, %1070, %1071 : vector<8x256xi1>, vector<8x256xf32>
    %1073 = arith.addf %1057, %1072 : vector<8x256xf32>
    %cst_613 = arith.constant 0.000000e+00 : f32
    %1074 = vector.broadcast %cst_613 : f32 to vector<8x256xf32>
    %1075 = arith.select %1069, %1074, %1067 : vector<8x256xi1>, vector<8x256xf32>
    %cst_614 = arith.constant 8.000000e-01 : f32
    %1076 = vector.broadcast %cst_614 : f32 to vector<8x256xf32>
    %1077 = arith.mulf %1076, %1063 : vector<8x256xf32>
    %c32_615 = arith.constant 32 : index
    %c0_616 = arith.constant 0 : index
    %1078 = vector.load %arg9[%c32_615, %c0_616] : memref<192x256xf32, #tpu.memory_space<vmem>>, vector<8x256xf32>
    %1079 = arith.addf %1077, %1078 : vector<8x256xf32>
    %1080 = arith.subf %1079, %1075 : vector<8x256xf32>
    %cst_617 = arith.constant 1.000000e-01 : f32
    %1081 = vector.broadcast %cst_617 : f32 to vector<8x256xf32>
    %1082 = arith.mulf %1081, %1080 : vector<8x256xf32>
    %1083 = arith.addf %1075, %1082 : vector<8x256xf32>
    %cst_618 = arith.constant 3.300000e-01 : f32
    %1084 = vector.broadcast %cst_618 : f32 to vector<8x256xf32>
    %1085 = arith.cmpf ogt, %1083, %1084 : vector<8x256xf32>
    %cst_619 = arith.constant 0.120673656 : f32
    %cst_620 = arith.constant 0.000000e+00 : f32
    %1086 = vector.broadcast %cst_619 : f32 to vector<8x256xf32>
    %1087 = vector.broadcast %cst_620 : f32 to vector<8x256xf32>
    %1088 = arith.select %1085, %1086, %1087 : vector<8x256xi1>, vector<8x256xf32>
    %1089 = arith.addf %1073, %1088 : vector<8x256xf32>
    %cst_621 = arith.constant 0.000000e+00 : f32
    %1090 = vector.broadcast %cst_621 : f32 to vector<8x256xf32>
    %1091 = arith.select %1085, %1090, %1083 : vector<8x256xi1>, vector<8x256xf32>
    %cst_622 = arith.constant 8.000000e-01 : f32
    %1092 = vector.broadcast %cst_622 : f32 to vector<8x256xf32>
    %1093 = arith.mulf %1092, %1079 : vector<8x256xf32>
    %c40_623 = arith.constant 40 : index
    %c0_624 = arith.constant 0 : index
    %1094 = vector.load %arg9[%c40_623, %c0_624] : memref<192x256xf32, #tpu.memory_space<vmem>>, vector<8x256xf32>
    %1095 = arith.addf %1093, %1094 : vector<8x256xf32>
    %1096 = arith.subf %1095, %1091 : vector<8x256xf32>
    %cst_625 = arith.constant 1.000000e-01 : f32
    %1097 = vector.broadcast %cst_625 : f32 to vector<8x256xf32>
    %1098 = arith.mulf %1097, %1096 : vector<8x256xf32>
    %1099 = arith.addf %1091, %1098 : vector<8x256xf32>
    %cst_626 = arith.constant 3.300000e-01 : f32
    %1100 = vector.broadcast %cst_626 : f32 to vector<8x256xf32>
    %1101 = arith.cmpf ogt, %1099, %1100 : vector<8x256xf32>
    %cst_627 = arith.constant 0.132080242 : f32
    %cst_628 = arith.constant 0.000000e+00 : f32
    %1102 = vector.broadcast %cst_627 : f32 to vector<8x256xf32>
    %1103 = vector.broadcast %cst_628 : f32 to vector<8x256xf32>
    %1104 = arith.select %1101, %1102, %1103 : vector<8x256xi1>, vector<8x256xf32>
    %1105 = arith.addf %1089, %1104 : vector<8x256xf32>
    %cst_629 = arith.constant 0.000000e+00 : f32
    %1106 = vector.broadcast %cst_629 : f32 to vector<8x256xf32>
    %1107 = arith.select %1101, %1106, %1099 : vector<8x256xi1>, vector<8x256xf32>
    %cst_630 = arith.constant 8.000000e-01 : f32
    %1108 = vector.broadcast %cst_630 : f32 to vector<8x256xf32>
    %1109 = arith.mulf %1108, %1095 : vector<8x256xf32>
    %c48_631 = arith.constant 48 : index
    %c0_632 = arith.constant 0 : index
    %1110 = vector.load %arg9[%c48_631, %c0_632] : memref<192x256xf32, #tpu.memory_space<vmem>>, vector<8x256xf32>
    %1111 = arith.addf %1109, %1110 : vector<8x256xf32>
    %1112 = arith.subf %1111, %1107 : vector<8x256xf32>
    %cst_633 = arith.constant 1.000000e-01 : f32
    %1113 = vector.broadcast %cst_633 : f32 to vector<8x256xf32>
    %1114 = arith.mulf %1113, %1112 : vector<8x256xf32>
    %1115 = arith.addf %1107, %1114 : vector<8x256xf32>
    %cst_634 = arith.constant 3.300000e-01 : f32
    %1116 = vector.broadcast %cst_634 : f32 to vector<8x256xf32>
    %1117 = arith.cmpf ogt, %1115, %1116 : vector<8x256xf32>
    %cst_635 = arith.constant 0.14425382 : f32
    %cst_636 = arith.constant 0.000000e+00 : f32
    %1118 = vector.broadcast %cst_635 : f32 to vector<8x256xf32>
    %1119 = vector.broadcast %cst_636 : f32 to vector<8x256xf32>
    %1120 = arith.select %1117, %1118, %1119 : vector<8x256xi1>, vector<8x256xf32>
    %1121 = arith.addf %1105, %1120 : vector<8x256xf32>
    %cst_637 = arith.constant 0.000000e+00 : f32
    %1122 = vector.broadcast %cst_637 : f32 to vector<8x256xf32>
    %1123 = arith.select %1117, %1122, %1115 : vector<8x256xi1>, vector<8x256xf32>
    %cst_638 = arith.constant 8.000000e-01 : f32
    %1124 = vector.broadcast %cst_638 : f32 to vector<8x256xf32>
    %1125 = arith.mulf %1124, %1111 : vector<8x256xf32>
    %c56_639 = arith.constant 56 : index
    %c0_640 = arith.constant 0 : index
    %1126 = vector.load %arg9[%c56_639, %c0_640] : memref<192x256xf32, #tpu.memory_space<vmem>>, vector<8x256xf32>
    %1127 = arith.addf %1125, %1126 : vector<8x256xf32>
    %1128 = arith.subf %1127, %1123 : vector<8x256xf32>
    %cst_641 = arith.constant 1.000000e-01 : f32
    %1129 = vector.broadcast %cst_641 : f32 to vector<8x256xf32>
    %1130 = arith.mulf %1129, %1128 : vector<8x256xf32>
    %1131 = arith.addf %1123, %1130 : vector<8x256xf32>
    %cst_642 = arith.constant 3.300000e-01 : f32
    %1132 = vector.broadcast %cst_642 : f32 to vector<8x256xf32>
    %1133 = arith.cmpf ogt, %1131, %1132 : vector<8x256xf32>
    %cst_643 = arith.constant 0.157154515 : f32
    %cst_644 = arith.constant 0.000000e+00 : f32
    %1134 = vector.broadcast %cst_643 : f32 to vector<8x256xf32>
    %1135 = vector.broadcast %cst_644 : f32 to vector<8x256xf32>
    %1136 = arith.select %1133, %1134, %1135 : vector<8x256xi1>, vector<8x256xf32>
    %1137 = arith.addf %1121, %1136 : vector<8x256xf32>
    %cst_645 = arith.constant 0.000000e+00 : f32
    %1138 = vector.broadcast %cst_645 : f32 to vector<8x256xf32>
    %1139 = arith.select %1133, %1138, %1131 : vector<8x256xi1>, vector<8x256xf32>
    %cst_646 = arith.constant 8.000000e-01 : f32
    %1140 = vector.broadcast %cst_646 : f32 to vector<8x256xf32>
    %1141 = arith.mulf %1140, %1127 : vector<8x256xf32>
    %c64_647 = arith.constant 64 : index
    %c0_648 = arith.constant 0 : index
    %1142 = vector.load %arg9[%c64_647, %c0_648] : memref<192x256xf32, #tpu.memory_space<vmem>>, vector<8x256xf32>
    %1143 = arith.addf %1141, %1142 : vector<8x256xf32>
    %1144 = arith.subf %1143, %1139 : vector<8x256xf32>
    %cst_649 = arith.constant 1.000000e-01 : f32
    %1145 = vector.broadcast %cst_649 : f32 to vector<8x256xf32>
    %1146 = arith.mulf %1145, %1144 : vector<8x256xf32>
    %1147 = arith.addf %1139, %1146 : vector<8x256xf32>
    %cst_650 = arith.constant 3.300000e-01 : f32
    %1148 = vector.broadcast %cst_650 : f32 to vector<8x256xf32>
    %1149 = arith.cmpf ogt, %1147, %1148 : vector<8x256xf32>
    %cst_651 = arith.constant 0.170706764 : f32
    %cst_652 = arith.constant 0.000000e+00 : f32
    %1150 = vector.broadcast %cst_651 : f32 to vector<8x256xf32>
    %1151 = vector.broadcast %cst_652 : f32 to vector<8x256xf32>
    %1152 = arith.select %1149, %1150, %1151 : vector<8x256xi1>, vector<8x256xf32>
    %1153 = arith.addf %1137, %1152 : vector<8x256xf32>
    %cst_653 = arith.constant 0.000000e+00 : f32
    %1154 = vector.broadcast %cst_653 : f32 to vector<8x256xf32>
    %1155 = arith.select %1149, %1154, %1147 : vector<8x256xi1>, vector<8x256xf32>
    %cst_654 = arith.constant 8.000000e-01 : f32
    %1156 = vector.broadcast %cst_654 : f32 to vector<8x256xf32>
    %1157 = arith.mulf %1156, %1143 : vector<8x256xf32>
    %c72_655 = arith.constant 72 : index
    %c0_656 = arith.constant 0 : index
    %1158 = vector.load %arg9[%c72_655, %c0_656] : memref<192x256xf32, #tpu.memory_space<vmem>>, vector<8x256xf32>
    %1159 = arith.addf %1157, %1158 : vector<8x256xf32>
    %1160 = arith.subf %1159, %1155 : vector<8x256xf32>
    %cst_657 = arith.constant 1.000000e-01 : f32
    %1161 = vector.broadcast %cst_657 : f32 to vector<8x256xf32>
    %1162 = arith.mulf %1161, %1160 : vector<8x256xf32>
    %1163 = arith.addf %1155, %1162 : vector<8x256xf32>
    %cst_658 = arith.constant 3.300000e-01 : f32
    %1164 = vector.broadcast %cst_658 : f32 to vector<8x256xf32>
    %1165 = arith.cmpf ogt, %1163, %1164 : vector<8x256xf32>
    %cst_659 = arith.constant 0.184787452 : f32
    %cst_660 = arith.constant 0.000000e+00 : f32
    %1166 = vector.broadcast %cst_659 : f32 to vector<8x256xf32>
    %1167 = vector.broadcast %cst_660 : f32 to vector<8x256xf32>
    %1168 = arith.select %1165, %1166, %1167 : vector<8x256xi1>, vector<8x256xf32>
    %1169 = arith.addf %1153, %1168 : vector<8x256xf32>
    %cst_661 = arith.constant 0.000000e+00 : f32
    %1170 = vector.broadcast %cst_661 : f32 to vector<8x256xf32>
    %1171 = arith.select %1165, %1170, %1163 : vector<8x256xi1>, vector<8x256xf32>
    %cst_662 = arith.constant 8.000000e-01 : f32
    %1172 = vector.broadcast %cst_662 : f32 to vector<8x256xf32>
    %1173 = arith.mulf %1172, %1159 : vector<8x256xf32>
    %c80_663 = arith.constant 80 : index
    %c0_664 = arith.constant 0 : index
    %1174 = vector.load %arg9[%c80_663, %c0_664] : memref<192x256xf32, #tpu.memory_space<vmem>>, vector<8x256xf32>
    %1175 = arith.addf %1173, %1174 : vector<8x256xf32>
    %1176 = arith.subf %1175, %1171 : vector<8x256xf32>
    %cst_665 = arith.constant 1.000000e-01 : f32
    %1177 = vector.broadcast %cst_665 : f32 to vector<8x256xf32>
    %1178 = arith.mulf %1177, %1176 : vector<8x256xf32>
    %1179 = arith.addf %1171, %1178 : vector<8x256xf32>
    %cst_666 = arith.constant 3.300000e-01 : f32
    %1180 = vector.broadcast %cst_666 : f32 to vector<8x256xf32>
    %1181 = arith.cmpf ogt, %1179, %1180 : vector<8x256xf32>
    %cst_667 = arith.constant 1.992110e-01 : f32
    %cst_668 = arith.constant 0.000000e+00 : f32
    %1182 = vector.broadcast %cst_667 : f32 to vector<8x256xf32>
    %1183 = vector.broadcast %cst_668 : f32 to vector<8x256xf32>
    %1184 = arith.select %1181, %1182, %1183 : vector<8x256xi1>, vector<8x256xf32>
    %1185 = arith.addf %1169, %1184 : vector<8x256xf32>
    %cst_669 = arith.constant 0.000000e+00 : f32
    %1186 = vector.broadcast %cst_669 : f32 to vector<8x256xf32>
    %1187 = arith.select %1181, %1186, %1179 : vector<8x256xi1>, vector<8x256xf32>
    %cst_670 = arith.constant 8.000000e-01 : f32
    %1188 = vector.broadcast %cst_670 : f32 to vector<8x256xf32>
    %1189 = arith.mulf %1188, %1175 : vector<8x256xf32>
    %c88_671 = arith.constant 88 : index
    %c0_672 = arith.constant 0 : index
    %1190 = vector.load %arg9[%c88_671, %c0_672] : memref<192x256xf32, #tpu.memory_space<vmem>>, vector<8x256xf32>
    %1191 = arith.addf %1189, %1190 : vector<8x256xf32>
    %1192 = arith.subf %1191, %1187 : vector<8x256xf32>
    %cst_673 = arith.constant 1.000000e-01 : f32
    %1193 = vector.broadcast %cst_673 : f32 to vector<8x256xf32>
    %1194 = arith.mulf %1193, %1192 : vector<8x256xf32>
    %1195 = arith.addf %1187, %1194 : vector<8x256xf32>
    %cst_674 = arith.constant 3.300000e-01 : f32
    %1196 = vector.broadcast %cst_674 : f32 to vector<8x256xf32>
    %1197 = arith.cmpf ogt, %1195, %1196 : vector<8x256xf32>
    %cst_675 = arith.constant 0.213710055 : f32
    %cst_676 = arith.constant 0.000000e+00 : f32
    %1198 = vector.broadcast %cst_675 : f32 to vector<8x256xf32>
    %1199 = vector.broadcast %cst_676 : f32 to vector<8x256xf32>
    %1200 = arith.select %1197, %1198, %1199 : vector<8x256xi1>, vector<8x256xf32>
    %1201 = arith.addf %1185, %1200 : vector<8x256xf32>
    %cst_677 = arith.constant 0.000000e+00 : f32
    %1202 = vector.broadcast %cst_677 : f32 to vector<8x256xf32>
    %1203 = arith.select %1197, %1202, %1195 : vector<8x256xi1>, vector<8x256xf32>
    %cst_678 = arith.constant 8.000000e-01 : f32
    %1204 = vector.broadcast %cst_678 : f32 to vector<8x256xf32>
    %1205 = arith.mulf %1204, %1191 : vector<8x256xf32>
    %c96_679 = arith.constant 96 : index
    %c0_680 = arith.constant 0 : index
    %1206 = vector.load %arg9[%c96_679, %c0_680] : memref<192x256xf32, #tpu.memory_space<vmem>>, vector<8x256xf32>
    %1207 = arith.addf %1205, %1206 : vector<8x256xf32>
    %1208 = arith.subf %1207, %1203 : vector<8x256xf32>
    %cst_681 = arith.constant 1.000000e-01 : f32
    %1209 = vector.broadcast %cst_681 : f32 to vector<8x256xf32>
    %1210 = arith.mulf %1209, %1208 : vector<8x256xf32>
    %1211 = arith.addf %1203, %1210 : vector<8x256xf32>
    %cst_682 = arith.constant 3.300000e-01 : f32
    %1212 = vector.broadcast %cst_682 : f32 to vector<8x256xf32>
    %1213 = arith.cmpf ogt, %1211, %1212 : vector<8x256xf32>
    %cst_683 = arith.constant 0.227911249 : f32
    %cst_684 = arith.constant 0.000000e+00 : f32
    %1214 = vector.broadcast %cst_683 : f32 to vector<8x256xf32>
    %1215 = vector.broadcast %cst_684 : f32 to vector<8x256xf32>
    %1216 = arith.select %1213, %1214, %1215 : vector<8x256xi1>, vector<8x256xf32>
    %1217 = arith.addf %1201, %1216 : vector<8x256xf32>
    %cst_685 = arith.constant 0.000000e+00 : f32
    %1218 = vector.broadcast %cst_685 : f32 to vector<8x256xf32>
    %1219 = arith.select %1213, %1218, %1211 : vector<8x256xi1>, vector<8x256xf32>
    %cst_686 = arith.constant 8.000000e-01 : f32
    %1220 = vector.broadcast %cst_686 : f32 to vector<8x256xf32>
    %1221 = arith.mulf %1220, %1207 : vector<8x256xf32>
    %c104_687 = arith.constant 104 : index
    %c0_688 = arith.constant 0 : index
    %1222 = vector.load %arg9[%c104_687, %c0_688] : memref<192x256xf32, #tpu.memory_space<vmem>>, vector<8x256xf32>
    %1223 = arith.addf %1221, %1222 : vector<8x256xf32>
    %1224 = arith.subf %1223, %1219 : vector<8x256xf32>
    %cst_689 = arith.constant 1.000000e-01 : f32
    %1225 = vector.broadcast %cst_689 : f32 to vector<8x256xf32>
    %1226 = arith.mulf %1225, %1224 : vector<8x256xf32>
    %1227 = arith.addf %1219, %1226 : vector<8x256xf32>
    %cst_690 = arith.constant 3.300000e-01 : f32
    %1228 = vector.broadcast %cst_690 : f32 to vector<8x256xf32>
    %1229 = arith.cmpf ogt, %1227, %1228 : vector<8x256xf32>
    %cst_691 = arith.constant 0.241304263 : f32
    %cst_692 = arith.constant 0.000000e+00 : f32
    %1230 = vector.broadcast %cst_691 : f32 to vector<8x256xf32>
    %1231 = vector.broadcast %cst_692 : f32 to vector<8x256xf32>
    %1232 = arith.select %1229, %1230, %1231 : vector<8x256xi1>, vector<8x256xf32>
    %1233 = arith.addf %1217, %1232 : vector<8x256xf32>
    %cst_693 = arith.constant 0.000000e+00 : f32
    %1234 = vector.broadcast %cst_693 : f32 to vector<8x256xf32>
    %1235 = arith.select %1229, %1234, %1227 : vector<8x256xi1>, vector<8x256xf32>
    %cst_694 = arith.constant 8.000000e-01 : f32
    %1236 = vector.broadcast %cst_694 : f32 to vector<8x256xf32>
    %1237 = arith.mulf %1236, %1223 : vector<8x256xf32>
    %c112_695 = arith.constant 112 : index
    %c0_696 = arith.constant 0 : index
    %1238 = vector.load %arg9[%c112_695, %c0_696] : memref<192x256xf32, #tpu.memory_space<vmem>>, vector<8x256xf32>
    %1239 = arith.addf %1237, %1238 : vector<8x256xf32>
    %1240 = arith.subf %1239, %1235 : vector<8x256xf32>
    %cst_697 = arith.constant 1.000000e-01 : f32
    %1241 = vector.broadcast %cst_697 : f32 to vector<8x256xf32>
    %1242 = arith.mulf %1241, %1240 : vector<8x256xf32>
    %1243 = arith.addf %1235, %1242 : vector<8x256xf32>
    %cst_698 = arith.constant 3.300000e-01 : f32
    %1244 = vector.broadcast %cst_698 : f32 to vector<8x256xf32>
    %1245 = arith.cmpf ogt, %1243, %1244 : vector<8x256xf32>
    %cst_699 = arith.constant 0.253202766 : f32
    %cst_700 = arith.constant 0.000000e+00 : f32
    %1246 = vector.broadcast %cst_699 : f32 to vector<8x256xf32>
    %1247 = vector.broadcast %cst_700 : f32 to vector<8x256xf32>
    %1248 = arith.select %1245, %1246, %1247 : vector<8x256xi1>, vector<8x256xf32>
    %1249 = arith.addf %1233, %1248 : vector<8x256xf32>
    %cst_701 = arith.constant 0.000000e+00 : f32
    %1250 = vector.broadcast %cst_701 : f32 to vector<8x256xf32>
    %1251 = arith.select %1245, %1250, %1243 : vector<8x256xi1>, vector<8x256xf32>
    %cst_702 = arith.constant 8.000000e-01 : f32
    %1252 = vector.broadcast %cst_702 : f32 to vector<8x256xf32>
    %1253 = arith.mulf %1252, %1239 : vector<8x256xf32>
    %c120_703 = arith.constant 120 : index
    %c0_704 = arith.constant 0 : index
    %1254 = vector.load %arg9[%c120_703, %c0_704] : memref<192x256xf32, #tpu.memory_space<vmem>>, vector<8x256xf32>
    %1255 = arith.addf %1253, %1254 : vector<8x256xf32>
    %1256 = arith.subf %1255, %1251 : vector<8x256xf32>
    %cst_705 = arith.constant 1.000000e-01 : f32
    %1257 = vector.broadcast %cst_705 : f32 to vector<8x256xf32>
    %1258 = arith.mulf %1257, %1256 : vector<8x256xf32>
    %1259 = arith.addf %1251, %1258 : vector<8x256xf32>
    %cst_706 = arith.constant 3.300000e-01 : f32
    %1260 = vector.broadcast %cst_706 : f32 to vector<8x256xf32>
    %1261 = arith.cmpf ogt, %1259, %1260 : vector<8x256xf32>
    %cst_707 = arith.constant 0.262695044 : f32
    %cst_708 = arith.constant 0.000000e+00 : f32
    %1262 = vector.broadcast %cst_707 : f32 to vector<8x256xf32>
    %1263 = vector.broadcast %cst_708 : f32 to vector<8x256xf32>
    %1264 = arith.select %1261, %1262, %1263 : vector<8x256xi1>, vector<8x256xf32>
    %1265 = arith.addf %1249, %1264 : vector<8x256xf32>
    %cst_709 = arith.constant 0.000000e+00 : f32
    %1266 = vector.broadcast %cst_709 : f32 to vector<8x256xf32>
    %1267 = arith.select %1261, %1266, %1259 : vector<8x256xi1>, vector<8x256xf32>
    %cst_710 = arith.constant 8.000000e-01 : f32
    %1268 = vector.broadcast %cst_710 : f32 to vector<8x256xf32>
    %1269 = arith.mulf %1268, %1255 : vector<8x256xf32>
    %c128_711 = arith.constant 128 : index
    %c0_712 = arith.constant 0 : index
    %1270 = vector.load %arg9[%c128_711, %c0_712] : memref<192x256xf32, #tpu.memory_space<vmem>>, vector<8x256xf32>
    %1271 = arith.addf %1269, %1270 : vector<8x256xf32>
    %1272 = arith.subf %1271, %1267 : vector<8x256xf32>
    %cst_713 = arith.constant 1.000000e-01 : f32
    %1273 = vector.broadcast %cst_713 : f32 to vector<8x256xf32>
    %1274 = arith.mulf %1273, %1272 : vector<8x256xf32>
    %1275 = arith.addf %1267, %1274 : vector<8x256xf32>
    %cst_714 = arith.constant 3.300000e-01 : f32
    %1276 = vector.broadcast %cst_714 : f32 to vector<8x256xf32>
    %1277 = arith.cmpf ogt, %1275, %1276 : vector<8x256xf32>
    %cst_715 = arith.constant 0.268581688 : f32
    %cst_716 = arith.constant 0.000000e+00 : f32
    %1278 = vector.broadcast %cst_715 : f32 to vector<8x256xf32>
    %1279 = vector.broadcast %cst_716 : f32 to vector<8x256xf32>
    %1280 = arith.select %1277, %1278, %1279 : vector<8x256xi1>, vector<8x256xf32>
    %1281 = arith.addf %1265, %1280 : vector<8x256xf32>
    %cst_717 = arith.constant 0.000000e+00 : f32
    %1282 = vector.broadcast %cst_717 : f32 to vector<8x256xf32>
    %1283 = arith.select %1277, %1282, %1275 : vector<8x256xi1>, vector<8x256xf32>
    %cst_718 = arith.constant 8.000000e-01 : f32
    %1284 = vector.broadcast %cst_718 : f32 to vector<8x256xf32>
    %1285 = arith.mulf %1284, %1271 : vector<8x256xf32>
    %c136_719 = arith.constant 136 : index
    %c0_720 = arith.constant 0 : index
    %1286 = vector.load %arg9[%c136_719, %c0_720] : memref<192x256xf32, #tpu.memory_space<vmem>>, vector<8x256xf32>
    %1287 = arith.addf %1285, %1286 : vector<8x256xf32>
    %1288 = arith.subf %1287, %1283 : vector<8x256xf32>
    %cst_721 = arith.constant 1.000000e-01 : f32
    %1289 = vector.broadcast %cst_721 : f32 to vector<8x256xf32>
    %1290 = arith.mulf %1289, %1288 : vector<8x256xf32>
    %1291 = arith.addf %1283, %1290 : vector<8x256xf32>
    %cst_722 = arith.constant 3.300000e-01 : f32
    %1292 = vector.broadcast %cst_722 : f32 to vector<8x256xf32>
    %1293 = arith.cmpf ogt, %1291, %1292 : vector<8x256xf32>
    %cst_723 = arith.constant 2.692970e-01 : f32
    %cst_724 = arith.constant 0.000000e+00 : f32
    %1294 = vector.broadcast %cst_723 : f32 to vector<8x256xf32>
    %1295 = vector.broadcast %cst_724 : f32 to vector<8x256xf32>
    %1296 = arith.select %1293, %1294, %1295 : vector<8x256xi1>, vector<8x256xf32>
    %1297 = arith.addf %1281, %1296 : vector<8x256xf32>
    %cst_725 = arith.constant 0.000000e+00 : f32
    %1298 = vector.broadcast %cst_725 : f32 to vector<8x256xf32>
    %1299 = arith.select %1293, %1298, %1291 : vector<8x256xi1>, vector<8x256xf32>
    %cst_726 = arith.constant 8.000000e-01 : f32
    %1300 = vector.broadcast %cst_726 : f32 to vector<8x256xf32>
    %1301 = arith.mulf %1300, %1287 : vector<8x256xf32>
    %c144_727 = arith.constant 144 : index
    %c0_728 = arith.constant 0 : index
    %1302 = vector.load %arg9[%c144_727, %c0_728] : memref<192x256xf32, #tpu.memory_space<vmem>>, vector<8x256xf32>
    %1303 = arith.addf %1301, %1302 : vector<8x256xf32>
    %1304 = arith.subf %1303, %1299 : vector<8x256xf32>
    %cst_729 = arith.constant 1.000000e-01 : f32
    %1305 = vector.broadcast %cst_729 : f32 to vector<8x256xf32>
    %1306 = arith.mulf %1305, %1304 : vector<8x256xf32>
    %1307 = arith.addf %1299, %1306 : vector<8x256xf32>
    %cst_730 = arith.constant 3.300000e-01 : f32
    %1308 = vector.broadcast %cst_730 : f32 to vector<8x256xf32>
    %1309 = arith.cmpf ogt, %1307, %1308 : vector<8x256xf32>
    %cst_731 = arith.constant 2.628100e-01 : f32
    %cst_732 = arith.constant 0.000000e+00 : f32
    %1310 = vector.broadcast %cst_731 : f32 to vector<8x256xf32>
    %1311 = vector.broadcast %cst_732 : f32 to vector<8x256xf32>
    %1312 = arith.select %1309, %1310, %1311 : vector<8x256xi1>, vector<8x256xf32>
    %1313 = arith.addf %1297, %1312 : vector<8x256xf32>
    %cst_733 = arith.constant 0.000000e+00 : f32
    %1314 = vector.broadcast %cst_733 : f32 to vector<8x256xf32>
    %1315 = arith.select %1309, %1314, %1307 : vector<8x256xi1>, vector<8x256xf32>
    %cst_734 = arith.constant 8.000000e-01 : f32
    %1316 = vector.broadcast %cst_734 : f32 to vector<8x256xf32>
    %1317 = arith.mulf %1316, %1303 : vector<8x256xf32>
    %c152_735 = arith.constant 152 : index
    %c0_736 = arith.constant 0 : index
    %1318 = vector.load %arg9[%c152_735, %c0_736] : memref<192x256xf32, #tpu.memory_space<vmem>>, vector<8x256xf32>
    %1319 = arith.addf %1317, %1318 : vector<8x256xf32>
    %1320 = arith.subf %1319, %1315 : vector<8x256xf32>
    %cst_737 = arith.constant 1.000000e-01 : f32
    %1321 = vector.broadcast %cst_737 : f32 to vector<8x256xf32>
    %1322 = arith.mulf %1321, %1320 : vector<8x256xf32>
    %1323 = arith.addf %1315, %1322 : vector<8x256xf32>
    %cst_738 = arith.constant 3.300000e-01 : f32
    %1324 = vector.broadcast %cst_738 : f32 to vector<8x256xf32>
    %1325 = arith.cmpf ogt, %1323, %1324 : vector<8x256xf32>
    %cst_739 = arith.constant 2.465000e-01 : f32
    %cst_740 = arith.constant 0.000000e+00 : f32
    %1326 = vector.broadcast %cst_739 : f32 to vector<8x256xf32>
    %1327 = vector.broadcast %cst_740 : f32 to vector<8x256xf32>
    %1328 = arith.select %1325, %1326, %1327 : vector<8x256xi1>, vector<8x256xf32>
    %1329 = arith.addf %1313, %1328 : vector<8x256xf32>
    %cst_741 = arith.constant 0.000000e+00 : f32
    %1330 = vector.broadcast %cst_741 : f32 to vector<8x256xf32>
    %1331 = arith.select %1325, %1330, %1323 : vector<8x256xi1>, vector<8x256xf32>
    %cst_742 = arith.constant 8.000000e-01 : f32
    %1332 = vector.broadcast %cst_742 : f32 to vector<8x256xf32>
    %1333 = arith.mulf %1332, %1319 : vector<8x256xf32>
    %c160_743 = arith.constant 160 : index
    %c0_744 = arith.constant 0 : index
    %1334 = vector.load %arg9[%c160_743, %c0_744] : memref<192x256xf32, #tpu.memory_space<vmem>>, vector<8x256xf32>
    %1335 = arith.addf %1333, %1334 : vector<8x256xf32>
    %1336 = arith.subf %1335, %1331 : vector<8x256xf32>
    %cst_745 = arith.constant 1.000000e-01 : f32
    %1337 = vector.broadcast %cst_745 : f32 to vector<8x256xf32>
    %1338 = arith.mulf %1337, %1336 : vector<8x256xf32>
    %1339 = arith.addf %1331, %1338 : vector<8x256xf32>
    %cst_746 = arith.constant 3.300000e-01 : f32
    %1340 = vector.broadcast %cst_746 : f32 to vector<8x256xf32>
    %1341 = arith.cmpf ogt, %1339, %1340 : vector<8x256xf32>
    %cst_747 = arith.constant 2.170000e-01 : f32
    %cst_748 = arith.constant 0.000000e+00 : f32
    %1342 = vector.broadcast %cst_747 : f32 to vector<8x256xf32>
    %1343 = vector.broadcast %cst_748 : f32 to vector<8x256xf32>
    %1344 = arith.select %1341, %1342, %1343 : vector<8x256xi1>, vector<8x256xf32>
    %1345 = arith.addf %1329, %1344 : vector<8x256xf32>
    %cst_749 = arith.constant 0.000000e+00 : f32
    %1346 = vector.broadcast %cst_749 : f32 to vector<8x256xf32>
    %1347 = arith.select %1341, %1346, %1339 : vector<8x256xi1>, vector<8x256xf32>
    %cst_750 = arith.constant 8.000000e-01 : f32
    %1348 = vector.broadcast %cst_750 : f32 to vector<8x256xf32>
    %1349 = arith.mulf %1348, %1335 : vector<8x256xf32>
    %c168_751 = arith.constant 168 : index
    %c0_752 = arith.constant 0 : index
    %1350 = vector.load %arg9[%c168_751, %c0_752] : memref<192x256xf32, #tpu.memory_space<vmem>>, vector<8x256xf32>
    %1351 = arith.addf %1349, %1350 : vector<8x256xf32>
    %1352 = arith.subf %1351, %1347 : vector<8x256xf32>
    %cst_753 = arith.constant 1.000000e-01 : f32
    %1353 = vector.broadcast %cst_753 : f32 to vector<8x256xf32>
    %1354 = arith.mulf %1353, %1352 : vector<8x256xf32>
    %1355 = arith.addf %1347, %1354 : vector<8x256xf32>
    %cst_754 = arith.constant 3.300000e-01 : f32
    %1356 = vector.broadcast %cst_754 : f32 to vector<8x256xf32>
    %1357 = arith.cmpf ogt, %1355, %1356 : vector<8x256xf32>
    %cst_755 = arith.constant 1.700000e-01 : f32
    %cst_756 = arith.constant 0.000000e+00 : f32
    %1358 = vector.broadcast %cst_755 : f32 to vector<8x256xf32>
    %1359 = vector.broadcast %cst_756 : f32 to vector<8x256xf32>
    %1360 = arith.select %1357, %1358, %1359 : vector<8x256xi1>, vector<8x256xf32>
    %1361 = arith.addf %1345, %1360 : vector<8x256xf32>
    %cst_757 = arith.constant 0.000000e+00 : f32
    %1362 = vector.broadcast %cst_757 : f32 to vector<8x256xf32>
    %1363 = arith.select %1357, %1362, %1355 : vector<8x256xi1>, vector<8x256xf32>
    %cst_758 = arith.constant 8.000000e-01 : f32
    %1364 = vector.broadcast %cst_758 : f32 to vector<8x256xf32>
    %1365 = arith.mulf %1364, %1351 : vector<8x256xf32>
    %c176_759 = arith.constant 176 : index
    %c0_760 = arith.constant 0 : index
    %1366 = vector.load %arg9[%c176_759, %c0_760] : memref<192x256xf32, #tpu.memory_space<vmem>>, vector<8x256xf32>
    %1367 = arith.addf %1365, %1366 : vector<8x256xf32>
    %1368 = arith.subf %1367, %1363 : vector<8x256xf32>
    %cst_761 = arith.constant 1.000000e-01 : f32
    %1369 = vector.broadcast %cst_761 : f32 to vector<8x256xf32>
    %1370 = arith.mulf %1369, %1368 : vector<8x256xf32>
    %1371 = arith.addf %1363, %1370 : vector<8x256xf32>
    %cst_762 = arith.constant 3.300000e-01 : f32
    %1372 = vector.broadcast %cst_762 : f32 to vector<8x256xf32>
    %1373 = arith.cmpf ogt, %1371, %1372 : vector<8x256xf32>
    %cst_763 = arith.constant 1.000000e-01 : f32
    %cst_764 = arith.constant 0.000000e+00 : f32
    %1374 = vector.broadcast %cst_763 : f32 to vector<8x256xf32>
    %1375 = vector.broadcast %cst_764 : f32 to vector<8x256xf32>
    %1376 = arith.select %1373, %1374, %1375 : vector<8x256xi1>, vector<8x256xf32>
    %1377 = arith.addf %1361, %1376 : vector<8x256xf32>
    %c0_765 = arith.constant 0 : index
    %c0_766 = arith.constant 0 : index
    %1378 = vector.load %arg6[%c0_765, %c0_766] : memref<256x128xf32, #tpu.memory_space<vmem>>, vector<256x128xf32>
    %cst_767 = arith.constant dense<0.000000e+00> : vector<8x128xf32>
    %1379 = tpu.matmul %1377, %1378, %cst_767 {dimension_numbers = #tpu.dot_dimension_numbers<[1], [0], [0], [1], [0, 0, 1, 1], [], []>} : vector<8x256xf32>, vector<256x128xf32>, vector<8x128xf32> -> vector<8x128xf32>
    %c0_768 = arith.constant 0 : index
    %c0_769 = arith.constant 0 : index
    %1380 = vector.load %arg7[%c0_768, %c0_769] : memref<8x128xf32, #tpu.memory_space<vmem>>, vector<8x128xf32>
    tpu.vector_store %arg7[%c0_768, %c0_769], %1379 {strides = array<i32>} : memref<8x128xf32, #tpu.memory_space<vmem>>, vector<8x128xf32>,
    return
  }
  func.func @transform_0(%arg0: i32) -> i32 {
    %c0_i32 = arith.constant 0 : i32
    %c0_i32_0 = arith.constant 0 : i32
    return %c0_i32 : i32
  }
  func.func @transform_1(%arg0: i32) -> (i32, i32) {
    %c0_i32 = arith.constant 0 : i32
    %c0_i32_0 = arith.constant 0 : i32
    return %arg0, %c0_i32 : i32, i32
  }
  func.func @transform_2(%arg0: i32) -> (i32, i32) {
    %c0_i32 = arith.constant 0 : i32
    %c0_i32_0 = arith.constant 0 : i32
    %c0_i32_1 = arith.constant 0 : i32
    return %c0_i32, %c0_i32_0 : i32, i32
  }
  func.func @transform_3(%arg0: i32) -> (i32, i32) {
    %c0_i32 = arith.constant 0 : i32
    %c0_i32_0 = arith.constant 0 : i32
    %c0_i32_1 = arith.constant 0 : i32
    return %c0_i32, %c0_i32_0 : i32, i32
  }
  func.func @transform_4(%arg0: i32) -> (i32, i32) {
    %c0_i32 = arith.constant 0 : i32
    %c0_i32_0 = arith.constant 0 : i32
    %c0_i32_1 = arith.constant 0 : i32
    return %c0_i32, %c0_i32_0 : i32, i32
  }
  func.func @transform_5(%arg0: i32) -> (i32, i32) {
    %c0_i32 = arith.constant 0 : i32
    %c0_i32_0 = arith.constant 0 : i32
    %c0_i32_1 = arith.constant 0 : i32
    return %c0_i32, %c0_i32_0 : i32, i32
  }
  func.func @transform_6(%arg0: i32) -> (i32, i32) {
    %c0_i32 = arith.constant 0 : i32
    %c0_i32_0 = arith.constant 0 : i32
    return %arg0, %c0_i32 : i32, i32
  }
}

</mosaic_0001>

<llo_original>
// kernel: tpu_custom_call.1
$region0: #{tpu_custom_call.1}
  #allocation0 [shape = 'u32[]', space=smem, size = 0x4, offset = 0x4, fixed_abs, tag = 'smem constant byte address 0x4 - core index']
  #allocation1 [shape = 'u32[144,128]{1,0:T(1,128)}', space=vmem, size = 0x12000, scoped, tag = 'internal scratch']
  #allocation2 [shape = 'f32[192,128]{1,0:T(8,128)}', space=vmem, size = 0x18000, scoped, tag = 'scratch operand']
  #allocation3 [shape = 'f32[192,256]{1,0:T(8,128)}', space=vmem, size = 0x30000, scoped, tag = 'scratch operand']
  #allocation4 [shape = 'f32[192,256]{1,0:T(8,128)}', space=vmem, size = 0x30000, scoped, tag = 'scratch operand']
  %s0 = inlined_call_operand.hbm [shape: f32[2], index: 0, kind: input, shape index: {}]
  %s1 = inlined_call_operand.hbm [shape: f32[8,128], index: 1, kind: input, shape index: {}]
  %s2 = inlined_call_operand.hbm [shape: f32[128,256], index: 2, kind: input, shape index: {}]
  %s3 = inlined_call_operand.hbm [shape: f32[256,256], index: 3, kind: input, shape index: {}]
  %s4 = inlined_call_operand.hbm [shape: f32[256,256], index: 4, kind: input, shape index: {}]
  %s5 = inlined_call_operand.hbm [shape: f32[256,128], index: 5, kind: input, shape index: {}]
  %s6 = inlined_call_operand.hbm [shape: f32[8,128], index: 6, kind: output, shape index: {}]
  %s7 = sld [smem:[#allocation0]]
  $region58: #{tpu_custom_call.1} parent=0
    _
  %s9 = ssub.s32 1, %s7
  %s10 = scalar_select 0, %s9, %s7
  $region1: #{tpu_custom_call.1} parent=0
    #allocation5 [shape = 'u8[512]{0}', space=smem, size = 0x200, scoped, tag = 'input window, operand 0, single buffered']
    #allocation6 [shape = 's32[1]{0}', space=sflag, size = 0x4, scoped, tag = 'scoped memory for tpu_custom_call.1']
    #allocation7 [shape = 's32[1]{0}', space=sflag, size = 0x4, scoped, tag = 'scoped memory for tpu_custom_call.1']
    #allocation8 [shape = 's32[1]{0}', space=sflag, size = 0x4, scoped, tag = 'scoped memory for tpu_custom_call.1']
    #allocation9 [shape = 'u8[4096]{0}', space=vmem, size = 0x1000, scoped, tag = 'input window, operand 1, single buffered']
    #allocation10 [shape = 'u8[131072]{0}', space=vmem, size = 0x20000, scoped, tag = 'input window, operand 2, single buffered']
    #allocation11 [shape = 's32[1]{0}', space=sflag, size = 0x4, scoped, tag = 'scoped memory for tpu_custom_call.1']
    #allocation12 [shape = 'u8[262144]{0}', space=vmem, size = 0x40000, scoped, tag = 'input window, operand 3, single buffered']
    #allocation13 [shape = 'u8[262144]{0}', space=vmem, size = 0x40000, scoped, tag = 'input window, operand 4, single buffered']
    #allocation14 [shape = 's32[1]{0}', space=sflag, size = 0x4, scoped, tag = 'scoped memory for tpu_custom_call.1']
    #allocation15 [shape = 'u8[131072]{0}', space=vmem, size = 0x20000, scoped, tag = 'input window, operand 5, single buffered']
    #allocation16 [shape = 'u8[4096]{0}', space=vmem, size = 0x1000, scoped, tag = 'output window, operand 0, single buffered']
    %11 = vsyncpa [#allocation8], 0
    %12 = vsyncpa [#allocation6], 0
    %13 = vsyncpa [#allocation11], 0
    %14 = vsyncpa [#allocation14], 0
    %15 = vsyncpa [#allocation7], 0
    // Predicated region
    $region2: #{tpu_custom_call.1} parent=1 // pred_check
      _
    $region3: #{tpu_custom_call.1} parent=1 // pred_check_branch
      %17 = sbr.rel (0) target = $region5
    $region4: #{tpu_custom_call.1} parent=1 // pred_region
      %s19 = ssub.s32 16, 16
      %20 = vsyncadd [#allocation8], %s19
      %23 = dma.hbm_to_smem %s0, 16, [#allocation5], [#allocation8]
    $region5: #{tpu_custom_call.1} parent=1 // pred_fallthru
      _
    // Predicated region
    $region6: #{tpu_custom_call.1} parent=1 // pred_check
      _
    $region7: #{tpu_custom_call.1} parent=1 // pred_check_branch
      %25 = sbr.rel (0) target = $region9
    $region8: #{tpu_custom_call.1} parent=1 // pred_region
      %s27 = ssub.s32 128, 128
      %28 = vsyncadd [#allocation6], %s27
      %s30 = sshll.u32 [#allocation9], 4
      %s31 = int_to_ptr.vmem [resolvable:$true] %s30
      %33 = dma.hbm_to_vmem [thread:$0]  %s1, 128, %s31, [#allocation6]
    $region9: #{tpu_custom_call.1} parent=1 // pred_fallthru
      _
    // Predicated region
    $region10: #{tpu_custom_call.1} parent=1 // pred_check
      _
    $region11: #{tpu_custom_call.1} parent=1 // pred_check_branch
      %35 = sbr.rel (0) target = $region13
    $region12: #{tpu_custom_call.1} parent=1 // pred_region
      %s37 = ssub.s32 4096, 4096
      %38 = vsyncadd [#allocation11], %s37
      %s39 = sshll.u32 [#allocation10], 4
      %s40 = int_to_ptr.vmem [resolvable:$true] %s39
      %45 = dma.hbm_to_vmem [thread:$0]  %s2, 4096, %s40, [#allocation11], 256, 256, 16
    $region13: #{tpu_custom_call.1} parent=1 // pred_fallthru
      _
    // Predicated region
    $region14: #{tpu_custom_call.1} parent=1 // pred_check
      _
    $region15: #{tpu_custom_call.1} parent=1 // pred_check_branch
      %47 = sbr.rel (0) target = $region17
    $region16: #{tpu_custom_call.1} parent=1 // pred_region
      %s49 = ssub.s32 8192, 8192
      %50 = vsyncadd [#allocation11], %s49
      %s51 = sshll.u32 [#allocation12], 4
      %s52 = int_to_ptr.vmem [resolvable:$true] %s51
      %57 = dma.hbm_to_vmem [thread:$0]  %s3, 8192, %s52, [#allocation11], 256, 256, 16
    $region17: #{tpu_custom_call.1} parent=1 // pred_fallthru
      _
    // Predicated region
    $region18: #{tpu_custom_call.1} parent=1 // pred_check
      _
    $region19: #{tpu_custom_call.1} parent=1 // pred_check_branch
      %59 = sbr.rel (0) target = $region21
    $region20: #{tpu_custom_call.1} parent=1 // pred_region
      %s61 = ssub.s32 8192, 8192
      %62 = vsyncadd [#allocation14], %s61
      %s63 = sshll.u32 [#allocation13], 4
      %s64 = int_to_ptr.vmem [resolvable:$true] %s63
      %69 = dma.hbm_to_vmem [thread:$0]  %s4, 8192, %s64, [#allocation14], 256, 256, 16
    $region21: #{tpu_custom_call.1} parent=1 // pred_fallthru
      _
    // Predicated region
    $region22: #{tpu_custom_call.1} parent=1 // pred_check
      _
    $region23: #{tpu_custom_call.1} parent=1 // pred_check_branch
      %71 = sbr.rel (0) target = $region25
    $region24: #{tpu_custom_call.1} parent=1 // pred_region
      %s73 = ssub.s32 4096, 4096
      %74 = vsyncadd [#allocation14], %s73
      %s75 = sshll.u32 [#allocation15], 4
      %s76 = int_to_ptr.vmem [resolvable:$true] %s75
      %81 = dma.hbm_to_vmem [thread:$0]  %s5, 4096, %s76, [#allocation14], 128, 128, 8
    $region25: #{tpu_custom_call.1} parent=1 // pred_fallthru
      _
    // Predicated region
    $region26: #{tpu_custom_call.1} parent=1 // pred_check
      _
    $region27: #{tpu_custom_call.1} parent=1 // pred_check_branch
      %83 = sbr.rel (0) target = $region29
    $region28: #{tpu_custom_call.1} parent=1 // pred_region
      %84 = dma.done [#allocation8], 16
    $region29: #{tpu_custom_call.1} parent=1 // pred_fallthru
      _
    // Predicated region
    $region30: #{tpu_custom_call.1} parent=1 // pred_check
      _
    $region31: #{tpu_custom_call.1} parent=1 // pred_check_branch
      %86 = sbr.rel (0) target = $region33
    $region32: #{tpu_custom_call.1} parent=1 // pred_region
      %87 = dma.done [#allocation6], 128
    $region33: #{tpu_custom_call.1} parent=1 // pred_fallthru
      _
    // Predicated region
    $region34: #{tpu_custom_call.1} parent=1 // pred_check
      _
    $region35: #{tpu_custom_call.1} parent=1 // pred_check_branch
      %89 = sbr.rel (0) target = $region37
    $region36: #{tpu_custom_call.1} parent=1 // pred_region
      %90 = dma.done [#allocation11], 4096
    $region37: #{tpu_custom_call.1} parent=1 // pred_fallthru
      _
    // Predicated region
    $region38: #{tpu_custom_call.1} parent=1 // pred_check
      _
    $region39: #{tpu_custom_call.1} parent=1 // pred_check_branch
      %92 = sbr.rel (0) target = $region41
    $region40: #{tpu_custom_call.1} parent=1 // pred_region
      %93 = dma.done [#allocation11], 8192
    $region41: #{tpu_custom_call.1} parent=1 // pred_fallthru
      _
    // Predicated region
    $region42: #{tpu_custom_call.1} parent=1 // pred_check
      _
    $region43: #{tpu_custom_call.1} parent=1 // pred_check_branch
      %95 = sbr.rel (0) target = $region45
    $region44: #{tpu_custom_call.1} parent=1 // pred_region
      %96 = dma.done [#allocation14], 8192
    $region45: #{tpu_custom_call.1} parent=1 // pred_fallthru
      _
    // Predicated region
    $region46: #{tpu_custom_call.1} parent=1 // pred_check
      _
    $region47: #{tpu_custom_call.1} parent=1 // pred_check_branch
      %98 = sbr.rel (0) target = $region49
    $region48: #{tpu_custom_call.1} parent=1 // pred_region
      %99 = dma.done [#allocation14], 4096
    $region49: #{tpu_custom_call.1} parent=1 // pred_fallthru
      _
    %100 = sfence
    %s101 = sld [smem:[#allocation5]]
    %s102 = sld [smem:[#allocation5 + $0x1]]
    %v103 = vld [vmem:[#allocation9] sm:$0xff]
    %s104 = smul.f32 %s101, 2.0
    %v105 = vstv %s104
    %v106 = vmul.f32 %v105, %v103
    %s107 = smul.f32 %s102, 6.0
    %v108 = vstv %s107
    %v109 = vadd.f32 %v108, 0.0
    %v110 = vmul.f32 %v106, 0.1
    %v111 = vadd.f32 %v110, 0.0
    %vm112 = vcmp.gt.f32.partialorder %v111, 1.0
    %v113 = vsel %vm112, %v109, 0.0
    %114 = vst [vmem:[#allocation2] sm:$0xff] %v113
    %v115 = vsel %vm112, 0.0, %v111
    %v116 = vsub.f32 %v106, %v115
    %v117 = vmul.f32 %v116, 0.1
    %v118 = vadd.f32 %v115, %v117
    %vm119 = vcmp.gt.f32.partialorder %v118, 1.0
    %v120 = vsel %vm119, %v109, 0.0
    %121 = vst [vmem:[#allocation2 + $0x8] sm:$0xff] %v120
    %v122 = vsel %vm119, 0.0, %v118
    %v123 = vsub.f32 %v106, %v122
    %v124 = vmul.f32 %v123, 0.1
    %v125 = vadd.f32 %v122, %v124
    %vm126 = vcmp.gt.f32.partialorder %v125, 1.0
    %v127 = vsel %vm126, %v109, 0.0
    %128 = vst [vmem:[#allocation2 + $0x10] sm:$0xff] %v127
    %v129 = vsel %vm126, 0.0, %v125
    %v130 = vsub.f32 %v106, %v129
    %v131 = vmul.f32 %v130, 0.1
    %v132 = vadd.f32 %v129, %v131
    %vm133 = vcmp.gt.f32.partialorder %v132, 1.0
    %v134 = vsel %vm133, %v109, 0.0
    %135 = vst [vmem:[#allocation2 + $0x18] sm:$0xff] %v134
    %v136 = vsel %vm133, 0.0, %v132
    %v137 = vsub.f32 %v106, %v136
    %v138 = vmul.f32 %v137, 0.1
    %v139 = vadd.f32 %v136, %v138
    %vm140 = vcmp.gt.f32.partialorder %v139, 1.0
    %v141 = vsel %vm140, %v109, 0.0
    %142 = vst [vmem:[#allocation2 + $0x20] sm:$0xff] %v141
    %v143 = vsel %vm140, 0.0, %v139
    %v144 = vsub.f32 %v106, %v143
    %v145 = vmul.f32 %v144, 0.1
    %v146 = vadd.f32 %v143, %v145
    %vm147 = vcmp.gt.f32.partialorder %v146, 1.0
    %v148 = vsel %vm147, %v109, 0.0
    %149 = vst [vmem:[#allocation2 + $0x28] sm:$0xff] %v148
    %v150 = vsel %vm147, 0.0, %v146
    %v151 = vsub.f32 %v106, %v150
    %v152 = vmul.f32 %v151, 0.1
    %v153 = vadd.f32 %v150, %v152
    %vm154 = vcmp.gt.f32.partialorder %v153, 1.0
    %v155 = vsel %vm154, %v109, 0.0
    %156 = vst [vmem:[#allocation2 + $0x30] sm:$0xff] %v155
    %v157 = vsel %vm154, 0.0, %v153
    %v158 = vsub.f32 %v106, %v157
    %v159 = vmul.f32 %v158, 0.1
    %v160 = vadd.f32 %v157, %v159
    %vm161 = vcmp.gt.f32.partialorder %v160, 1.0
    %v162 = vsel %vm161, %v109, 0.0
    %163 = vst [vmem:[#allocation2 + $0x38] sm:$0xff] %v162
    %v164 = vsel %vm161, 0.0, %v160
    %v165 = vsub.f32 %v106, %v164
    %v166 = vmul.f32 %v165, 0.1
    %v167 = vadd.f32 %v164, %v166
    %vm168 = vcmp.gt.f32.partialorder %v167, 1.0
    %v169 = vsel %vm168, %v109, 0.0
    %170 = vst [vmem:[#allocation2 + $0x40] sm:$0xff] %v169
    %v171 = vsel %vm168, 0.0, %v167
    %v172 = vsub.f32 %v106, %v171
    %v173 = vmul.f32 %v172, 0.1
    %v174 = vadd.f32 %v171, %v173
    %vm175 = vcmp.gt.f32.partialorder %v174, 1.0
    %v176 = vsel %vm175, %v109, 0.0
    %177 = vst [vmem:[#allocation2 + $0x48] sm:$0xff] %v176
    %v178 = vsel %vm175, 0.0, %v174
    %v179 = vsub.f32 %v106, %v178
    %v180 = vmul.f32 %v179, 0.1
    %v181 = vadd.f32 %v178, %v180
    %vm182 = vcmp.gt.f32.partialorder %v181, 1.0
    %v183 = vsel %vm182, %v109, 0.0
    %184 = vst [vmem:[#allocation2 + $0x50] sm:$0xff] %v183
    %v185 = vsel %vm182, 0.0, %v181
    %v186 = vsub.f32 %v106, %v185
    %v187 = vmul.f32 %v186, 0.1
    %v188 = vadd.f32 %v185, %v187
    %vm189 = vcmp.gt.f32.partialorder %v188, 1.0
    %v190 = vsel %vm189, %v109, 0.0
    %191 = vst [vmem:[#allocation2 + $0x58] sm:$0xff] %v190
    %v192 = vsel %vm189, 0.0, %v188
    %v193 = vsub.f32 %v106, %v192
    %v194 = vmul.f32 %v193, 0.1
    %v195 = vadd.f32 %v192, %v194
    %vm196 = vcmp.gt.f32.partialorder %v195, 1.0
    %v197 = vsel %vm196, %v109, 0.0
    %198 = vst [vmem:[#allocation2 + $0x60] sm:$0xff] %v197
    %v199 = vsel %vm196, 0.0, %v195
    %v200 = vsub.f32 %v106, %v199
    %v201 = vmul.f32 %v200, 0.1
    %v202 = vadd.f32 %v199, %v201
    %vm203 = vcmp.gt.f32.partialorder %v202, 1.0
    %v204 = vsel %vm203, %v109, 0.0
    %205 = vst [vmem:[#allocation2 + $0x68] sm:$0xff] %v204
    %v206 = vsel %vm203, 0.0, %v202
    %v207 = vsub.f32 %v106, %v206
    %v208 = vmul.f32 %v207, 0.1
    %v209 = vadd.f32 %v206, %v208
    %vm210 = vcmp.gt.f32.partialorder %v209, 1.0
    %v211 = vsel %vm210, %v109, 0.0
    %212 = vst [vmem:[#allocation2 + $0x70] sm:$0xff] %v211
    %v213 = vsel %vm210, 0.0, %v209
    %v214 = vsub.f32 %v106, %v213
    %v215 = vmul.f32 %v214, 0.1
    %v216 = vadd.f32 %v213, %v215
    %vm217 = vcmp.gt.f32.partialorder %v216, 1.0
    %v218 = vsel %vm217, %v109, 0.0
    %219 = vst [vmem:[#allocation2 + $0x78] sm:$0xff] %v218
    %v220 = vsel %vm217, 0.0, %v216
    %v221 = vsub.f32 %v106, %v220
    %v222 = vmul.f32 %v221, 0.1
    %v223 = vadd.f32 %v220, %v222
    %vm224 = vcmp.gt.f32.partialorder %v223, 1.0
    %v225 = vsel %vm224, %v109, 0.0
    %226 = vst [vmem:[#allocation2 + $0x80] sm:$0xff] %v225
    %v227 = vsel %vm224, 0.0, %v223
    %v228 = vsub.f32 %v106, %v227
    %v229 = vmul.f32 %v228, 0.1
    %v230 = vadd.f32 %v227, %v229
    %vm231 = vcmp.gt.f32.partialorder %v230, 1.0
    %v232 = vsel %vm231, %v109, 0.0
    %233 = vst [vmem:[#allocation2 + $0x88] sm:$0xff] %v232
    %v234 = vsel %vm231, 0.0, %v230
    %v235 = vsub.f32 %v106, %v234
    %v236 = vmul.f32 %v235, 0.1
    %v237 = vadd.f32 %v234, %v236
    %vm238 = vcmp.gt.f32.partialorder %v237, 1.0
    %v239 = vsel %vm238, %v109, 0.0
    %240 = vst [vmem:[#allocation2 + $0x90] sm:$0xff] %v239
    %v241 = vsel %vm238, 0.0, %v237
    %v242 = vsub.f32 %v106, %v241
    %v243 = vmul.f32 %v242, 0.1
    %v244 = vadd.f32 %v241, %v243
    %vm245 = vcmp.gt.f32.partialorder %v244, 1.0
    %v246 = vsel %vm245, %v109, 0.0
    %247 = vst [vmem:[#allocation2 + $0x98] sm:$0xff] %v246
    %v248 = vsel %vm245, 0.0, %v244
    %v249 = vsub.f32 %v106, %v248
    %v250 = vmul.f32 %v249, 0.1
    %v251 = vadd.f32 %v248, %v250
    %vm252 = vcmp.gt.f32.partialorder %v251, 1.0
    %v253 = vsel %vm252, %v109, 0.0
    %254 = vst [vmem:[#allocation2 + $0xa0] sm:$0xff] %v253
    %v255 = vsel %vm252, 0.0, %v251
    %v256 = vsub.f32 %v106, %v255
    %v257 = vmul.f32 %v256, 0.1
    %v258 = vadd.f32 %v255, %v257
    %vm259 = vcmp.gt.f32.partialorder %v258, 1.0
    %v260 = vsel %vm259, %v109, 0.0
    %261 = vst [vmem:[#allocation2 + $0xa8] sm:$0xff] %v260
    %v262 = vsel %vm259, 0.0, %v258
    %v263 = vsub.f32 %v106, %v262
    %v264 = vmul.f32 %v263, 0.1
    %v265 = vadd.f32 %v262, %v264
    %vm266 = vcmp.gt.f32.partialorder %v265, 1.0
    %v267 = vsel %vm266, %v109, 0.0
    %268 = vst [vmem:[#allocation2 + $0xb0] sm:$0xff] %v267
    %v269 = vsel %vm266, 0.0, %v265
    %v270 = vsub.f32 %v106, %v269
    %v271 = vmul.f32 %v270, 0.1
    %v272 = vadd.f32 %v269, %v271
    %vm273 = vcmp.gt.f32.partialorder %v272, 1.0
    %v274 = vsel %vm273, %v109, 0.0
    %275 = vst [vmem:[#allocation2 + $0xb8] sm:$0xff] %v274
    %v276 = vld [vmem:[#allocation2] sm:$0xff]
    %v277 = vld [vmem:[#allocation2 + $0x8] sm:$0xff]
    %v278 = vld [vmem:[#allocation2 + $0x10] sm:$0xff]
    %v279 = vld [vmem:[#allocation2 + $0x18] sm:$0xff]
    %v280 = vld [vmem:[#allocation2 + $0x20] sm:$0xff]
    %v281 = vld [vmem:[#allocation2 + $0x28] sm:$0xff]
    %v282 = vld [vmem:[#allocation2 + $0x30] sm:$0xff]
    %v283 = vld [vmem:[#allocation2 + $0x38] sm:$0xff]
    %v284 = vld [vmem:[#allocation2 + $0x40] sm:$0xff]
    %v285 = vld [vmem:[#allocation2 + $0x48] sm:$0xff]
    %v286 = vld [vmem:[#allocation2 + $0x50] sm:$0xff]
    %v287 = vld [vmem:[#allocation2 + $0x58] sm:$0xff]
    %v288 = vld [vmem:[#allocation2 + $0x60] sm:$0xff]
    %v289 = vld [vmem:[#allocation2 + $0x68] sm:$0xff]
    %v290 = vld [vmem:[#allocation2 + $0x70] sm:$0xff]
    %v291 = vld [vmem:[#allocation2 + $0x78] sm:$0xff]
    %v292 = vld [vmem:[#allocation2 + $0x80] sm:$0xff]
    %v293 = vld [vmem:[#allocation2 + $0x88] sm:$0xff]
    %v294 = vld [vmem:[#allocation2 + $0x90] sm:$0xff]
    %v295 = vld [vmem:[#allocation2 + $0x98] sm:$0xff]
    %v296 = vld [vmem:[#allocation2 + $0xa0] sm:$0xff]
    %v297 = vld [vmem:[#allocation2 + $0xa8] sm:$0xff]
    %v298 = vld [vmem:[#allocation2 + $0xb0] sm:$0xff]
    %v299 = vld [vmem:[#allocation2 + $0xb8] sm:$0xff]
    %v300 = vld [vmem:[#allocation10] sm:$0xff]
    %v301 = vld [vmem:[#allocation10 + $0x8] sm:$0xff]
    %v302 = vld [vmem:[#allocation10 + $0x10] sm:$0xff]
    %v303 = vld [vmem:[#allocation10 + $0x18] sm:$0xff]
    %v304 = vld [vmem:[#allocation10 + $0x20] sm:$0xff]
    %v305 = vld [vmem:[#allocation10 + $0x28] sm:$0xff]
    %v306 = vld [vmem:[#allocation10 + $0x30] sm:$0xff]
    %v307 = vld [vmem:[#allocation10 + $0x38] sm:$0xff]
    %v308 = vld [vmem:[#allocation10 + $0x40] sm:$0xff]
    %v309 = vld [vmem:[#allocation10 + $0x48] sm:$0xff]
    %v310 = vld [vmem:[#allocation10 + $0x50] sm:$0xff]
    %v311 = vld [vmem:[#allocation10 + $0x58] sm:$0xff]
    %v312 = vld [vmem:[#allocation10 + $0x60] sm:$0xff]
    %v313 = vld [vmem:[#allocation10 + $0x68] sm:$0xff]
    %v314 = vld [vmem:[#allocation10 + $0x70] sm:$0xff]
    %v315 = vld [vmem:[#allocation10 + $0x78] sm:$0xff]
    %v316 = vld [vmem:[#allocation10 + $0x80] sm:$0xff]
    %v317 = vld [vmem:[#allocation10 + $0x88] sm:$0xff]
    %v318 = vld [vmem:[#allocation10 + $0x90] sm:$0xff]
    %v319 = vld [vmem:[#allocation10 + $0x98] sm:$0xff]
    %v320 = vld [vmem:[#allocation10 + $0xa0] sm:$0xff]
    %v321 = vld [vmem:[#allocation10 + $0xa8] sm:$0xff]
    %v322 = vld [vmem:[#allocation10 + $0xb0] sm:$0xff]
    %v323 = vld [vmem:[#allocation10 + $0xb8] sm:$0xff]
    %v324 = vld [vmem:[#allocation10 + $0xc0] sm:$0xff]
    %v325 = vld [vmem:[#allocation10 + $0xc8] sm:$0xff]
    %v326 = vld [vmem:[#allocation10 + $0xd0] sm:$0xff]
    %v327 = vld [vmem:[#allocation10 + $0xd8] sm:$0xff]
    %v328 = vld [vmem:[#allocation10 + $0xe0] sm:$0xff]
    %v329 = vld [vmem:[#allocation10 + $0xe8] sm:$0xff]
    %v330 = vld [vmem:[#allocation10 + $0xf0] sm:$0xff]
    %v331 = vld [vmem:[#allocation10 + $0xf8] sm:$0xff]
    %332 = vmatprep.subr.mxu0 %v301
    %333 = vmatpush1.msra.mxu0 %v300
    %334 = vmatprep.subr.mxu0 %v303
    %335 = vmatpush1.msra.mxu0 %v302
    %336 = vmatprep.subr.mxu0 %v305
    %337 = vmatpush1.msra.mxu0 %v304
    %338 = vmatprep.subr.mxu0 %v307
    %339 = vmatpush1.msra.mxu0 %v306
    %340 = vmatprep.subr.mxu0 %v309
    %341 = vmatpush1.msra.mxu0 %v308
    %342 = vmatprep.subr.mxu0 %v311
    %343 = vmatpush1.msra.mxu0 %v310
    %344 = vmatprep.subr.mxu0 %v313
    %345 = vmatpush1.msra.mxu0 %v312
    %346 = vmatprep.subr.mxu0 %v315
    %347 = vmatpush1.msra.mxu0 %v314
    %348 = vmatprep.subr.mxu0 %v317
    %349 = vmatpush1.msra.mxu0 %v316
    %350 = vmatprep.subr.mxu0 %v319
    %351 = vmatpush1.msra.mxu0 %v318
    %352 = vmatprep.subr.mxu0 %v321
    %353 = vmatpush1.msra.mxu0 %v320
    %354 = vmatprep.subr.mxu0 %v323
    %355 = vmatpush1.msra.mxu0 %v322
    %356 = vmatprep.subr.mxu0 %v325
    %357 = vmatpush1.msra.mxu0 %v324
    %358 = vmatprep.subr.mxu0 %v327
    %359 = vmatpush1.msra.mxu0 %v326
    %360 = vmatprep.subr.mxu0 %v329
    %361 = vmatpush1.msra.mxu0 %v328
    %362 = vmatprep.subr.mxu0 %v331
    %363 = vmatpush1.msra.mxu0 %v330
    %364 = vmatprep.subr.mxu0 0.0
    %365 = vmatpush1.msra.mxu0 0.0
    %366 = vmatprep.subr.mxu0 0.0
    %367 = vmatpush1.msra.mxu0 0.0
    %368 = vmatprep.subr.mxu0 0.0
    %369 = vmatpush1.msra.mxu0 0.0
    %370 = vmatprep.subr.mxu0 0.0
    %371 = vmatpush1.msra.mxu0 0.0
    %372 = vmatprep.subr.mxu0 0.0
    %373 = vmatpush1.msra.mxu0 0.0
    %374 = vmatprep.subr.mxu0 0.0
    %375 = vmatpush1.msra.mxu0 0.0
    %376 = vmatprep.subr.mxu0 0.0
    %377 = vmatpush1.msra.mxu0 0.0
    %378 = vmatprep.subr.mxu0 0.0
    %379 = vmatpush1.msra.mxu0 0.0
    %380 = vmatprep.subr.mxu0 0.0
    %381 = vmatpush1.msra.mxu0 0.0
    %382 = vmatprep.subr.mxu0 0.0
    %383 = vmatpush1.msra.mxu0 0.0
    %384 = vmatprep.subr.mxu0 0.0
    %385 = vmatpush1.msra.mxu0 0.0
    %386 = vmatprep.subr.mxu0 0.0
    %387 = vmatpush1.msra.mxu0 0.0
    %388 = vmatprep.subr.mxu0 0.0
    %389 = vmatpush1.msra.mxu0 0.0
    %390 = vmatprep.subr.mxu0 0.0
    %391 = vmatpush1.msra.mxu0 0.0
    %392 = vmatprep.subr.mxu0 0.0
    %393 = vmatpush1.msra.mxu0 0.0
    %394 = vmatprep.subr.mxu0 0.0
    %395 = vmatpush1.msra.mxu0 0.0
    %396 = vmatprep.mubr.f32.mxu0 0.0
    %397 = vmatmul.mubr.f32.gmra.mrb[0].mxu0 %v276
    %v398 = vpop.f32.mrb[0].mxu0
    %v399 = vadd.f32 0.0, %v398
    %v400 = vpop.f32.mrb[0].mxu0
    %v401 = vadd.f32 0.0, %v400
    %402 = vmatprep.mubr.f32.mxu0 0.0
    %403 = vmatmul.mubr.f32.gmra.mrb[0].mxu0 %v277
    %v404 = vpop.f32.mrb[0].mxu0
    %v405 = vadd.f32 0.0, %v404
    %v406 = vpop.f32.mrb[0].mxu0
    %v407 = vadd.f32 0.0, %v406
    %408 = vmatprep.mubr.f32.mxu0 0.0
    %409 = vmatmul.mubr.f32.gmra.mrb[0].mxu0 %v278
    %v410 = vpop.f32.mrb[0].mxu0
    %v411 = vadd.f32 0.0, %v410
    %v412 = vpop.f32.mrb[0].mxu0
    %v413 = vadd.f32 0.0, %v412
    %414 = vmatprep.mubr.f32.mxu0 0.0
    %415 = vmatmul.mubr.f32.gmra.mrb[0].mxu0 %v279
    %v416 = vpop.f32.mrb[0].mxu0
    %v417 = vadd.f32 0.0, %v416
    %v418 = vpop.f32.mrb[0].mxu0
    %v419 = vadd.f32 0.0, %v418
    %420 = vmatprep.mubr.f32.mxu0 0.0
    %421 = vmatmul.mubr.f32.gmra.mrb[0].mxu0 %v280
    %v422 = vpop.f32.mrb[0].mxu0
    %v423 = vadd.f32 0.0, %v422
    %v424 = vpop.f32.mrb[0].mxu0
    %v425 = vadd.f32 0.0, %v424
    %426 = vmatprep.mubr.f32.mxu0 0.0
    %427 = vmatmul.mubr.f32.gmra.mrb[0].mxu0 %v281
    %v428 = vpop.f32.mrb[0].mxu0
    %v429 = vadd.f32 0.0, %v428
    %v430 = vpop.f32.mrb[0].mxu0
    %v431 = vadd.f32 0.0, %v430
    %432 = vmatprep.mubr.f32.mxu0 0.0
    %433 = vmatmul.mubr.f32.gmra.mrb[0].mxu0 %v282
    %v434 = vpop.f32.mrb[0].mxu0
    %v435 = vadd.f32 0.0, %v434
    %v436 = vpop.f32.mrb[0].mxu0
    %v437 = vadd.f32 0.0, %v436
    %438 = vmatprep.mubr.f32.mxu0 0.0
    %439 = vmatmul.mubr.f32.gmra.mrb[0].mxu0 %v283
    %v440 = vpop.f32.mrb[0].mxu0
    %v441 = vadd.f32 0.0, %v440
    %v442 = vpop.f32.mrb[0].mxu0
    %v443 = vadd.f32 0.0, %v442
    %444 = vmatprep.mubr.f32.mxu0 0.0
    %445 = vmatmul.mubr.f32.gmra.mrb[0].mxu0 %v284
    %v446 = vpop.f32.mrb[0].mxu0
    %v447 = vadd.f32 0.0, %v446
    %v448 = vpop.f32.mrb[0].mxu0
    %v449 = vadd.f32 0.0, %v448
    %450 = vmatprep.mubr.f32.mxu0 0.0
    %451 = vmatmul.mubr.f32.gmra.mrb[0].mxu0 %v285
    %v452 = vpop.f32.mrb[0].mxu0
    %v453 = vadd.f32 0.0, %v452
    %v454 = vpop.f32.mrb[0].mxu0
    %v455 = vadd.f32 0.0, %v454
    %456 = vmatprep.mubr.f32.mxu0 0.0
    %457 = vmatmul.mubr.f32.gmra.mrb[0].mxu0 %v286
    %v458 = vpop.f32.mrb[0].mxu0
    %v459 = vadd.f32 0.0, %v458
    %v460 = vpop.f32.mrb[0].mxu0
    %v461 = vadd.f32 0.0, %v460
    %462 = vmatprep.mubr.f32.mxu0 0.0
    %463 = vmatmul.mubr.f32.gmra.mrb[0].mxu0 %v287
    %v464 = vpop.f32.mrb[0].mxu0
    %v465 = vadd.f32 0.0, %v464
    %v466 = vpop.f32.mrb[0].mxu0
    %v467 = vadd.f32 0.0, %v466
    %468 = vmatprep.mubr.f32.mxu0 0.0
    %469 = vmatmul.mubr.f32.gmra.mrb[0].mxu0 %v288
    %v470 = vpop.f32.mrb[0].mxu0
    %v471 = vadd.f32 0.0, %v470
    %v472 = vpop.f32.mrb[0].mxu0
    %v473 = vadd.f32 0.0, %v472
    %474 = vmatprep.mubr.f32.mxu0 0.0
    %475 = vmatmul.mubr.f32.gmra.mrb[0].mxu0 %v289
    %v476 = vpop.f32.mrb[0].mxu0
    %v477 = vadd.f32 0.0, %v476
    %v478 = vpop.f32.mrb[0].mxu0
    %v479 = vadd.f32 0.0, %v478
    %480 = vmatprep.mubr.f32.mxu0 0.0
    %481 = vmatmul.mubr.f32.gmra.mrb[0].mxu0 %v290
    %v482 = vpop.f32.mrb[0].mxu0
    %v483 = vadd.f32 0.0, %v482
    %v484 = vpop.f32.mrb[0].mxu0
    %v485 = vadd.f32 0.0, %v484
    %486 = vmatprep.mubr.f32.mxu0 0.0
    %487 = vmatmul.mubr.f32.gmra.mrb[0].mxu0 %v291
    %v488 = vpop.f32.mrb[0].mxu0
    %v489 = vadd.f32 0.0, %v488
    %v490 = vpop.f32.mrb[0].mxu0
    %v491 = vadd.f32 0.0, %v490
    %492 = vmatprep.mubr.f32.mxu0 0.0
    %493 = vmatmul.mubr.f32.gmra.mrb[0].mxu0 %v292
    %v494 = vpop.f32.mrb[0].mxu0
    %v495 = vadd.f32 0.0, %v494
    %v496 = vpop.f32.mrb[0].mxu0
    %v497 = vadd.f32 0.0, %v496
    %498 = vmatprep.mubr.f32.mxu0 0.0
    %499 = vmatmul.mubr.f32.gmra.mrb[0].mxu0 %v293
    %v500 = vpop.f32.mrb[0].mxu0
    %v501 = vadd.f32 0.0, %v500
    %v502 = vpop.f32.mrb[0].mxu0
    %v503 = vadd.f32 0.0, %v502
    %504 = vmatprep.mubr.f32.mxu0 0.0
    %505 = vmatmul.mubr.f32.gmra.mrb[0].mxu0 %v294
    %v506 = vpop.f32.mrb[0].mxu0
    %v507 = vadd.f32 0.0, %v506
    %v508 = vpop.f32.mrb[0].mxu0
    %v509 = vadd.f32 0.0, %v508
    %510 = vmatprep.mubr.f32.mxu0 0.0
    %511 = vmatmul.mubr.f32.gmra.mrb[0].mxu0 %v295
    %v512 = vpop.f32.mrb[0].mxu0
    %v513 = vadd.f32 0.0, %v512
    %v514 = vpop.f32.mrb[0].mxu0
    %v515 = vadd.f32 0.0, %v514
    %516 = vmatprep.mubr.f32.mxu0 0.0
    %517 = vmatmul.mubr.f32.gmra.mrb[0].mxu0 %v296
    %v518 = vpop.f32.mrb[0].mxu0
    %v519 = vadd.f32 0.0, %v518
    %v520 = vpop.f32.mrb[0].mxu0
    %v521 = vadd.f32 0.0, %v520
    %522 = vmatprep.mubr.f32.mxu0 0.0
    %523 = vmatmul.mubr.f32.gmra.mrb[0].mxu0 %v297
    %v524 = vpop.f32.mrb[0].mxu0
    %v525 = vadd.f32 0.0, %v524
    %v526 = vpop.f32.mrb[0].mxu0
    %v527 = vadd.f32 0.0, %v526
    %528 = vmatprep.mubr.f32.mxu0 0.0
    %529 = vmatmul.mubr.f32.gmra.mrb[0].mxu0 %v298
    %v530 = vpop.f32.mrb[0].mxu0
    %v531 = vadd.f32 0.0, %v530
    %v532 = vpop.f32.mrb[0].mxu0
    %v533 = vadd.f32 0.0, %v532
    %534 = vmatprep.mubr.f32.mxu0 0.0
    %535 = vmatmul.mubr.f32.gmra.mrb[0].mxu0 %v299
    %v536 = vpop.f32.mrb[0].mxu0
    %v537 = vadd.f32 0.0, %v536
    %v538 = vpop.f32.mrb[0].mxu0
    %v539 = vadd.f32 0.0, %v538
    %540 = vdwg.mxu0
    %541 = vst [vmem:[#allocation3] sm:$0xff] %v399
    %542 = vst [vmem:[#allocation3 + $0x8] sm:$0xff] %v401
    %543 = vst [vmem:[#allocation3 + $0x10] sm:$0xff] %v405
    %544 = vst [vmem:[#allocation3 + $0x18] sm:$0xff] %v407
    %545 = vst [vmem:[#allocation3 + $0x20] sm:$0xff] %v411
    %546 = vst [vmem:[#allocation3 + $0x28] sm:$0xff] %v413
    %547 = vst [vmem:[#allocation3 + $0x30] sm:$0xff] %v417
    %548 = vst [vmem:[#allocation3 + $0x38] sm:$0xff] %v419
    %549 = vst [vmem:[#allocation3 + $0x40] sm:$0xff] %v423
    %550 = vst [vmem:[#allocation3 + $0x48] sm:$0xff] %v425
    %551 = vst [vmem:[#allocation3 + $0x50] sm:$0xff] %v429
    %552 = vst [vmem:[#allocation3 + $0x58] sm:$0xff] %v431
    %553 = vst [vmem:[#allocation3 + $0x60] sm:$0xff] %v435
    %554 = vst [vmem:[#allocation3 + $0x68] sm:$0xff] %v437
    %555 = vst [vmem:[#allocation3 + $0x70] sm:$0xff] %v441
    %556 = vst [vmem:[#allocation3 + $0x78] sm:$0xff] %v443
    %557 = vst [vmem:[#allocation3 + $0x80] sm:$0xff] %v447
    %558 = vst [vmem:[#allocation3 + $0x88] sm:$0xff] %v449
    %559 = vst [vmem:[#allocation3 + $0x90] sm:$0xff] %v453
    %560 = vst [vmem:[#allocation3 + $0x98] sm:$0xff] %v455
    %561 = vst [vmem:[#allocation3 + $0xa0] sm:$0xff] %v459
    %562 = vst [vmem:[#allocation3 + $0xa8] sm:$0xff] %v461
    %563 = vst [vmem:[#allocation3 + $0xb0] sm:$0xff] %v465
    %564 = vst [vmem:[#allocation3 + $0xb8] sm:$0xff] %v467
    %565 = vst [vmem:[#allocation3 + $0xc0] sm:$0xff] %v471
    %566 = vst [vmem:[#allocation3 + $0xc8] sm:$0xff] %v473
    %567 = vst [vmem:[#allocation3 + $0xd0] sm:$0xff] %v477
    %568 = vst [vmem:[#allocation3 + $0xd8] sm:$0xff] %v479
    %569 = vst [vmem:[#allocation3 + $0xe0] sm:$0xff] %v483
    %570 = vst [vmem:[#allocation3 + $0xe8] sm:$0xff] %v485
    %571 = vst [vmem:[#allocation3 + $0xf0] sm:$0xff] %v489
    %572 = vst [vmem:[#allocation3 + $0xf8] sm:$0xff] %v491
    %573 = vst [vmem:[#allocation3 + $0x100] sm:$0xff] %v495
    %574 = vst [vmem:[#allocation3 + $0x108] sm:$0xff] %v497
    %575 = vst [vmem:[#allocation3 + $0x110] sm:$0xff] %v501
    %576 = vst [vmem:[#allocation3 + $0x118] sm:$0xff] %v503
    %577 = vst [vmem:[#allocation3 + $0x120] sm:$0xff] %v507
    %578 = vst [vmem:[#allocation3 + $0x128] sm:$0xff] %v509
    %579 = vst [vmem:[#allocation3 + $0x130] sm:$0xff] %v513
    %580 = vst [vmem:[#allocation3 + $0x138] sm:$0xff] %v515
    %581 = vst [vmem:[#allocation3 + $0x140] sm:$0xff] %v519
    %582 = vst [vmem:[#allocation3 + $0x148] sm:$0xff] %v521
    %583 = vst [vmem:[#allocation3 + $0x150] sm:$0xff] %v525
    %584 = vst [vmem:[#allocation3 + $0x158] sm:$0xff] %v527
    %585 = vst [vmem:[#allocation3 + $0x160] sm:$0xff] %v531
    %586 = vst [vmem:[#allocation3 + $0x168] sm:$0xff] %v533
    %587 = vst [vmem:[#allocation3 + $0x170] sm:$0xff] %v537
    %588 = vst [vmem:[#allocation3 + $0x178] sm:$0xff] %v539
    %vm589 = vcmp.gt.f32.partialorder 0.0, 0.33
    %v590 = vsel %vm589, 1.0, 0.0
    %591 = vst [vmem:[#allocation4] sm:$0xff] %v590
    %592 = vst [vmem:[#allocation4 + $0x8] sm:$0xff] %v590
    %v593 = vld [vmem:[#allocation3] sm:$0xff]
    %v594 = vld [vmem:[#allocation3 + $0x8] sm:$0xff]
    %v595 = vadd.f32 %v593, 0.0
    %v596 = vadd.f32 %v594, 0.0
    %v597 = vmul.f32 %v595, 0.1
    %v598 = vmul.f32 %v596, 0.1
    %v599 = vadd.f32 %v597, 0.0
    %v600 = vadd.f32 %v598, 0.0
    %vm601 = vcmp.gt.f32.partialorder %v599, 0.33
    %vm602 = vcmp.gt.f32.partialorder %v600, 0.33
    %v603 = vsel %vm601, 1.0, 0.0
    %v604 = vsel %vm602, 1.0, 0.0
    %605 = vst [vmem:[#allocation4 + $0x10] sm:$0xff] %v603
    %606 = vst [vmem:[#allocation4 + $0x18] sm:$0xff] %v604
    %v607 = vsel %vm601, 0.0, %v599
    %v608 = vsel %vm602, 0.0, %v600
    %v609 = vmul.f32 %v595, 0.8
    %v610 = vmul.f32 %v596, 0.8
    %v611 = vld [vmem:[#allocation3 + $0x10] sm:$0xff]
    %v612 = vld [vmem:[#allocation3 + $0x18] sm:$0xff]
    %v613 = vadd.f32 %v609, %v611
    %v614 = vadd.f32 %v610, %v612
    %v615 = vsub.f32 %v613, %v607
    %v616 = vsub.f32 %v614, %v608
    %v617 = vmul.f32 %v615, 0.1
    %v618 = vmul.f32 %v616, 0.1
    %v619 = vadd.f32 %v607, %v617
    %v620 = vadd.f32 %v608, %v618
    %vm621 = vcmp.gt.f32.partialorder %v619, 0.33
    %vm622 = vcmp.gt.f32.partialorder %v620, 0.33
    %v623 = vsel %vm621, 1.0, 0.0
    %v624 = vsel %vm622, 1.0, 0.0
    %625 = vst [vmem:[#allocation4 + $0x20] sm:$0xff] %v623
    %626 = vst [vmem:[#allocation4 + $0x28] sm:$0xff] %v624
    %v627 = vsel %vm621, 0.0, %v619
    %v628 = vsel %vm622, 0.0, %v620
    %v629 = vmul.f32 %v613, 0.8
    %v630 = vmul.f32 %v614, 0.8
    %v631 = vld [vmem:[#allocation3 + $0x20] sm:$0xff]
    %v632 = vld [vmem:[#allocation3 + $0x28] sm:$0xff]
    %v633 = vadd.f32 %v629, %v631
    %v634 = vadd.f32 %v630, %v632
    %v635 = vsub.f32 %v633, %v627
    %v636 = vsub.f32 %v634, %v628
    %v637 = vmul.f32 %v635, 0.1
    %v638 = vmul.f32 %v636, 0.1
    %v639 = vadd.f32 %v627, %v637
    %v640 = vadd.f32 %v628, %v638
    %vm641 = vcmp.gt.f32.partialorder %v639, 0.33
    %vm642 = vcmp.gt.f32.partialorder %v640, 0.33
    %v643 = vsel %vm641, 1.0, 0.0
    %v644 = vsel %vm642, 1.0, 0.0
    %645 = vst [vmem:[#allocation4 + $0x30] sm:$0xff] %v643
    %646 = vst [vmem:[#allocation4 + $0x38] sm:$0xff] %v644
    %v647 = vsel %vm641, 0.0, %v639
    %v648 = vsel %vm642, 0.0, %v640
    %v649 = vmul.f32 %v633, 0.8
    %v650 = vmul.f32 %v634, 0.8
    %v651 = vld [vmem:[#allocation3 + $0x30] sm:$0xff]
    %v652 = vld [vmem:[#allocation3 + $0x38] sm:$0xff]
    %v653 = vadd.f32 %v649, %v651
    %v654 = vadd.f32 %v650, %v652
    %v655 = vsub.f32 %v653, %v647
    %v656 = vsub.f32 %v654, %v648
    %v657 = vmul.f32 %v655, 0.1
    %v658 = vmul.f32 %v656, 0.1
    %v659 = vadd.f32 %v647, %v657
    %v660 = vadd.f32 %v648, %v658
    %vm661 = vcmp.gt.f32.partialorder %v659, 0.33
    %vm662 = vcmp.gt.f32.partialorder %v660, 0.33
    %v663 = vsel %vm661, 1.0, 0.0
    %v664 = vsel %vm662, 1.0, 0.0
    %665 = vst [vmem:[#allocation4 + $0x40] sm:$0xff] %v663
    %666 = vst [vmem:[#allocation4 + $0x48] sm:$0xff] %v664
    %v667 = vsel %vm661, 0.0, %v659
    %v668 = vsel %vm662, 0.0, %v660
    %v669 = vmul.f32 %v653, 0.8
    %v670 = vmul.f32 %v654, 0.8
    %v671 = vld [vmem:[#allocation3 + $0x40] sm:$0xff]
    %v672 = vld [vmem:[#allocation3 + $0x48] sm:$0xff]
    %v673 = vadd.f32 %v669, %v671
    %v674 = vadd.f32 %v670, %v672
    %v675 = vsub.f32 %v673, %v667
    %v676 = vsub.f32 %v674, %v668
    %v677 = vmul.f32 %v675, 0.1
    %v678 = vmul.f32 %v676, 0.1
    %v679 = vadd.f32 %v667, %v677
    %v680 = vadd.f32 %v668, %v678
    %vm681 = vcmp.gt.f32.partialorder %v679, 0.33
    %vm682 = vcmp.gt.f32.partialorder %v680, 0.33
    %v683 = vsel %vm681, 1.0, 0.0
    %v684 = vsel %vm682, 1.0, 0.0
    %685 = vst [vmem:[#allocation4 + $0x50] sm:$0xff] %v683
    %686 = vst [vmem:[#allocation4 + $0x58] sm:$0xff] %v684
    %v687 = vsel %vm681, 0.0, %v679
    %v688 = vsel %vm682, 0.0, %v680
    %v689 = vmul.f32 %v673, 0.8
    %v690 = vmul.f32 %v674, 0.8
    %v691 = vld [vmem:[#allocation3 + $0x50] sm:$0xff]
    %v692 = vld [vmem:[#allocation3 + $0x58] sm:$0xff]
    %v693 = vadd.f32 %v689, %v691
    %v694 = vadd.f32 %v690, %v692
    %v695 = vsub.f32 %v693, %v687
    %v696 = vsub.f32 %v694, %v688
    %v697 = vmul.f32 %v695, 0.1
    %v698 = vmul.f32 %v696, 0.1
    %v699 = vadd.f32 %v687, %v697
    %v700 = vadd.f32 %v688, %v698
    %vm701 = vcmp.gt.f32.partialorder %v699, 0.33
    %vm702 = vcmp.gt.f32.partialorder %v700, 0.33
    %v703 = vsel %vm701, 1.0, 0.0
    %v704 = vsel %vm702, 1.0, 0.0
    %705 = vst [vmem:[#allocation4 + $0x60] sm:$0xff] %v703
    %706 = vst [vmem:[#allocation4 + $0x68] sm:$0xff] %v704
    %v707 = vsel %vm701, 0.0, %v699
    %v708 = vsel %vm702, 0.0, %v700
    %v709 = vmul.f32 %v693, 0.8
    %v710 = vmul.f32 %v694, 0.8
    %v711 = vld [vmem:[#allocation3 + $0x60] sm:$0xff]
    %v712 = vld [vmem:[#allocation3 + $0x68] sm:$0xff]
    %v713 = vadd.f32 %v709, %v711
    %v714 = vadd.f32 %v710, %v712
    %v715 = vsub.f32 %v713, %v707
    %v716 = vsub.f32 %v714, %v708
    %v717 = vmul.f32 %v715, 0.1
    %v718 = vmul.f32 %v716, 0.1
    %v719 = vadd.f32 %v707, %v717
    %v720 = vadd.f32 %v708, %v718
    %vm721 = vcmp.gt.f32.partialorder %v719, 0.33
    %vm722 = vcmp.gt.f32.partialorder %v720, 0.33
    %v723 = vsel %vm721, 1.0, 0.0
    %v724 = vsel %vm722, 1.0, 0.0
    %725 = vst [vmem:[#allocation4 + $0x70] sm:$0xff] %v723
    %726 = vst [vmem:[#allocation4 + $0x78] sm:$0xff] %v724
    %v727 = vsel %vm721, 0.0, %v719
    %v728 = vsel %vm722, 0.0, %v720
    %v729 = vmul.f32 %v713, 0.8
    %v730 = vmul.f32 %v714, 0.8
    %v731 = vld [vmem:[#allocation3 + $0x70] sm:$0xff]
    %v732 = vld [vmem:[#allocation3 + $0x78] sm:$0xff]
    %v733 = vadd.f32 %v729, %v731
    %v734 = vadd.f32 %v730, %v732
    %v735 = vsub.f32 %v733, %v727
    %v736 = vsub.f32 %v734, %v728
    %v737 = vmul.f32 %v735, 0.1
    %v738 = vmul.f32 %v736, 0.1
    %v739 = vadd.f32 %v727, %v737
    %v740 = vadd.f32 %v728, %v738
    %vm741 = vcmp.gt.f32.partialorder %v739, 0.33
    %vm742 = vcmp.gt.f32.partialorder %v740, 0.33
    %v743 = vsel %vm741, 1.0, 0.0
    %v744 = vsel %vm742, 1.0, 0.0
    %745 = vst [vmem:[#allocation4 + $0x80] sm:$0xff] %v743
    %746 = vst [vmem:[#allocation4 + $0x88] sm:$0xff] %v744
    %v747 = vsel %vm741, 0.0, %v739
    %v748 = vsel %vm742, 0.0, %v740
    %v749 = vmul.f32 %v733, 0.8
    %v750 = vmul.f32 %v734, 0.8
    %v751 = vld [vmem:[#allocation3 + $0x80] sm:$0xff]
    %v752 = vld [vmem:[#allocation3 + $0x88] sm:$0xff]
    %v753 = vadd.f32 %v749, %v751
    %v754 = vadd.f32 %v750, %v752
    %v755 = vsub.f32 %v753, %v747
    %v756 = vsub.f32 %v754, %v748
    %v757 = vmul.f32 %v755, 0.1
    %v758 = vmul.f32 %v756, 0.1
    %v759 = vadd.f32 %v747, %v757
    %v760 = vadd.f32 %v748, %v758
    %vm761 = vcmp.gt.f32.partialorder %v759, 0.33
    %vm762 = vcmp.gt.f32.partialorder %v760, 0.33
    %v763 = vsel %vm761, 1.0, 0.0
    %v764 = vsel %vm762, 1.0, 0.0
    %765 = vst [vmem:[#allocation4 + $0x90] sm:$0xff] %v763
    %766 = vst [vmem:[#allocation4 + $0x98] sm:$0xff] %v764
    %v767 = vsel %vm761, 0.0, %v759
    %v768 = vsel %vm762, 0.0, %v760
    %v769 = vmul.f32 %v753, 0.8
    %v770 = vmul.f32 %v754, 0.8
    %v771 = vld [vmem:[#allocation3 + $0x90] sm:$0xff]
    %v772 = vld [vmem:[#allocation3 + $0x98] sm:$0xff]
    %v773 = vadd.f32 %v769, %v771
    %v774 = vadd.f32 %v770, %v772
    %v775 = vsub.f32 %v773, %v767
    %v776 = vsub.f32 %v774, %v768
    %v777 = vmul.f32 %v775, 0.1
    %v778 = vmul.f32 %v776, 0.1
    %v779 = vadd.f32 %v767, %v777
    %v780 = vadd.f32 %v768, %v778
    %vm781 = vcmp.gt.f32.partialorder %v779, 0.33
    %vm782 = vcmp.gt.f32.partialorder %v780, 0.33
    %v783 = vsel %vm781, 1.0, 0.0
    %v784 = vsel %vm782, 1.0, 0.0
    %785 = vst [vmem:[#allocation4 + $0xa0] sm:$0xff] %v783
    %786 = vst [vmem:[#allocation4 + $0xa8] sm:$0xff] %v784
    %v787 = vsel %vm781, 0.0, %v779
    %v788 = vsel %vm782, 0.0, %v780
    %v789 = vmul.f32 %v773, 0.8
    %v790 = vmul.f32 %v774, 0.8
    %v791 = vld [vmem:[#allocation3 + $0xa0] sm:$0xff]
    %v792 = vld [vmem:[#allocation3 + $0xa8] sm:$0xff]
    %v793 = vadd.f32 %v789, %v791
    %v794 = vadd.f32 %v790, %v792
    %v795 = vsub.f32 %v793, %v787
    %v796 = vsub.f32 %v794, %v788
    %v797 = vmul.f32 %v795, 0.1
    %v798 = vmul.f32 %v796, 0.1
    %v799 = vadd.f32 %v787, %v797
    %v800 = vadd.f32 %v788, %v798
    %vm801 = vcmp.gt.f32.partialorder %v799, 0.33
    %vm802 = vcmp.gt.f32.partialorder %v800, 0.33
    %v803 = vsel %vm801, 1.0, 0.0
    %v804 = vsel %vm802, 1.0, 0.0
    %805 = vst [vmem:[#allocation4 + $0xb0] sm:$0xff] %v803
    %806 = vst [vmem:[#allocation4 + $0xb8] sm:$0xff] %v804
    %v807 = vsel %vm801, 0.0, %v799
    %v808 = vsel %vm802, 0.0, %v800
    %v809 = vmul.f32 %v793, 0.8
    %v810 = vmul.f32 %v794, 0.8
    %v811 = vld [vmem:[#allocation3 + $0xb0] sm:$0xff]
    %v812 = vld [vmem:[#allocation3 + $0xb8] sm:$0xff]
    %v813 = vadd.f32 %v809, %v811
    %v814 = vadd.f32 %v810, %v812
    %v815 = vsub.f32 %v813, %v807
    %v816 = vsub.f32 %v814, %v808
    %v817 = vmul.f32 %v815, 0.1
    %v818 = vmul.f32 %v816, 0.1
    %v819 = vadd.f32 %v807, %v817
    %v820 = vadd.f32 %v808, %v818
    %vm821 = vcmp.gt.f32.partialorder %v819, 0.33
    %vm822 = vcmp.gt.f32.partialorder %v820, 0.33
    %v823 = vsel %vm821, 1.0, 0.0
    %v824 = vsel %vm822, 1.0, 0.0
    %825 = vst [vmem:[#allocation4 + $0xc0] sm:$0xff] %v823
    %826 = vst [vmem:[#allocation4 + $0xc8] sm:$0xff] %v824
    %v827 = vsel %vm821, 0.0, %v819
    %v828 = vsel %vm822, 0.0, %v820
    %v829 = vmul.f32 %v813, 0.8
    %v830 = vmul.f32 %v814, 0.8
    %v831 = vld [vmem:[#allocation3 + $0xc0] sm:$0xff]
    %v832 = vld [vmem:[#allocation3 + $0xc8] sm:$0xff]
    %v833 = vadd.f32 %v829, %v831
    %v834 = vadd.f32 %v830, %v832
    %v835 = vsub.f32 %v833, %v827
    %v836 = vsub.f32 %v834, %v828
    %v837 = vmul.f32 %v835, 0.1
    %v838 = vmul.f32 %v836, 0.1
    %v839 = vadd.f32 %v827, %v837
    %v840 = vadd.f32 %v828, %v838
    %vm841 = vcmp.gt.f32.partialorder %v839, 0.33
    %vm842 = vcmp.gt.f32.partialorder %v840, 0.33
    %v843 = vsel %vm841, 1.0, 0.0
    %v844 = vsel %vm842, 1.0, 0.0
    %845 = vst [vmem:[#allocation4 + $0xd0] sm:$0xff] %v843
    %846 = vst [vmem:[#allocation4 + $0xd8] sm:$0xff] %v844
    %v847 = vsel %vm841, 0.0, %v839
    %v848 = vsel %vm842, 0.0, %v840
    %v849 = vmul.f32 %v833, 0.8
    %v850 = vmul.f32 %v834, 0.8
    %v851 = vld [vmem:[#allocation3 + $0xd0] sm:$0xff]
    %v852 = vld [vmem:[#allocation3 + $0xd8] sm:$0xff]
    %v853 = vadd.f32 %v849, %v851
    %v854 = vadd.f32 %v850, %v852
    %v855 = vsub.f32 %v853, %v847
    %v856 = vsub.f32 %v854, %v848
    %v857 = vmul.f32 %v855, 0.1
    %v858 = vmul.f32 %v856, 0.1
    %v859 = vadd.f32 %v847, %v857
    %v860 = vadd.f32 %v848, %v858
    %vm861 = vcmp.gt.f32.partialorder %v859, 0.33
    %vm862 = vcmp.gt.f32.partialorder %v860, 0.33
    %v863 = vsel %vm861, 1.0, 0.0
    %v864 = vsel %vm862, 1.0, 0.0
    %865 = vst [vmem:[#allocation4 + $0xe0] sm:$0xff] %v863
    %866 = vst [vmem:[#allocation4 + $0xe8] sm:$0xff] %v864
    %v867 = vsel %vm861, 0.0, %v859
    %v868 = vsel %vm862, 0.0, %v860
    %v869 = vmul.f32 %v853, 0.8
    %v870 = vmul.f32 %v854, 0.8
    %v871 = vld [vmem:[#allocation3 + $0xe0] sm:$0xff]
    %v872 = vld [vmem:[#allocation3 + $0xe8] sm:$0xff]
    %v873 = vadd.f32 %v869, %v871
    %v874 = vadd.f32 %v870, %v872
    %v875 = vsub.f32 %v873, %v867
    %v876 = vsub.f32 %v874, %v868
    %v877 = vmul.f32 %v875, 0.1
    %v878 = vmul.f32 %v876, 0.1
    %v879 = vadd.f32 %v867, %v877
    %v880 = vadd.f32 %v868, %v878
    %vm881 = vcmp.gt.f32.partialorder %v879, 0.33
    %vm882 = vcmp.gt.f32.partialorder %v880, 0.33
    %v883 = vsel %vm881, 1.0, 0.0
    %v884 = vsel %vm882, 1.0, 0.0
    %885 = vst [vmem:[#allocation4 + $0xf0] sm:$0xff] %v883
    %886 = vst [vmem:[#allocation4 + $0xf8] sm:$0xff] %v884
    %v887 = vsel %vm881, 0.0, %v879
    %v888 = vsel %vm882, 0.0, %v880
    %v889 = vmul.f32 %v873, 0.8
    %v890 = vmul.f32 %v874, 0.8
    %v891 = vld [vmem:[#allocation3 + $0xf0] sm:$0xff]
    %v892 = vld [vmem:[#allocation3 + $0xf8] sm:$0xff]
    %v893 = vadd.f32 %v889, %v891
    %v894 = vadd.f32 %v890, %v892
    %v895 = vsub.f32 %v893, %v887
    %v896 = vsub.f32 %v894, %v888
    %v897 = vmul.f32 %v895, 0.1
    %v898 = vmul.f32 %v896, 0.1
    %v899 = vadd.f32 %v887, %v897
    %v900 = vadd.f32 %v888, %v898
    %vm901 = vcmp.gt.f32.partialorder %v899, 0.33
    %vm902 = vcmp.gt.f32.partialorder %v900, 0.33
    %v903 = vsel %vm901, 1.0, 0.0
    %v904 = vsel %vm902, 1.0, 0.0
    %905 = vst [vmem:[#allocation4 + $0x100] sm:$0xff] %v903
    %906 = vst [vmem:[#allocation4 + $0x108] sm:$0xff] %v904
    %v907 = vsel %vm901, 0.0, %v899
    %v908 = vsel %vm902, 0.0, %v900
    %v909 = vmul.f32 %v893, 0.8
    %v910 = vmul.f32 %v894, 0.8
    %v911 = vld [vmem:[#allocation3 + $0x100] sm:$0xff]
    %v912 = vld [vmem:[#allocation3 + $0x108] sm:$0xff]
    %v913 = vadd.f32 %v909, %v911
    %v914 = vadd.f32 %v910, %v912
    %v915 = vsub.f32 %v913, %v907
    %v916 = vsub.f32 %v914, %v908
    %v917 = vmul.f32 %v915, 0.1
    %v918 = vmul.f32 %v916, 0.1
    %v919 = vadd.f32 %v907, %v917
    %v920 = vadd.f32 %v908, %v918
    %vm921 = vcmp.gt.f32.partialorder %v919, 0.33
    %vm922 = vcmp.gt.f32.partialorder %v920, 0.33
    %v923 = vsel %vm921, 1.0, 0.0
    %v924 = vsel %vm922, 1.0, 0.0
    %925 = vst [vmem:[#allocation4 + $0x110] sm:$0xff] %v923
    %926 = vst [vmem:[#allocation4 + $0x118] sm:$0xff] %v924
    %v927 = vsel %vm921, 0.0, %v919
    %v928 = vsel %vm922, 0.0, %v920
    %v929 = vmul.f32 %v913, 0.8
    %v930 = vmul.f32 %v914, 0.8
    %v931 = vld [vmem:[#allocation3 + $0x110] sm:$0xff]
    %v932 = vld [vmem:[#allocation3 + $0x118] sm:$0xff]
    %v933 = vadd.f32 %v929, %v931
    %v934 = vadd.f32 %v930, %v932
    %v935 = vsub.f32 %v933, %v927
    %v936 = vsub.f32 %v934, %v928
    %v937 = vmul.f32 %v935, 0.1
    %v938 = vmul.f32 %v936, 0.1
    %v939 = vadd.f32 %v927, %v937
    %v940 = vadd.f32 %v928, %v938
    %vm941 = vcmp.gt.f32.partialorder %v939, 0.33
    %vm942 = vcmp.gt.f32.partialorder %v940, 0.33
    %v943 = vsel %vm941, 1.0, 0.0
    %v944 = vsel %vm942, 1.0, 0.0
    %945 = vst [vmem:[#allocation4 + $0x120] sm:$0xff] %v943
    %946 = vst [vmem:[#allocation4 + $0x128] sm:$0xff] %v944
    %v947 = vsel %vm941, 0.0, %v939
    %v948 = vsel %vm942, 0.0, %v940
    %v949 = vmul.f32 %v933, 0.8
    %v950 = vmul.f32 %v934, 0.8
    %v951 = vld [vmem:[#allocation3 + $0x120] sm:$0xff]
    %v952 = vld [vmem:[#allocation3 + $0x128] sm:$0xff]
    %v953 = vadd.f32 %v949, %v951
    %v954 = vadd.f32 %v950, %v952
    %v955 = vsub.f32 %v953, %v947
    %v956 = vsub.f32 %v954, %v948
    %v957 = vmul.f32 %v955, 0.1
    %v958 = vmul.f32 %v956, 0.1
    %v959 = vadd.f32 %v947, %v957
    %v960 = vadd.f32 %v948, %v958
    %vm961 = vcmp.gt.f32.partialorder %v959, 0.33
    %vm962 = vcmp.gt.f32.partialorder %v960, 0.33
    %v963 = vsel %vm961, 1.0, 0.0
    %v964 = vsel %vm962, 1.0, 0.0
    %965 = vst [vmem:[#allocation4 + $0x130] sm:$0xff] %v963
    %966 = vst [vmem:[#allocation4 + $0x138] sm:$0xff] %v964
    %v967 = vsel %vm961, 0.0, %v959
    %v968 = vsel %vm962, 0.0, %v960
    %v969 = vmul.f32 %v953, 0.8
    %v970 = vmul.f32 %v954, 0.8
    %v971 = vld [vmem:[#allocation3 + $0x130] sm:$0xff]
    %v972 = vld [vmem:[#allocation3 + $0x138] sm:$0xff]
    %v973 = vadd.f32 %v969, %v971
    %v974 = vadd.f32 %v970, %v972
    %v975 = vsub.f32 %v973, %v967
    %v976 = vsub.f32 %v974, %v968
    %v977 = vmul.f32 %v975, 0.1
    %v978 = vmul.f32 %v976, 0.1
    %v979 = vadd.f32 %v967, %v977
    %v980 = vadd.f32 %v968, %v978
    %vm981 = vcmp.gt.f32.partialorder %v979, 0.33
    %vm982 = vcmp.gt.f32.partialorder %v980, 0.33
    %v983 = vsel %vm981, 1.0, 0.0
    %v984 = vsel %vm982, 1.0, 0.0
    %985 = vst [vmem:[#allocation4 + $0x140] sm:$0xff] %v983
    %986 = vst [vmem:[#allocation4 + $0x148] sm:$0xff] %v984
    %v987 = vsel %vm981, 0.0, %v979
    %v988 = vsel %vm982, 0.0, %v980
    %v989 = vmul.f32 %v973, 0.8
    %v990 = vmul.f32 %v974, 0.8
    %v991 = vld [vmem:[#allocation3 + $0x140] sm:$0xff]
    %v992 = vld [vmem:[#allocation3 + $0x148] sm:$0xff]
    %v993 = vadd.f32 %v989, %v991
    %v994 = vadd.f32 %v990, %v992
    %v995 = vsub.f32 %v993, %v987
    %v996 = vsub.f32 %v994, %v988
    %v997 = vmul.f32 %v995, 0.1
    %v998 = vmul.f32 %v996, 0.1
    %v999 = vadd.f32 %v987, %v997
    %v1000 = vadd.f32 %v988, %v998
    %vm1001 = vcmp.gt.f32.partialorder %v999, 0.33
    %vm1002 = vcmp.gt.f32.partialorder %v1000, 0.33
    %v1003 = vsel %vm1001, 1.0, 0.0
    %v1004 = vsel %vm1002, 1.0, 0.0
    %1005 = vst [vmem:[#allocation4 + $0x150] sm:$0xff] %v1003
    %1006 = vst [vmem:[#allocation4 + $0x158] sm:$0xff] %v1004
    %v1007 = vsel %vm1001, 0.0, %v999
    %v1008 = vsel %vm1002, 0.0, %v1000
    %v1009 = vmul.f32 %v993, 0.8
    %v1010 = vmul.f32 %v994, 0.8
    %v1011 = vld [vmem:[#allocation3 + $0x150] sm:$0xff]
    %v1012 = vld [vmem:[#allocation3 + $0x158] sm:$0xff]
    %v1013 = vadd.f32 %v1009, %v1011
    %v1014 = vadd.f32 %v1010, %v1012
    %v1015 = vsub.f32 %v1013, %v1007
    %v1016 = vsub.f32 %v1014, %v1008
    %v1017 = vmul.f32 %v1015, 0.1
    %v1018 = vmul.f32 %v1016, 0.1
    %v1019 = vadd.f32 %v1007, %v1017
    %v1020 = vadd.f32 %v1008, %v1018
    %vm1021 = vcmp.gt.f32.partialorder %v1019, 0.33
    %vm1022 = vcmp.gt.f32.partialorder %v1020, 0.33
    %v1023 = vsel %vm1021, 1.0, 0.0
    %v1024 = vsel %vm1022, 1.0, 0.0
    %1025 = vst [vmem:[#allocation4 + $0x160] sm:$0xff] %v1023
    %1026 = vst [vmem:[#allocation4 + $0x168] sm:$0xff] %v1024
    %v1027 = vsel %vm1021, 0.0, %v1019
    %v1028 = vsel %vm1022, 0.0, %v1020
    %v1029 = vmul.f32 %v1013, 0.8
    %v1030 = vmul.f32 %v1014, 0.8
    %v1031 = vld [vmem:[#allocation3 + $0x160] sm:$0xff]
    %v1032 = vld [vmem:[#allocation3 + $0x168] sm:$0xff]
    %v1033 = vadd.f32 %v1029, %v1031
    %v1034 = vadd.f32 %v1030, %v1032
    %v1035 = vsub.f32 %v1033, %v1027
    %v1036 = vsub.f32 %v1034, %v1028
    %v1037 = vmul.f32 %v1035, 0.1
    %v1038 = vmul.f32 %v1036, 0.1
    %v1039 = vadd.f32 %v1027, %v1037
    %v1040 = vadd.f32 %v1028, %v1038
    %vm1041 = vcmp.gt.f32.partialorder %v1039, 0.33
    %vm1042 = vcmp.gt.f32.partialorder %v1040, 0.33
    %v1043 = vsel %vm1041, 1.0, 0.0
    %v1044 = vsel %vm1042, 1.0, 0.0
    %1045 = vst [vmem:[#allocation4 + $0x170] sm:$0xff] %v1043
    %1046 = vst [vmem:[#allocation4 + $0x178] sm:$0xff] %v1044
    %v1047 = vld [vmem:[#allocation4] sm:$0xff]
    %v1048 = vld [vmem:[#allocation4 + $0x8] sm:$0xff]
    %v1049 = vld [vmem:[#allocation4 + $0x10] sm:$0xff]
    %v1050 = vld [vmem:[#allocation4 + $0x18] sm:$0xff]
    %v1051 = vld [vmem:[#allocation4 + $0x20] sm:$0xff]
    %v1052 = vld [vmem:[#allocation4 + $0x28] sm:$0xff]
    %v1053 = vld [vmem:[#allocation4 + $0x30] sm:$0xff]
    %v1054 = vld [vmem:[#allocation4 + $0x38] sm:$0xff]
    %v1055 = vld [vmem:[#allocation4 + $0x40] sm:$0xff]
    %v1056 = vld [vmem:[#allocation4 + $0x48] sm:$0xff]
    %v1057 = vld [vmem:[#allocation4 + $0x50] sm:$0xff]
    %v1058 = vld [vmem:[#allocation4 + $0x58] sm:$0xff]
    %v1059 = vld [vmem:[#allocation4 + $0x60] sm:$0xff]
    %v1060 = vld [vmem:[#allocation4 + $0x68] sm:$0xff]
    %v1061 = vld [vmem:[#allocation4 + $0x70] sm:$0xff]
    %v1062 = vld [vmem:[#allocation4 + $0x78] sm:$0xff]
    %v1063 = vld [vmem:[#allocation4 + $0x80] sm:$0xff]
    %v1064 = vld [vmem:[#allocation4 + $0x88] sm:$0xff]
    %v1065 = vld [vmem:[#allocation4 + $0x90] sm:$0xff]
    %v1066 = vld [vmem:[#allocation4 + $0x98] sm:$0xff]
    %v1067 = vld [vmem:[#allocation4 + $0xa0] sm:$0xff]
    %v1068 = vld [vmem:[#allocation4 + $0xa8] sm:$0xff]
    %v1069 = vld [vmem:[#allocation4 + $0xb0] sm:$0xff]
    %v1070 = vld [vmem:[#allocation4 + $0xb8] sm:$0xff]
    %v1071 = vld [vmem:[#allocation4 + $0xc0] sm:$0xff]
    %v1072 = vld [vmem:[#allocation4 + $0xc8] sm:$0xff]
    %v1073 = vld [vmem:[#allocation4 + $0xd0] sm:$0xff]
    %v1074 = vld [vmem:[#allocation4 + $0xd8] sm:$0xff]
    %v1075 = vld [vmem:[#allocation4 + $0xe0] sm:$0xff]
    %v1076 = vld [vmem:[#allocation4 + $0xe8] sm:$0xff]
    %v1077 = vld [vmem:[#allocation4 + $0xf0] sm:$0xff]
    %v1078 = vld [vmem:[#allocation4 + $0xf8] sm:$0xff]
    %v1079 = vld [vmem:[#allocation4 + $0x100] sm:$0xff]
    %v1080 = vld [vmem:[#allocation4 + $0x108] sm:$0xff]
    %v1081 = vld [vmem:[#allocation4 + $0x110] sm:$0xff]
    %v1082 = vld [vmem:[#allocation4 + $0x118] sm:$0xff]
    %v1083 = vld [vmem:[#allocation4 + $0x120] sm:$0xff]
    %v1084 = vld [vmem:[#allocation4 + $0x128] sm:$0xff]
    %v1085 = vld [vmem:[#allocation4 + $0x130] sm:$0xff]
    %v1086 = vld [vmem:[#allocation4 + $0x138] sm:$0xff]
    %v1087 = vld [vmem:[#allocation4 + $0x140] sm:$0xff]
    %v1088 = vld [vmem:[#allocation4 + $0x148] sm:$0xff]
    %v1089 = vld [vmem:[#allocation4 + $0x150] sm:$0xff]
    %v1090 = vld [vmem:[#allocation4 + $0x158] sm:$0xff]
    %v1091 = vld [vmem:[#allocation4 + $0x160] sm:$0xff]
    %v1092 = vld [vmem:[#allocation4 + $0x168] sm:$0xff]
    %v1093 = vld [vmem:[#allocation4 + $0x170] sm:$0xff]
    %v1094 = vld [vmem:[#allocation4 + $0x178] sm:$0xff]
    %v1095 = vld [vmem:[#allocation12] sm:$0xff]
    %v1096 = vld [vmem:[#allocation12 + $0x8] sm:$0xff]
    %v1097 = vld [vmem:[#allocation12 + $0x10] sm:$0xff]
    %v1098 = vld [vmem:[#allocation12 + $0x18] sm:$0xff]
    %v1099 = vld [vmem:[#allocation12 + $0x20] sm:$0xff]
    %v1100 = vld [vmem:[#allocation12 + $0x28] sm:$0xff]
    %v1101 = vld [vmem:[#allocation12 + $0x30] sm:$0xff]
    %v1102 = vld [vmem:[#allocation12 + $0x38] sm:$0xff]
    %v1103 = vld [vmem:[#allocation12 + $0x40] sm:$0xff]
    %v1104 = vld [vmem:[#allocation12 + $0x48] sm:$0xff]
    %v1105 = vld [vmem:[#allocation12 + $0x50] sm:$0xff]
    %v1106 = vld [vmem:[#allocation12 + $0x58] sm:$0xff]
    %v1107 = vld [vmem:[#allocation12 + $0x60] sm:$0xff]
    %v1108 = vld [vmem:[#allocation12 + $0x68] sm:$0xff]
    %v1109 = vld [vmem:[#allocation12 + $0x70] sm:$0xff]
    %v1110 = vld [vmem:[#allocation12 + $0x78] sm:$0xff]
    %v1111 = vld [vmem:[#allocation12 + $0x80] sm:$0xff]
    %v1112 = vld [vmem:[#allocation12 + $0x88] sm:$0xff]
    %v1113 = vld [vmem:[#allocation12 + $0x90] sm:$0xff]
    %v1114 = vld [vmem:[#allocation12 + $0x98] sm:$0xff]
    %v1115 = vld [vmem:[#allocation12 + $0xa0] sm:$0xff]
    %v1116 = vld [vmem:[#allocation12 + $0xa8] sm:$0xff]
    %v1117 = vld [vmem:[#allocation12 + $0xb0] sm:$0xff]
    %v1118 = vld [vmem:[#allocation12 + $0xb8] sm:$0xff]
    %v1119 = vld [vmem:[#allocation12 + $0xc0] sm:$0xff]
    %v1120 = vld [vmem:[#allocation12 + $0xc8] sm:$0xff]
    %v1121 = vld [vmem:[#allocation12 + $0xd0] sm:$0xff]
    %v1122 = vld [vmem:[#allocation12 + $0xd8] sm:$0xff]
    %v1123 = vld [vmem:[#allocation12 + $0xe0] sm:$0xff]
    %v1124 = vld [vmem:[#allocation12 + $0xe8] sm:$0xff]
    %v1125 = vld [vmem:[#allocation12 + $0xf0] sm:$0xff]
    %v1126 = vld [vmem:[#allocation12 + $0xf8] sm:$0xff]
    %v1127 = vld [vmem:[#allocation12 + $0x100] sm:$0xff]
    %v1128 = vld [vmem:[#allocation12 + $0x108] sm:$0xff]
    %v1129 = vld [vmem:[#allocation12 + $0x110] sm:$0xff]
    %v1130 = vld [vmem:[#allocation12 + $0x118] sm:$0xff]
    %v1131 = vld [vmem:[#allocation12 + $0x120] sm:$0xff]
    %v1132 = vld [vmem:[#allocation12 + $0x128] sm:$0xff]
    %v1133 = vld [vmem:[#allocation12 + $0x130] sm:$0xff]
    %v1134 = vld [vmem:[#allocation12 + $0x138] sm:$0xff]
    %v1135 = vld [vmem:[#allocation12 + $0x140] sm:$0xff]
    %v1136 = vld [vmem:[#allocation12 + $0x148] sm:$0xff]
    %v1137 = vld [vmem:[#allocation12 + $0x150] sm:$0xff]
    %v1138 = vld [vmem:[#allocation12 + $0x158] sm:$0xff]
    %v1139 = vld [vmem:[#allocation12 + $0x160] sm:$0xff]
    %v1140 = vld [vmem:[#allocation12 + $0x168] sm:$0xff]
    %v1141 = vld [vmem:[#allocation12 + $0x170] sm:$0xff]
    %v1142 = vld [vmem:[#allocation12 + $0x178] sm:$0xff]
    %v1143 = vld [vmem:[#allocation12 + $0x180] sm:$0xff]
    %v1144 = vld [vmem:[#allocation12 + $0x188] sm:$0xff]
    %v1145 = vld [vmem:[#allocation12 + $0x190] sm:$0xff]
    %v1146 = vld [vmem:[#allocation12 + $0x198] sm:$0xff]
    %v1147 = vld [vmem:[#allocation12 + $0x1a0] sm:$0xff]
    %v1148 = vld [vmem:[#allocation12 + $0x1a8] sm:$0xff]
    %v1149 = vld [vmem:[#allocation12 + $0x1b0] sm:$0xff]
    %v1150 = vld [vmem:[#allocation12 + $0x1b8] sm:$0xff]
    %v1151 = vld [vmem:[#allocation12 + $0x1c0] sm:$0xff]
    %v1152 = vld [vmem:[#allocation12 + $0x1c8] sm:$0xff]
    %v1153 = vld [vmem:[#allocation12 + $0x1d0] sm:$0xff]
    %v1154 = vld [vmem:[#allocation12 + $0x1d8] sm:$0xff]
    %v1155 = vld [vmem:[#allocation12 + $0x1e0] sm:$0xff]
    %v1156 = vld [vmem:[#allocation12 + $0x1e8] sm:$0xff]
    %v1157 = vld [vmem:[#allocation12 + $0x1f0] sm:$0xff]
    %v1158 = vld [vmem:[#allocation12 + $0x1f8] sm:$0xff]
    %1159 = vmatprep.subr.mxu0 %v1096
    %1160 = vmatpush1.msra.mxu0 %v1095
    %1161 = vmatprep.subr.mxu0 %v1098
    %1162 = vmatpush1.msra.mxu0 %v1097
    %1163 = vmatprep.subr.mxu0 %v1100
    %1164 = vmatpush1.msra.mxu0 %v1099
    %1165 = vmatprep.subr.mxu0 %v1102
    %1166 = vmatpush1.msra.mxu0 %v1101
    %1167 = vmatprep.subr.mxu0 %v1104
    %1168 = vmatpush1.msra.mxu0 %v1103
    %1169 = vmatprep.subr.mxu0 %v1106
    %1170 = vmatpush1.msra.mxu0 %v1105
    %1171 = vmatprep.subr.mxu0 %v1108
    %1172 = vmatpush1.msra.mxu0 %v1107
    %1173 = vmatprep.subr.mxu0 %v1110
    %1174 = vmatpush1.msra.mxu0 %v1109
    %1175 = vmatprep.subr.mxu0 %v1112
    %1176 = vmatpush1.msra.mxu0 %v1111
    %1177 = vmatprep.subr.mxu0 %v1114
    %1178 = vmatpush1.msra.mxu0 %v1113
    %1179 = vmatprep.subr.mxu0 %v1116
    %1180 = vmatpush1.msra.mxu0 %v1115
    %1181 = vmatprep.subr.mxu0 %v1118
    %1182 = vmatpush1.msra.mxu0 %v1117
    %1183 = vmatprep.subr.mxu0 %v1120
    %1184 = vmatpush1.msra.mxu0 %v1119
    %1185 = vmatprep.subr.mxu0 %v1122
    %1186 = vmatpush1.msra.mxu0 %v1121
    %1187 = vmatprep.subr.mxu0 %v1124
    %1188 = vmatpush1.msra.mxu0 %v1123
    %1189 = vmatprep.subr.mxu0 %v1126
    %1190 = vmatpush1.msra.mxu0 %v1125
    %1191 = vmatprep.subr.mxu0 %v1128
    %1192 = vmatpush1.msra.mxu0 %v1127
    %1193 = vmatprep.subr.mxu0 %v1130
    %1194 = vmatpush1.msra.mxu0 %v1129
    %1195 = vmatprep.subr.mxu0 %v1132
    %1196 = vmatpush1.msra.mxu0 %v1131
    %1197 = vmatprep.subr.mxu0 %v1134
    %1198 = vmatpush1.msra.mxu0 %v1133
    %1199 = vmatprep.subr.mxu0 %v1136
    %1200 = vmatpush1.msra.mxu0 %v1135
    %1201 = vmatprep.subr.mxu0 %v1138
    %1202 = vmatpush1.msra.mxu0 %v1137
    %1203 = vmatprep.subr.mxu0 %v1140
    %1204 = vmatpush1.msra.mxu0 %v1139
    %1205 = vmatprep.subr.mxu0 %v1142
    %1206 = vmatpush1.msra.mxu0 %v1141
    %1207 = vmatprep.subr.mxu0 %v1144
    %1208 = vmatpush1.msra.mxu0 %v1143
    %1209 = vmatprep.subr.mxu0 %v1146
    %1210 = vmatpush1.msra.mxu0 %v1145
    %1211 = vmatprep.subr.mxu0 %v1148
    %1212 = vmatpush1.msra.mxu0 %v1147
    %1213 = vmatprep.subr.mxu0 %v1150
    %1214 = vmatpush1.msra.mxu0 %v1149
    %1215 = vmatprep.subr.mxu0 %v1152
    %1216 = vmatpush1.msra.mxu0 %v1151
    %1217 = vmatprep.subr.mxu0 %v1154
    %1218 = vmatpush1.msra.mxu0 %v1153
    %1219 = vmatprep.subr.mxu0 %v1156
    %1220 = vmatpush1.msra.mxu0 %v1155
    %1221 = vmatprep.subr.mxu0 %v1158
    %1222 = vmatpush1.msra.mxu0 %v1157
    %1223 = vmatprep.mubr.f32.mxu0 %v1048
    %1224 = vmatmul.mubr.f32.gmra.mrb[0].mxu0 %v1047
    %v1225 = vpop.f32.mrb[0].mxu0
    %v1226 = vadd.f32 0.0, %v1225
    %v1227 = vpop.f32.mrb[0].mxu0
    %v1228 = vadd.f32 0.0, %v1227
    %1229 = vmatprep.mubr.f32.mxu0 %v1050
    %1230 = vmatmul.mubr.f32.gmra.mrb[0].mxu0 %v1049
    %v1231 = vpop.f32.mrb[0].mxu0
    %v1232 = vadd.f32 0.0, %v1231
    %v1233 = vpop.f32.mrb[0].mxu0
    %v1234 = vadd.f32 0.0, %v1233
    %1235 = vmatprep.mubr.f32.mxu0 %v1052
    %1236 = vmatmul.mubr.f32.gmra.mrb[0].mxu0 %v1051
    %v1237 = vpop.f32.mrb[0].mxu0
    %v1238 = vadd.f32 0.0, %v1237
    %v1239 = vpop.f32.mrb[0].mxu0
    %v1240 = vadd.f32 0.0, %v1239
    %1241 = vmatprep.mubr.f32.mxu0 %v1054
    %1242 = vmatmul.mubr.f32.gmra.mrb[0].mxu0 %v1053
    %v1243 = vpop.f32.mrb[0].mxu0
    %v1244 = vadd.f32 0.0, %v1243
    %v1245 = vpop.f32.mrb[0].mxu0
    %v1246 = vadd.f32 0.0, %v1245
    %1247 = vmatprep.mubr.f32.mxu0 %v1056
    %1248 = vmatmul.mubr.f32.gmra.mrb[0].mxu0 %v1055
    %v1249 = vpop.f32.mrb[0].mxu0
    %v1250 = vadd.f32 0.0, %v1249
    %v1251 = vpop.f32.mrb[0].mxu0
    %v1252 = vadd.f32 0.0, %v1251
    %1253 = vmatprep.mubr.f32.mxu0 %v1058
    %1254 = vmatmul.mubr.f32.gmra.mrb[0].mxu0 %v1057
    %v1255 = vpop.f32.mrb[0].mxu0
    %v1256 = vadd.f32 0.0, %v1255
    %v1257 = vpop.f32.mrb[0].mxu0
    %v1258 = vadd.f32 0.0, %v1257
    %1259 = vmatprep.mubr.f32.mxu0 %v1060
    %1260 = vmatmul.mubr.f32.gmra.mrb[0].mxu0 %v1059
    %v1261 = vpop.f32.mrb[0].mxu0
    %v1262 = vadd.f32 0.0, %v1261
    %v1263 = vpop.f32.mrb[0].mxu0
    %v1264 = vadd.f32 0.0, %v1263
    %1265 = vmatprep.mubr.f32.mxu0 %v1062
    %1266 = vmatmul.mubr.f32.gmra.mrb[0].mxu0 %v1061
    %v1267 = vpop.f32.mrb[0].mxu0
    %v1268 = vadd.f32 0.0, %v1267
    %v1269 = vpop.f32.mrb[0].mxu0
    %v1270 = vadd.f32 0.0, %v1269
    %1271 = vmatprep.mubr.f32.mxu0 %v1064
    %1272 = vmatmul.mubr.f32.gmra.mrb[0].mxu0 %v1063
    %v1273 = vpop.f32.mrb[0].mxu0
    %v1274 = vadd.f32 0.0, %v1273
    %v1275 = vpop.f32.mrb[0].mxu0
    %v1276 = vadd.f32 0.0, %v1275
    %1277 = vmatprep.mubr.f32.mxu0 %v1066
    %1278 = vmatmul.mubr.f32.gmra.mrb[0].mxu0 %v1065
    %v1279 = vpop.f32.mrb[0].mxu0
    %v1280 = vadd.f32 0.0, %v1279
    %v1281 = vpop.f32.mrb[0].mxu0
    %v1282 = vadd.f32 0.0, %v1281
    %1283 = vmatprep.mubr.f32.mxu0 %v1068
    %1284 = vmatmul.mubr.f32.gmra.mrb[0].mxu0 %v1067
    %v1285 = vpop.f32.mrb[0].mxu0
    %v1286 = vadd.f32 0.0, %v1285
    %v1287 = vpop.f32.mrb[0].mxu0
    %v1288 = vadd.f32 0.0, %v1287
    %1289 = vmatprep.mubr.f32.mxu0 %v1070
    %1290 = vmatmul.mubr.f32.gmra.mrb[0].mxu0 %v1069
    %v1291 = vpop.f32.mrb[0].mxu0
    %v1292 = vadd.f32 0.0, %v1291
    %v1293 = vpop.f32.mrb[0].mxu0
    %v1294 = vadd.f32 0.0, %v1293
    %1295 = vmatprep.mubr.f32.mxu0 %v1072
    %1296 = vmatmul.mubr.f32.gmra.mrb[0].mxu0 %v1071
    %v1297 = vpop.f32.mrb[0].mxu0
    %v1298 = vadd.f32 0.0, %v1297
    %v1299 = vpop.f32.mrb[0].mxu0
    %v1300 = vadd.f32 0.0, %v1299
    %1301 = vmatprep.mubr.f32.mxu0 %v1074
    %1302 = vmatmul.mubr.f32.gmra.mrb[0].mxu0 %v1073
    %v1303 = vpop.f32.mrb[0].mxu0
    %v1304 = vadd.f32 0.0, %v1303
    %v1305 = vpop.f32.mrb[0].mxu0
    %v1306 = vadd.f32 0.0, %v1305
    %1307 = vmatprep.mubr.f32.mxu0 %v1076
    %1308 = vmatmul.mubr.f32.gmra.mrb[0].mxu0 %v1075
    %v1309 = vpop.f32.mrb[0].mxu0
    %v1310 = vadd.f32 0.0, %v1309
    %v1311 = vpop.f32.mrb[0].mxu0
    %v1312 = vadd.f32 0.0, %v1311
    %1313 = vmatprep.mubr.f32.mxu0 %v1078
    %1314 = vmatmul.mubr.f32.gmra.mrb[0].mxu0 %v1077
    %v1315 = vpop.f32.mrb[0].mxu0
    %v1316 = vadd.f32 0.0, %v1315
    %v1317 = vpop.f32.mrb[0].mxu0
    %v1318 = vadd.f32 0.0, %v1317
    %1319 = vmatprep.mubr.f32.mxu0 %v1080
    %1320 = vmatmul.mubr.f32.gmra.mrb[0].mxu0 %v1079
    %v1321 = vpop.f32.mrb[0].mxu0
    %v1322 = vadd.f32 0.0, %v1321
    %v1323 = vpop.f32.mrb[0].mxu0
    %v1324 = vadd.f32 0.0, %v1323
    %1325 = vmatprep.mubr.f32.mxu0 %v1082
    %1326 = vmatmul.mubr.f32.gmra.mrb[0].mxu0 %v1081
    %v1327 = vpop.f32.mrb[0].mxu0
    %v1328 = vadd.f32 0.0, %v1327
    %v1329 = vpop.f32.mrb[0].mxu0
    %v1330 = vadd.f32 0.0, %v1329
    %1331 = vmatprep.mubr.f32.mxu0 %v1084
    %1332 = vmatmul.mubr.f32.gmra.mrb[0].mxu0 %v1083
    %v1333 = vpop.f32.mrb[0].mxu0
    %v1334 = vadd.f32 0.0, %v1333
    %v1335 = vpop.f32.mrb[0].mxu0
    %v1336 = vadd.f32 0.0, %v1335
    %1337 = vmatprep.mubr.f32.mxu0 %v1086
    %1338 = vmatmul.mubr.f32.gmra.mrb[0].mxu0 %v1085
    %v1339 = vpop.f32.mrb[0].mxu0
    %v1340 = vadd.f32 0.0, %v1339
    %v1341 = vpop.f32.mrb[0].mxu0
    %v1342 = vadd.f32 0.0, %v1341
    %1343 = vmatprep.mubr.f32.mxu0 %v1088
    %1344 = vmatmul.mubr.f32.gmra.mrb[0].mxu0 %v1087
    %v1345 = vpop.f32.mrb[0].mxu0
    %v1346 = vadd.f32 0.0, %v1345
    %v1347 = vpop.f32.mrb[0].mxu0
    %v1348 = vadd.f32 0.0, %v1347
    %1349 = vmatprep.mubr.f32.mxu0 %v1090
    %1350 = vmatmul.mubr.f32.gmra.mrb[0].mxu0 %v1089
    %v1351 = vpop.f32.mrb[0].mxu0
    %v1352 = vadd.f32 0.0, %v1351
    %v1353 = vpop.f32.mrb[0].mxu0
    %v1354 = vadd.f32 0.0, %v1353
    %1355 = vmatprep.mubr.f32.mxu0 %v1092
    %1356 = vmatmul.mubr.f32.gmra.mrb[0].mxu0 %v1091
    %v1357 = vpop.f32.mrb[0].mxu0
    %v1358 = vadd.f32 0.0, %v1357
    %v1359 = vpop.f32.mrb[0].mxu0
    %v1360 = vadd.f32 0.0, %v1359
    %1361 = vmatprep.mubr.f32.mxu0 %v1094
    %1362 = vmatmul.mubr.f32.gmra.mrb[0].mxu0 %v1093
    %v1363 = vpop.f32.mrb[0].mxu0
    %v1364 = vadd.f32 0.0, %v1363
    %v1365 = vpop.f32.mrb[0].mxu0
    %v1366 = vadd.f32 0.0, %v1365
    %1367 = vdwg.mxu0
    %1368 = vst [vmem:[#allocation3] sm:$0xff] %v1226
    %1369 = vst [vmem:[#allocation3 + $0x8] sm:$0xff] %v1228
    %1370 = vst [vmem:[#allocation3 + $0x10] sm:$0xff] %v1232
    %1371 = vst [vmem:[#allocation3 + $0x18] sm:$0xff] %v1234
    %1372 = vst [vmem:[#allocation3 + $0x20] sm:$0xff] %v1238
    %1373 = vst [vmem:[#allocation3 + $0x28] sm:$0xff] %v1240
    %1374 = vst [vmem:[#allocation3 + $0x30] sm:$0xff] %v1244
    %1375 = vst [vmem:[#allocation3 + $0x38] sm:$0xff] %v1246
    %1376 = vst [vmem:[#allocation3 + $0x40] sm:$0xff] %v1250
    %1377 = vst [vmem:[#allocation3 + $0x48] sm:$0xff] %v1252
    %1378 = vst [vmem:[#allocation3 + $0x50] sm:$0xff] %v1256
    %1379 = vst [vmem:[#allocation3 + $0x58] sm:$0xff] %v1258
    %1380 = vst [vmem:[#allocation3 + $0x60] sm:$0xff] %v1262
    %1381 = vst [vmem:[#allocation3 + $0x68] sm:$0xff] %v1264
    %1382 = vst [vmem:[#allocation3 + $0x70] sm:$0xff] %v1268
    %1383 = vst [vmem:[#allocation3 + $0x78] sm:$0xff] %v1270
    %1384 = vst [vmem:[#allocation3 + $0x80] sm:$0xff] %v1274
    %1385 = vst [vmem:[#allocation3 + $0x88] sm:$0xff] %v1276
    %1386 = vst [vmem:[#allocation3 + $0x90] sm:$0xff] %v1280
    %1387 = vst [vmem:[#allocation3 + $0x98] sm:$0xff] %v1282
    %1388 = vst [vmem:[#allocation3 + $0xa0] sm:$0xff] %v1286
    %1389 = vst [vmem:[#allocation3 + $0xa8] sm:$0xff] %v1288
    %1390 = vst [vmem:[#allocation3 + $0xb0] sm:$0xff] %v1292
    %1391 = vst [vmem:[#allocation3 + $0xb8] sm:$0xff] %v1294
    %1392 = vst [vmem:[#allocation3 + $0xc0] sm:$0xff] %v1298
    %1393 = vst [vmem:[#allocation3 + $0xc8] sm:$0xff] %v1300
    %1394 = vst [vmem:[#allocation3 + $0xd0] sm:$0xff] %v1304
    %1395 = vst [vmem:[#allocation3 + $0xd8] sm:$0xff] %v1306
    %1396 = vst [vmem:[#allocation3 + $0xe0] sm:$0xff] %v1310
    %1397 = vst [vmem:[#allocation3 + $0xe8] sm:$0xff] %v1312
    %1398 = vst [vmem:[#allocation3 + $0xf0] sm:$0xff] %v1316
    %1399 = vst [vmem:[#allocation3 + $0xf8] sm:$0xff] %v1318
    %1400 = vst [vmem:[#allocation3 + $0x100] sm:$0xff] %v1322
    %1401 = vst [vmem:[#allocation3 + $0x108] sm:$0xff] %v1324
    %1402 = vst [vmem:[#allocation3 + $0x110] sm:$0xff] %v1328
    %1403 = vst [vmem:[#allocation3 + $0x118] sm:$0xff] %v1330
    %1404 = vst [vmem:[#allocation3 + $0x120] sm:$0xff] %v1334
    %1405 = vst [vmem:[#allocation3 + $0x128] sm:$0xff] %v1336
    %1406 = vst [vmem:[#allocation3 + $0x130] sm:$0xff] %v1340
    %1407 = vst [vmem:[#allocation3 + $0x138] sm:$0xff] %v1342
    %1408 = vst [vmem:[#allocation3 + $0x140] sm:$0xff] %v1346
    %1409 = vst [vmem:[#allocation3 + $0x148] sm:$0xff] %v1348
    %1410 = vst [vmem:[#allocation3 + $0x150] sm:$0xff] %v1352
    %1411 = vst [vmem:[#allocation3 + $0x158] sm:$0xff] %v1354
    %1412 = vst [vmem:[#allocation3 + $0x160] sm:$0xff] %v1358
    %1413 = vst [vmem:[#allocation3 + $0x168] sm:$0xff] %v1360
    %1414 = vst [vmem:[#allocation3 + $0x170] sm:$0xff] %v1364
    %1415 = vst [vmem:[#allocation3 + $0x178] sm:$0xff] %v1366
    %1416 = vst [vmem:[#allocation4] sm:$0xff] %v590
    %1417 = vst [vmem:[#allocation4 + $0x8] sm:$0xff] %v590
    %v1418 = vld [vmem:[#allocation3] sm:$0xff]
    %v1419 = vld [vmem:[#allocation3 + $0x8] sm:$0xff]
    %v1420 = vadd.f32 %v1418, 0.0
    %v1421 = vadd.f32 %v1419, 0.0
    %v1422 = vmul.f32 %v1420, 0.1
    %v1423 = vmul.f32 %v1421, 0.1
    %v1424 = vadd.f32 %v1422, 0.0
    %v1425 = vadd.f32 %v1423, 0.0
    %vm1426 = vcmp.gt.f32.partialorder %v1424, 0.33
    %vm1427 = vcmp.gt.f32.partialorder %v1425, 0.33
    %v1428 = vsel %vm1426, 1.0, 0.0
    %v1429 = vsel %vm1427, 1.0, 0.0
    %1430 = vst [vmem:[#allocation4 + $0x10] sm:$0xff] %v1428
    %1431 = vst [vmem:[#allocation4 + $0x18] sm:$0xff] %v1429
    %v1432 = vsel %vm1426, 0.0, %v1424
    %v1433 = vsel %vm1427, 0.0, %v1425
    %v1434 = vmul.f32 %v1420, 0.8
    %v1435 = vmul.f32 %v1421, 0.8
    %v1436 = vld [vmem:[#allocation3 + $0x10] sm:$0xff]
    %v1437 = vld [vmem:[#allocation3 + $0x18] sm:$0xff]
    %v1438 = vadd.f32 %v1434, %v1436
    %v1439 = vadd.f32 %v1435, %v1437
    %v1440 = vsub.f32 %v1438, %v1432
    %v1441 = vsub.f32 %v1439, %v1433
    %v1442 = vmul.f32 %v1440, 0.1
    %v1443 = vmul.f32 %v1441, 0.1
    %v1444 = vadd.f32 %v1432, %v1442
    %v1445 = vadd.f32 %v1433, %v1443
    %vm1446 = vcmp.gt.f32.partialorder %v1444, 0.33
    %vm1447 = vcmp.gt.f32.partialorder %v1445, 0.33
    %v1448 = vsel %vm1446, 1.0, 0.0
    %v1449 = vsel %vm1447, 1.0, 0.0
    %1450 = vst [vmem:[#allocation4 + $0x20] sm:$0xff] %v1448
    %1451 = vst [vmem:[#allocation4 + $0x28] sm:$0xff] %v1449
    %v1452 = vsel %vm1446, 0.0, %v1444
    %v1453 = vsel %vm1447, 0.0, %v1445
    %v1454 = vmul.f32 %v1438, 0.8
    %v1455 = vmul.f32 %v1439, 0.8
    %v1456 = vld [vmem:[#allocation3 + $0x20] sm:$0xff]
    %v1457 = vld [vmem:[#allocation3 + $0x28] sm:$0xff]
    %v1458 = vadd.f32 %v1454, %v1456
    %v1459 = vadd.f32 %v1455, %v1457
    %v1460 = vsub.f32 %v1458, %v1452
    %v1461 = vsub.f32 %v1459, %v1453
    %v1462 = vmul.f32 %v1460, 0.1
    %v1463 = vmul.f32 %v1461, 0.1
    %v1464 = vadd.f32 %v1452, %v1462
    %v1465 = vadd.f32 %v1453, %v1463
    %vm1466 = vcmp.gt.f32.partialorder %v1464, 0.33
    %vm1467 = vcmp.gt.f32.partialorder %v1465, 0.33
    %v1468 = vsel %vm1466, 1.0, 0.0
    %v1469 = vsel %vm1467, 1.0, 0.0
    %1470 = vst [vmem:[#allocation4 + $0x30] sm:$0xff] %v1468
    %1471 = vst [vmem:[#allocation4 + $0x38] sm:$0xff] %v1469
    %v1472 = vsel %vm1466, 0.0, %v1464
    %v1473 = vsel %vm1467, 0.0, %v1465
    %v1474 = vmul.f32 %v1458, 0.8
    %v1475 = vmul.f32 %v1459, 0.8
    %v1476 = vld [vmem:[#allocation3 + $0x30] sm:$0xff]
    %v1477 = vld [vmem:[#allocation3 + $0x38] sm:$0xff]
    %v1478 = vadd.f32 %v1474, %v1476
    %v1479 = vadd.f32 %v1475, %v1477
    %v1480 = vsub.f32 %v1478, %v1472
    %v1481 = vsub.f32 %v1479, %v1473
    %v1482 = vmul.f32 %v1480, 0.1
    %v1483 = vmul.f32 %v1481, 0.1
    %v1484 = vadd.f32 %v1472, %v1482
    %v1485 = vadd.f32 %v1473, %v1483
    %vm1486 = vcmp.gt.f32.partialorder %v1484, 0.33
    %vm1487 = vcmp.gt.f32.partialorder %v1485, 0.33
    %v1488 = vsel %vm1486, 1.0, 0.0
    %v1489 = vsel %vm1487, 1.0, 0.0
    %1490 = vst [vmem:[#allocation4 + $0x40] sm:$0xff] %v1488
    %1491 = vst [vmem:[#allocation4 + $0x48] sm:$0xff] %v1489
    %v1492 = vsel %vm1486, 0.0, %v1484
    %v1493 = vsel %vm1487, 0.0, %v1485
    %v1494 = vmul.f32 %v1478, 0.8
    %v1495 = vmul.f32 %v1479, 0.8
    %v1496 = vld [vmem:[#allocation3 + $0x40] sm:$0xff]
    %v1497 = vld [vmem:[#allocation3 + $0x48] sm:$0xff]
    %v1498 = vadd.f32 %v1494, %v1496
    %v1499 = vadd.f32 %v1495, %v1497
    %v1500 = vsub.f32 %v1498, %v1492
    %v1501 = vsub.f32 %v1499, %v1493
    %v1502 = vmul.f32 %v1500, 0.1
    %v1503 = vmul.f32 %v1501, 0.1
    %v1504 = vadd.f32 %v1492, %v1502
    %v1505 = vadd.f32 %v1493, %v1503
    %vm1506 = vcmp.gt.f32.partialorder %v1504, 0.33
    %vm1507 = vcmp.gt.f32.partialorder %v1505, 0.33
    %v1508 = vsel %vm1506, 1.0, 0.0
    %v1509 = vsel %vm1507, 1.0, 0.0
    %1510 = vst [vmem:[#allocation4 + $0x50] sm:$0xff] %v1508
    %1511 = vst [vmem:[#allocation4 + $0x58] sm:$0xff] %v1509
    %v1512 = vsel %vm1506, 0.0, %v1504
    %v1513 = vsel %vm1507, 0.0, %v1505
    %v1514 = vmul.f32 %v1498, 0.8
    %v1515 = vmul.f32 %v1499, 0.8
    %v1516 = vld [vmem:[#allocation3 + $0x50] sm:$0xff]
    %v1517 = vld [vmem:[#allocation3 + $0x58] sm:$0xff]
    %v1518 = vadd.f32 %v1514, %v1516
    %v1519 = vadd.f32 %v1515, %v1517
    %v1520 = vsub.f32 %v1518, %v1512
    %v1521 = vsub.f32 %v1519, %v1513
    %v1522 = vmul.f32 %v1520, 0.1
    %v1523 = vmul.f32 %v1521, 0.1
    %v1524 = vadd.f32 %v1512, %v1522
    %v1525 = vadd.f32 %v1513, %v1523
    %vm1526 = vcmp.gt.f32.partialorder %v1524, 0.33
    %vm1527 = vcmp.gt.f32.partialorder %v1525, 0.33
    %v1528 = vsel %vm1526, 1.0, 0.0
    %v1529 = vsel %vm1527, 1.0, 0.0
    %1530 = vst [vmem:[#allocation4 + $0x60] sm:$0xff] %v1528
    %1531 = vst [vmem:[#allocation4 + $0x68] sm:$0xff] %v1529
    %v1532 = vsel %vm1526, 0.0, %v1524
    %v1533 = vsel %vm1527, 0.0, %v1525
    %v1534 = vmul.f32 %v1518, 0.8
    %v1535 = vmul.f32 %v1519, 0.8
    %v1536 = vld [vmem:[#allocation3 + $0x60] sm:$0xff]
    %v1537 = vld [vmem:[#allocation3 + $0x68] sm:$0xff]
    %v1538 = vadd.f32 %v1534, %v1536
    %v1539 = vadd.f32 %v1535, %v1537
    %v1540 = vsub.f32 %v1538, %v1532
    %v1541 = vsub.f32 %v1539, %v1533
    %v1542 = vmul.f32 %v1540, 0.1
    %v1543 = vmul.f32 %v1541, 0.1
    %v1544 = vadd.f32 %v1532, %v1542
    %v1545 = vadd.f32 %v1533, %v1543
    %vm1546 = vcmp.gt.f32.partialorder %v1544, 0.33
    %vm1547 = vcmp.gt.f32.partialorder %v1545, 0.33
    %v1548 = vsel %vm1546, 1.0, 0.0
    %v1549 = vsel %vm1547, 1.0, 0.0
    %1550 = vst [vmem:[#allocation4 + $0x70] sm:$0xff] %v1548
    %1551 = vst [vmem:[#allocation4 + $0x78] sm:$0xff] %v1549
    %v1552 = vsel %vm1546, 0.0, %v1544
    %v1553 = vsel %vm1547, 0.0, %v1545
    %v1554 = vmul.f32 %v1538, 0.8
    %v1555 = vmul.f32 %v1539, 0.8
    %v1556 = vld [vmem:[#allocation3 + $0x70] sm:$0xff]
    %v1557 = vld [vmem:[#allocation3 + $0x78] sm:$0xff]
    %v1558 = vadd.f32 %v1554, %v1556
    %v1559 = vadd.f32 %v1555, %v1557
    %v1560 = vsub.f32 %v1558, %v1552
    %v1561 = vsub.f32 %v1559, %v1553
    %v1562 = vmul.f32 %v1560, 0.1
    %v1563 = vmul.f32 %v1561, 0.1
    %v1564 = vadd.f32 %v1552, %v1562
    %v1565 = vadd.f32 %v1553, %v1563
    %vm1566 = vcmp.gt.f32.partialorder %v1564, 0.33
    %vm1567 = vcmp.gt.f32.partialorder %v1565, 0.33
    %v1568 = vsel %vm1566, 1.0, 0.0
    %v1569 = vsel %vm1567, 1.0, 0.0
    %1570 = vst [vmem:[#allocation4 + $0x80] sm:$0xff] %v1568
    %1571 = vst [vmem:[#allocation4 + $0x88] sm:$0xff] %v1569
    %v1572 = vsel %vm1566, 0.0, %v1564
    %v1573 = vsel %vm1567, 0.0, %v1565
    %v1574 = vmul.f32 %v1558, 0.8
    %v1575 = vmul.f32 %v1559, 0.8
    %v1576 = vld [vmem:[#allocation3 + $0x80] sm:$0xff]
    %v1577 = vld [vmem:[#allocation3 + $0x88] sm:$0xff]
    %v1578 = vadd.f32 %v1574, %v1576
    %v1579 = vadd.f32 %v1575, %v1577
    %v1580 = vsub.f32 %v1578, %v1572
    %v1581 = vsub.f32 %v1579, %v1573
    %v1582 = vmul.f32 %v1580, 0.1
    %v1583 = vmul.f32 %v1581, 0.1
    %v1584 = vadd.f32 %v1572, %v1582
    %v1585 = vadd.f32 %v1573, %v1583
    %vm1586 = vcmp.gt.f32.partialorder %v1584, 0.33
    %vm1587 = vcmp.gt.f32.partialorder %v1585, 0.33
    %v1588 = vsel %vm1586, 1.0, 0.0
    %v1589 = vsel %vm1587, 1.0, 0.0
    %1590 = vst [vmem:[#allocation4 + $0x90] sm:$0xff] %v1588
    %1591 = vst [vmem:[#allocation4 + $0x98] sm:$0xff] %v1589
    %v1592 = vsel %vm1586, 0.0, %v1584
    %v1593 = vsel %vm1587, 0.0, %v1585
    %v1594 = vmul.f32 %v1578, 0.8
    %v1595 = vmul.f32 %v1579, 0.8
    %v1596 = vld [vmem:[#allocation3 + $0x90] sm:$0xff]
    %v1597 = vld [vmem:[#allocation3 + $0x98] sm:$0xff]
    %v1598 = vadd.f32 %v1594, %v1596
    %v1599 = vadd.f32 %v1595, %v1597
    %v1600 = vsub.f32 %v1598, %v1592
    %v1601 = vsub.f32 %v1599, %v1593
    %v1602 = vmul.f32 %v1600, 0.1
    %v1603 = vmul.f32 %v1601, 0.1
    %v1604 = vadd.f32 %v1592, %v1602
    %v1605 = vadd.f32 %v1593, %v1603
    %vm1606 = vcmp.gt.f32.partialorder %v1604, 0.33
    %vm1607 = vcmp.gt.f32.partialorder %v1605, 0.33
    %v1608 = vsel %vm1606, 1.0, 0.0
    %v1609 = vsel %vm1607, 1.0, 0.0
    %1610 = vst [vmem:[#allocation4 + $0xa0] sm:$0xff] %v1608
    %1611 = vst [vmem:[#allocation4 + $0xa8] sm:$0xff] %v1609
    %v1612 = vsel %vm1606, 0.0, %v1604
    %v1613 = vsel %vm1607, 0.0, %v1605
    %v1614 = vmul.f32 %v1598, 0.8
    %v1615 = vmul.f32 %v1599, 0.8
    %v1616 = vld [vmem:[#allocation3 + $0xa0] sm:$0xff]
    %v1617 = vld [vmem:[#allocation3 + $0xa8] sm:$0xff]
    %v1618 = vadd.f32 %v1614, %v1616
    %v1619 = vadd.f32 %v1615, %v1617
    %v1620 = vsub.f32 %v1618, %v1612
    %v1621 = vsub.f32 %v1619, %v1613
    %v1622 = vmul.f32 %v1620, 0.1
    %v1623 = vmul.f32 %v1621, 0.1
    %v1624 = vadd.f32 %v1612, %v1622
    %v1625 = vadd.f32 %v1613, %v1623
    %vm1626 = vcmp.gt.f32.partialorder %v1624, 0.33
    %vm1627 = vcmp.gt.f32.partialorder %v1625, 0.33
    %v1628 = vsel %vm1626, 1.0, 0.0
    %v1629 = vsel %vm1627, 1.0, 0.0
    %1630 = vst [vmem:[#allocation4 + $0xb0] sm:$0xff] %v1628
    %1631 = vst [vmem:[#allocation4 + $0xb8] sm:$0xff] %v1629
    %v1632 = vsel %vm1626, 0.0, %v1624
    %v1633 = vsel %vm1627, 0.0, %v1625
    %v1634 = vmul.f32 %v1618, 0.8
    %v1635 = vmul.f32 %v1619, 0.8
    %v1636 = vld [vmem:[#allocation3 + $0xb0] sm:$0xff]
    %v1637 = vld [vmem:[#allocation3 + $0xb8] sm:$0xff]
    %v1638 = vadd.f32 %v1634, %v1636
    %v1639 = vadd.f32 %v1635, %v1637
    %v1640 = vsub.f32 %v1638, %v1632
    %v1641 = vsub.f32 %v1639, %v1633
    %v1642 = vmul.f32 %v1640, 0.1
    %v1643 = vmul.f32 %v1641, 0.1
    %v1644 = vadd.f32 %v1632, %v1642
    %v1645 = vadd.f32 %v1633, %v1643
    %vm1646 = vcmp.gt.f32.partialorder %v1644, 0.33
    %vm1647 = vcmp.gt.f32.partialorder %v1645, 0.33
    %v1648 = vsel %vm1646, 1.0, 0.0
    %v1649 = vsel %vm1647, 1.0, 0.0
    %1650 = vst [vmem:[#allocation4 + $0xc0] sm:$0xff] %v1648
    %1651 = vst [vmem:[#allocation4 + $0xc8] sm:$0xff] %v1649
    %v1652 = vsel %vm1646, 0.0, %v1644
    %v1653 = vsel %vm1647, 0.0, %v1645
    %v1654 = vmul.f32 %v1638, 0.8
    %v1655 = vmul.f32 %v1639, 0.8
    %v1656 = vld [vmem:[#allocation3 + $0xc0] sm:$0xff]
    %v1657 = vld [vmem:[#allocation3 + $0xc8] sm:$0xff]
    %v1658 = vadd.f32 %v1654, %v1656
    %v1659 = vadd.f32 %v1655, %v1657
    %v1660 = vsub.f32 %v1658, %v1652
    %v1661 = vsub.f32 %v1659, %v1653
    %v1662 = vmul.f32 %v1660, 0.1
    %v1663 = vmul.f32 %v1661, 0.1
    %v1664 = vadd.f32 %v1652, %v1662
    %v1665 = vadd.f32 %v1653, %v1663
    %vm1666 = vcmp.gt.f32.partialorder %v1664, 0.33
    %vm1667 = vcmp.gt.f32.partialorder %v1665, 0.33
    %v1668 = vsel %vm1666, 1.0, 0.0
    %v1669 = vsel %vm1667, 1.0, 0.0
    %1670 = vst [vmem:[#allocation4 + $0xd0] sm:$0xff] %v1668
    %1671 = vst [vmem:[#allocation4 + $0xd8] sm:$0xff] %v1669
    %v1672 = vsel %vm1666, 0.0, %v1664
    %v1673 = vsel %vm1667, 0.0, %v1665
    %v1674 = vmul.f32 %v1658, 0.8
    %v1675 = vmul.f32 %v1659, 0.8
    %v1676 = vld [vmem:[#allocation3 + $0xd0] sm:$0xff]
    %v1677 = vld [vmem:[#allocation3 + $0xd8] sm:$0xff]
    %v1678 = vadd.f32 %v1674, %v1676
    %v1679 = vadd.f32 %v1675, %v1677
    %v1680 = vsub.f32 %v1678, %v1672
    %v1681 = vsub.f32 %v1679, %v1673
    %v1682 = vmul.f32 %v1680, 0.1
    %v1683 = vmul.f32 %v1681, 0.1
    %v1684 = vadd.f32 %v1672, %v1682
    %v1685 = vadd.f32 %v1673, %v1683
    %vm1686 = vcmp.gt.f32.partialorder %v1684, 0.33
    %vm1687 = vcmp.gt.f32.partialorder %v1685, 0.33
    %v1688 = vsel %vm1686, 1.0, 0.0
    %v1689 = vsel %vm1687, 1.0, 0.0
    %1690 = vst [vmem:[#allocation4 + $0xe0] sm:$0xff] %v1688
    %1691 = vst [vmem:[#allocation4 + $0xe8] sm:$0xff] %v1689
    %v1692 = vsel %vm1686, 0.0, %v1684
    %v1693 = vsel %vm1687, 0.0, %v1685
    %v1694 = vmul.f32 %v1678, 0.8
    %v1695 = vmul.f32 %v1679, 0.8
    %v1696 = vld [vmem:[#allocation3 + $0xe0] sm:$0xff]
    %v1697 = vld [vmem:[#allocation3 + $0xe8] sm:$0xff]
    %v1698 = vadd.f32 %v1694, %v1696
    %v1699 = vadd.f32 %v1695, %v1697
    %v1700 = vsub.f32 %v1698, %v1692
    %v1701 = vsub.f32 %v1699, %v1693
    %v1702 = vmul.f32 %v1700, 0.1
    %v1703 = vmul.f32 %v1701, 0.1
    %v1704 = vadd.f32 %v1692, %v1702
    %v1705 = vadd.f32 %v1693, %v1703
    %vm1706 = vcmp.gt.f32.partialorder %v1704, 0.33
    %vm1707 = vcmp.gt.f32.partialorder %v1705, 0.33
    %v1708 = vsel %vm1706, 1.0, 0.0
    %v1709 = vsel %vm1707, 1.0, 0.0
    %1710 = vst [vmem:[#allocation4 + $0xf0] sm:$0xff] %v1708
    %1711 = vst [vmem:[#allocation4 + $0xf8] sm:$0xff] %v1709
    %v1712 = vsel %vm1706, 0.0, %v1704
    %v1713 = vsel %vm1707, 0.0, %v1705
    %v1714 = vmul.f32 %v1698, 0.8
    %v1715 = vmul.f32 %v1699, 0.8
    %v1716 = vld [vmem:[#allocation3 + $0xf0] sm:$0xff]
    %v1717 = vld [vmem:[#allocation3 + $0xf8] sm:$0xff]
    %v1718 = vadd.f32 %v1714, %v1716
    %v1719 = vadd.f32 %v1715, %v1717
    %v1720 = vsub.f32 %v1718, %v1712
    %v1721 = vsub.f32 %v1719, %v1713
    %v1722 = vmul.f32 %v1720, 0.1
    %v1723 = vmul.f32 %v1721, 0.1
    %v1724 = vadd.f32 %v1712, %v1722
    %v1725 = vadd.f32 %v1713, %v1723
    %vm1726 = vcmp.gt.f32.partialorder %v1724, 0.33
    %vm1727 = vcmp.gt.f32.partialorder %v1725, 0.33
    %v1728 = vsel %vm1726, 1.0, 0.0
    %v1729 = vsel %vm1727, 1.0, 0.0
    %1730 = vst [vmem:[#allocation4 + $0x100] sm:$0xff] %v1728
    %1731 = vst [vmem:[#allocation4 + $0x108] sm:$0xff] %v1729
    %v1732 = vsel %vm1726, 0.0, %v1724
    %v1733 = vsel %vm1727, 0.0, %v1725
    %v1734 = vmul.f32 %v1718, 0.8
    %v1735 = vmul.f32 %v1719, 0.8
    %v1736 = vld [vmem:[#allocation3 + $0x100] sm:$0xff]
    %v1737 = vld [vmem:[#allocation3 + $0x108] sm:$0xff]
    %v1738 = vadd.f32 %v1734, %v1736
    %v1739 = vadd.f32 %v1735, %v1737
    %v1740 = vsub.f32 %v1738, %v1732
    %v1741 = vsub.f32 %v1739, %v1733
    %v1742 = vmul.f32 %v1740, 0.1
    %v1743 = vmul.f32 %v1741, 0.1
    %v1744 = vadd.f32 %v1732, %v1742
    %v1745 = vadd.f32 %v1733, %v1743
    %vm1746 = vcmp.gt.f32.partialorder %v1744, 0.33
    %vm1747 = vcmp.gt.f32.partialorder %v1745, 0.33
    %v1748 = vsel %vm1746, 1.0, 0.0
    %v1749 = vsel %vm1747, 1.0, 0.0
    %1750 = vst [vmem:[#allocation4 + $0x110] sm:$0xff] %v1748
    %1751 = vst [vmem:[#allocation4 + $0x118] sm:$0xff] %v1749
    %v1752 = vsel %vm1746, 0.0, %v1744
    %v1753 = vsel %vm1747, 0.0, %v1745
    %v1754 = vmul.f32 %v1738, 0.8
    %v1755 = vmul.f32 %v1739, 0.8
    %v1756 = vld [vmem:[#allocation3 + $0x110] sm:$0xff]
    %v1757 = vld [vmem:[#allocation3 + $0x118] sm:$0xff]
    %v1758 = vadd.f32 %v1754, %v1756
    %v1759 = vadd.f32 %v1755, %v1757
    %v1760 = vsub.f32 %v1758, %v1752
    %v1761 = vsub.f32 %v1759, %v1753
    %v1762 = vmul.f32 %v1760, 0.1
    %v1763 = vmul.f32 %v1761, 0.1
    %v1764 = vadd.f32 %v1752, %v1762
    %v1765 = vadd.f32 %v1753, %v1763
    %vm1766 = vcmp.gt.f32.partialorder %v1764, 0.33
    %vm1767 = vcmp.gt.f32.partialorder %v1765, 0.33
    %v1768 = vsel %vm1766, 1.0, 0.0
    %v1769 = vsel %vm1767, 1.0, 0.0
    %1770 = vst [vmem:[#allocation4 + $0x120] sm:$0xff] %v1768
    %1771 = vst [vmem:[#allocation4 + $0x128] sm:$0xff] %v1769
    %v1772 = vsel %vm1766, 0.0, %v1764
    %v1773 = vsel %vm1767, 0.0, %v1765
    %v1774 = vmul.f32 %v1758, 0.8
    %v1775 = vmul.f32 %v1759, 0.8
    %v1776 = vld [vmem:[#allocation3 + $0x120] sm:$0xff]
    %v1777 = vld [vmem:[#allocation3 + $0x128] sm:$0xff]
    %v1778 = vadd.f32 %v1774, %v1776
    %v1779 = vadd.f32 %v1775, %v1777
    %v1780 = vsub.f32 %v1778, %v1772
    %v1781 = vsub.f32 %v1779, %v1773
    %v1782 = vmul.f32 %v1780, 0.1
    %v1783 = vmul.f32 %v1781, 0.1
    %v1784 = vadd.f32 %v1772, %v1782
    %v1785 = vadd.f32 %v1773, %v1783
    %vm1786 = vcmp.gt.f32.partialorder %v1784, 0.33
    %vm1787 = vcmp.gt.f32.partialorder %v1785, 0.33
    %v1788 = vsel %vm1786, 1.0, 0.0
    %v1789 = vsel %vm1787, 1.0, 0.0
    %1790 = vst [vmem:[#allocation4 + $0x130] sm:$0xff] %v1788
    %1791 = vst [vmem:[#allocation4 + $0x138] sm:$0xff] %v1789
    %v1792 = vsel %vm1786, 0.0, %v1784
    %v1793 = vsel %vm1787, 0.0, %v1785
    %v1794 = vmul.f32 %v1778, 0.8
    %v1795 = vmul.f32 %v1779, 0.8
    %v1796 = vld [vmem:[#allocation3 + $0x130] sm:$0xff]
    %v1797 = vld [vmem:[#allocation3 + $0x138] sm:$0xff]
    %v1798 = vadd.f32 %v1794, %v1796
    %v1799 = vadd.f32 %v1795, %v1797
    %v1800 = vsub.f32 %v1798, %v1792
    %v1801 = vsub.f32 %v1799, %v1793
    %v1802 = vmul.f32 %v1800, 0.1
    %v1803 = vmul.f32 %v1801, 0.1
    %v1804 = vadd.f32 %v1792, %v1802
    %v1805 = vadd.f32 %v1793, %v1803
    %vm1806 = vcmp.gt.f32.partialorder %v1804, 0.33
    %vm1807 = vcmp.gt.f32.partialorder %v1805, 0.33
    %v1808 = vsel %vm1806, 1.0, 0.0
    %v1809 = vsel %vm1807, 1.0, 0.0
    %1810 = vst [vmem:[#allocation4 + $0x140] sm:$0xff] %v1808
    %1811 = vst [vmem:[#allocation4 + $0x148] sm:$0xff] %v1809
    %v1812 = vsel %vm1806, 0.0, %v1804
    %v1813 = vsel %vm1807, 0.0, %v1805
    %v1814 = vmul.f32 %v1798, 0.8
    %v1815 = vmul.f32 %v1799, 0.8
    %v1816 = vld [vmem:[#allocation3 + $0x140] sm:$0xff]
    %v1817 = vld [vmem:[#allocation3 + $0x148] sm:$0xff]
    %v1818 = vadd.f32 %v1814, %v1816
    %v1819 = vadd.f32 %v1815, %v1817
    %v1820 = vsub.f32 %v1818, %v1812
    %v1821 = vsub.f32 %v1819, %v1813
    %v1822 = vmul.f32 %v1820, 0.1
    %v1823 = vmul.f32 %v1821, 0.1
    %v1824 = vadd.f32 %v1812, %v1822
    %v1825 = vadd.f32 %v1813, %v1823
    %vm1826 = vcmp.gt.f32.partialorder %v1824, 0.33
    %vm1827 = vcmp.gt.f32.partialorder %v1825, 0.33
    %v1828 = vsel %vm1826, 1.0, 0.0
    %v1829 = vsel %vm1827, 1.0, 0.0
    %1830 = vst [vmem:[#allocation4 + $0x150] sm:$0xff] %v1828
    %1831 = vst [vmem:[#allocation4 + $0x158] sm:$0xff] %v1829
    %v1832 = vsel %vm1826, 0.0, %v1824
    %v1833 = vsel %vm1827, 0.0, %v1825
    %v1834 = vmul.f32 %v1818, 0.8
    %v1835 = vmul.f32 %v1819, 0.8
    %v1836 = vld [vmem:[#allocation3 + $0x150] sm:$0xff]
    %v1837 = vld [vmem:[#allocation3 + $0x158] sm:$0xff]
    %v1838 = vadd.f32 %v1834, %v1836
    %v1839 = vadd.f32 %v1835, %v1837
    %v1840 = vsub.f32 %v1838, %v1832
    %v1841 = vsub.f32 %v1839, %v1833
    %v1842 = vmul.f32 %v1840, 0.1
    %v1843 = vmul.f32 %v1841, 0.1
    %v1844 = vadd.f32 %v1832, %v1842
    %v1845 = vadd.f32 %v1833, %v1843
    %vm1846 = vcmp.gt.f32.partialorder %v1844, 0.33
    %vm1847 = vcmp.gt.f32.partialorder %v1845, 0.33
    %v1848 = vsel %vm1846, 1.0, 0.0
    %v1849 = vsel %vm1847, 1.0, 0.0
    %1850 = vst [vmem:[#allocation4 + $0x160] sm:$0xff] %v1848
    %1851 = vst [vmem:[#allocation4 + $0x168] sm:$0xff] %v1849
    %v1852 = vsel %vm1846, 0.0, %v1844
    %v1853 = vsel %vm1847, 0.0, %v1845
    %v1854 = vmul.f32 %v1838, 0.8
    %v1855 = vmul.f32 %v1839, 0.8
    %v1856 = vld [vmem:[#allocation3 + $0x160] sm:$0xff]
    %v1857 = vld [vmem:[#allocation3 + $0x168] sm:$0xff]
    %v1858 = vadd.f32 %v1854, %v1856
    %v1859 = vadd.f32 %v1855, %v1857
    %v1860 = vsub.f32 %v1858, %v1852
    %v1861 = vsub.f32 %v1859, %v1853
    %v1862 = vmul.f32 %v1860, 0.1
    %v1863 = vmul.f32 %v1861, 0.1
    %v1864 = vadd.f32 %v1852, %v1862
    %v1865 = vadd.f32 %v1853, %v1863
    %vm1866 = vcmp.gt.f32.partialorder %v1864, 0.33
    %vm1867 = vcmp.gt.f32.partialorder %v1865, 0.33
    %v1868 = vsel %vm1866, 1.0, 0.0
    %v1869 = vsel %vm1867, 1.0, 0.0
    %1870 = vst [vmem:[#allocation4 + $0x170] sm:$0xff] %v1868
    %1871 = vst [vmem:[#allocation4 + $0x178] sm:$0xff] %v1869
    %v1872 = vld [vmem:[#allocation4] sm:$0xff]
    %v1873 = vld [vmem:[#allocation4 + $0x8] sm:$0xff]
    %v1874 = vld [vmem:[#allocation4 + $0x10] sm:$0xff]
    %v1875 = vld [vmem:[#allocation4 + $0x18] sm:$0xff]
    %v1876 = vld [vmem:[#allocation4 + $0x20] sm:$0xff]
    %v1877 = vld [vmem:[#allocation4 + $0x28] sm:$0xff]
    %v1878 = vld [vmem:[#allocation4 + $0x30] sm:$0xff]
    %v1879 = vld [vmem:[#allocation4 + $0x38] sm:$0xff]
    %v1880 = vld [vmem:[#allocation4 + $0x40] sm:$0xff]
    %v1881 = vld [vmem:[#allocation4 + $0x48] sm:$0xff]
    %v1882 = vld [vmem:[#allocation4 + $0x50] sm:$0xff]
    %v1883 = vld [vmem:[#allocation4 + $0x58] sm:$0xff]
    %v1884 = vld [vmem:[#allocation4 + $0x60] sm:$0xff]
    %v1885 = vld [vmem:[#allocation4 + $0x68] sm:$0xff]
    %v1886 = vld [vmem:[#allocation4 + $0x70] sm:$0xff]
    %v1887 = vld [vmem:[#allocation4 + $0x78] sm:$0xff]
    %v1888 = vld [vmem:[#allocation4 + $0x80] sm:$0xff]
    %v1889 = vld [vmem:[#allocation4 + $0x88] sm:$0xff]
    %v1890 = vld [vmem:[#allocation4 + $0x90] sm:$0xff]
    %v1891 = vld [vmem:[#allocation4 + $0x98] sm:$0xff]
    %v1892 = vld [vmem:[#allocation4 + $0xa0] sm:$0xff]
    %v1893 = vld [vmem:[#allocation4 + $0xa8] sm:$0xff]
    %v1894 = vld [vmem:[#allocation4 + $0xb0] sm:$0xff]
    %v1895 = vld [vmem:[#allocation4 + $0xb8] sm:$0xff]
    %v1896 = vld [vmem:[#allocation4 + $0xc0] sm:$0xff]
    %v1897 = vld [vmem:[#allocation4 + $0xc8] sm:$0xff]
    %v1898 = vld [vmem:[#allocation4 + $0xd0] sm:$0xff]
    %v1899 = vld [vmem:[#allocation4 + $0xd8] sm:$0xff]
    %v1900 = vld [vmem:[#allocation4 + $0xe0] sm:$0xff]
    %v1901 = vld [vmem:[#allocation4 + $0xe8] sm:$0xff]
    %v1902 = vld [vmem:[#allocation4 + $0xf0] sm:$0xff]
    %v1903 = vld [vmem:[#allocation4 + $0xf8] sm:$0xff]
    %v1904 = vld [vmem:[#allocation4 + $0x100] sm:$0xff]
    %v1905 = vld [vmem:[#allocation4 + $0x108] sm:$0xff]
    %v1906 = vld [vmem:[#allocation4 + $0x110] sm:$0xff]
    %v1907 = vld [vmem:[#allocation4 + $0x118] sm:$0xff]
    %v1908 = vld [vmem:[#allocation4 + $0x120] sm:$0xff]
    %v1909 = vld [vmem:[#allocation4 + $0x128] sm:$0xff]
    %v1910 = vld [vmem:[#allocation4 + $0x130] sm:$0xff]
    %v1911 = vld [vmem:[#allocation4 + $0x138] sm:$0xff]
    %v1912 = vld [vmem:[#allocation4 + $0x140] sm:$0xff]
    %v1913 = vld [vmem:[#allocation4 + $0x148] sm:$0xff]
    %v1914 = vld [vmem:[#allocation4 + $0x150] sm:$0xff]
    %v1915 = vld [vmem:[#allocation4 + $0x158] sm:$0xff]
    %v1916 = vld [vmem:[#allocation4 + $0x160] sm:$0xff]
    %v1917 = vld [vmem:[#allocation4 + $0x168] sm:$0xff]
    %v1918 = vld [vmem:[#allocation4 + $0x170] sm:$0xff]
    %v1919 = vld [vmem:[#allocation4 + $0x178] sm:$0xff]
    %v1920 = vld [vmem:[#allocation13] sm:$0xff]
    %v1921 = vld [vmem:[#allocation13 + $0x8] sm:$0xff]
    %v1922 = vld [vmem:[#allocation13 + $0x10] sm:$0xff]
    %v1923 = vld [vmem:[#allocation13 + $0x18] sm:$0xff]
    %v1924 = vld [vmem:[#allocation13 + $0x20] sm:$0xff]
    %v1925 = vld [vmem:[#allocation13 + $0x28] sm:$0xff]
    %v1926 = vld [vmem:[#allocation13 + $0x30] sm:$0xff]
    %v1927 = vld [vmem:[#allocation13 + $0x38] sm:$0xff]
    %v1928 = vld [vmem:[#allocation13 + $0x40] sm:$0xff]
    %v1929 = vld [vmem:[#allocation13 + $0x48] sm:$0xff]
    %v1930 = vld [vmem:[#allocation13 + $0x50] sm:$0xff]
    %v1931 = vld [vmem:[#allocation13 + $0x58] sm:$0xff]
    %v1932 = vld [vmem:[#allocation13 + $0x60] sm:$0xff]
    %v1933 = vld [vmem:[#allocation13 + $0x68] sm:$0xff]
    %v1934 = vld [vmem:[#allocation13 + $0x70] sm:$0xff]
    %v1935 = vld [vmem:[#allocation13 + $0x78] sm:$0xff]
    %v1936 = vld [vmem:[#allocation13 + $0x80] sm:$0xff]
    %v1937 = vld [vmem:[#allocation13 + $0x88] sm:$0xff]
    %v1938 = vld [vmem:[#allocation13 + $0x90] sm:$0xff]
    %v1939 = vld [vmem:[#allocation13 + $0x98] sm:$0xff]
    %v1940 = vld [vmem:[#allocation13 + $0xa0] sm:$0xff]
    %v1941 = vld [vmem:[#allocation13 + $0xa8] sm:$0xff]
    %v1942 = vld [vmem:[#allocation13 + $0xb0] sm:$0xff]
    %v1943 = vld [vmem:[#allocation13 + $0xb8] sm:$0xff]
    %v1944 = vld [vmem:[#allocation13 + $0xc0] sm:$0xff]
    %v1945 = vld [vmem:[#allocation13 + $0xc8] sm:$0xff]
    %v1946 = vld [vmem:[#allocation13 + $0xd0] sm:$0xff]
    %v1947 = vld [vmem:[#allocation13 + $0xd8] sm:$0xff]
    %v1948 = vld [vmem:[#allocation13 + $0xe0] sm:$0xff]
    %v1949 = vld [vmem:[#allocation13 + $0xe8] sm:$0xff]
    %v1950 = vld [vmem:[#allocation13 + $0xf0] sm:$0xff]
    %v1951 = vld [vmem:[#allocation13 + $0xf8] sm:$0xff]
    %v1952 = vld [vmem:[#allocation13 + $0x100] sm:$0xff]
    %v1953 = vld [vmem:[#allocation13 + $0x108] sm:$0xff]
    %v1954 = vld [vmem:[#allocation13 + $0x110] sm:$0xff]
    %v1955 = vld [vmem:[#allocation13 + $0x118] sm:$0xff]
    %v1956 = vld [vmem:[#allocation13 + $0x120] sm:$0xff]
    %v1957 = vld [vmem:[#allocation13 + $0x128] sm:$0xff]
    %v1958 = vld [vmem:[#allocation13 + $0x130] sm:$0xff]
    %v1959 = vld [vmem:[#allocation13 + $0x138] sm:$0xff]
    %v1960 = vld [vmem:[#allocation13 + $0x140] sm:$0xff]
    %v1961 = vld [vmem:[#allocation13 + $0x148] sm:$0xff]
    %v1962 = vld [vmem:[#allocation13 + $0x150] sm:$0xff]
    %v1963 = vld [vmem:[#allocation13 + $0x158] sm:$0xff]
    %v1964 = vld [vmem:[#allocation13 + $0x160] sm:$0xff]
    %v1965 = vld [vmem:[#allocation13 + $0x168] sm:$0xff]
    %v1966 = vld [vmem:[#allocation13 + $0x170] sm:$0xff]
    %v1967 = vld [vmem:[#allocation13 + $0x178] sm:$0xff]
    %v1968 = vld [vmem:[#allocation13 + $0x180] sm:$0xff]
    %v1969 = vld [vmem:[#allocation13 + $0x188] sm:$0xff]
    %v1970 = vld [vmem:[#allocation13 + $0x190] sm:$0xff]
    %v1971 = vld [vmem:[#allocation13 + $0x198] sm:$0xff]
    %v1972 = vld [vmem:[#allocation13 + $0x1a0] sm:$0xff]
    %v1973 = vld [vmem:[#allocation13 + $0x1a8] sm:$0xff]
    %v1974 = vld [vmem:[#allocation13 + $0x1b0] sm:$0xff]
    %v1975 = vld [vmem:[#allocation13 + $0x1b8] sm:$0xff]
    %v1976 = vld [vmem:[#allocation13 + $0x1c0] sm:$0xff]
    %v1977 = vld [vmem:[#allocation13 + $0x1c8] sm:$0xff]
    %v1978 = vld [vmem:[#allocation13 + $0x1d0] sm:$0xff]
    %v1979 = vld [vmem:[#allocation13 + $0x1d8] sm:$0xff]
    %v1980 = vld [vmem:[#allocation13 + $0x1e0] sm:$0xff]
    %v1981 = vld [vmem:[#allocation13 + $0x1e8] sm:$0xff]
    %v1982 = vld [vmem:[#allocation13 + $0x1f0] sm:$0xff]
    %v1983 = vld [vmem:[#allocation13 + $0x1f8] sm:$0xff]
    %1984 = vmatprep.subr.mxu0 %v1921
    %1985 = vmatpush1.msra.mxu0 %v1920
    %1986 = vmatprep.subr.mxu0 %v1923
    %1987 = vmatpush1.msra.mxu0 %v1922
    %1988 = vmatprep.subr.mxu0 %v1925
    %1989 = vmatpush1.msra.mxu0 %v1924
    %1990 = vmatprep.subr.mxu0 %v1927
    %1991 = vmatpush1.msra.mxu0 %v1926
    %1992 = vmatprep.subr.mxu0 %v1929
    %1993 = vmatpush1.msra.mxu0 %v1928
    %1994 = vmatprep.subr.mxu0 %v1931
    %1995 = vmatpush1.msra.mxu0 %v1930
    %1996 = vmatprep.subr.mxu0 %v1933
    %1997 = vmatpush1.msra.mxu0 %v1932
    %1998 = vmatprep.subr.mxu0 %v1935
    %1999 = vmatpush1.msra.mxu0 %v1934
    %2000 = vmatprep.subr.mxu0 %v1937
    %2001 = vmatpush1.msra.mxu0 %v1936
    %2002 = vmatprep.subr.mxu0 %v1939
    %2003 = vmatpush1.msra.mxu0 %v1938
    %2004 = vmatprep.subr.mxu0 %v1941
    %2005 = vmatpush1.msra.mxu0 %v1940
    %2006 = vmatprep.subr.mxu0 %v1943
    %2007 = vmatpush1.msra.mxu0 %v1942
    %2008 = vmatprep.subr.mxu0 %v1945
    %2009 = vmatpush1.msra.mxu0 %v1944
    %2010 = vmatprep.subr.mxu0 %v1947
    %2011 = vmatpush1.msra.mxu0 %v1946
    %2012 = vmatprep.subr.mxu0 %v1949
    %2013 = vmatpush1.msra.mxu0 %v1948
    %2014 = vmatprep.subr.mxu0 %v1951
    %2015 = vmatpush1.msra.mxu0 %v1950
    %2016 = vmatprep.subr.mxu0 %v1953
    %2017 = vmatpush1.msra.mxu0 %v1952
    %2018 = vmatprep.subr.mxu0 %v1955
    %2019 = vmatpush1.msra.mxu0 %v1954
    %2020 = vmatprep.subr.mxu0 %v1957
    %2021 = vmatpush1.msra.mxu0 %v1956
    %2022 = vmatprep.subr.mxu0 %v1959
    %2023 = vmatpush1.msra.mxu0 %v1958
    %2024 = vmatprep.subr.mxu0 %v1961
    %2025 = vmatpush1.msra.mxu0 %v1960
    %2026 = vmatprep.subr.mxu0 %v1963
    %2027 = vmatpush1.msra.mxu0 %v1962
    %2028 = vmatprep.subr.mxu0 %v1965
    %2029 = vmatpush1.msra.mxu0 %v1964
    %2030 = vmatprep.subr.mxu0 %v1967
    %2031 = vmatpush1.msra.mxu0 %v1966
    %2032 = vmatprep.subr.mxu0 %v1969
    %2033 = vmatpush1.msra.mxu0 %v1968
    %2034 = vmatprep.subr.mxu0 %v1971
    %2035 = vmatpush1.msra.mxu0 %v1970
    %2036 = vmatprep.subr.mxu0 %v1973
    %2037 = vmatpush1.msra.mxu0 %v1972
    %2038 = vmatprep.subr.mxu0 %v1975
    %2039 = vmatpush1.msra.mxu0 %v1974
    %2040 = vmatprep.subr.mxu0 %v1977
    %2041 = vmatpush1.msra.mxu0 %v1976
    %2042 = vmatprep.subr.mxu0 %v1979
    %2043 = vmatpush1.msra.mxu0 %v1978
    %2044 = vmatprep.subr.mxu0 %v1981
    %2045 = vmatpush1.msra.mxu0 %v1980
    %2046 = vmatprep.subr.mxu0 %v1983
    %2047 = vmatpush1.msra.mxu0 %v1982
    %2048 = vmatprep.mubr.f32.mxu0 %v1873
    %2049 = vmatmul.mubr.f32.gmra.mrb[0].mxu0 %v1872
    %v2050 = vpop.f32.mrb[0].mxu0
    %v2051 = vadd.f32 0.0, %v2050
    %v2052 = vpop.f32.mrb[0].mxu0
    %v2053 = vadd.f32 0.0, %v2052
    %2054 = vmatprep.mubr.f32.mxu0 %v1875
    %2055 = vmatmul.mubr.f32.gmra.mrb[0].mxu0 %v1874
    %v2056 = vpop.f32.mrb[0].mxu0
    %v2057 = vadd.f32 0.0, %v2056
    %v2058 = vpop.f32.mrb[0].mxu0
    %v2059 = vadd.f32 0.0, %v2058
    %2060 = vmatprep.mubr.f32.mxu0 %v1877
    %2061 = vmatmul.mubr.f32.gmra.mrb[0].mxu0 %v1876
    %v2062 = vpop.f32.mrb[0].mxu0
    %v2063 = vadd.f32 0.0, %v2062
    %v2064 = vpop.f32.mrb[0].mxu0
    %v2065 = vadd.f32 0.0, %v2064
    %2066 = vmatprep.mubr.f32.mxu0 %v1879
    %2067 = vmatmul.mubr.f32.gmra.mrb[0].mxu0 %v1878
    %v2068 = vpop.f32.mrb[0].mxu0
    %v2069 = vadd.f32 0.0, %v2068
    %v2070 = vpop.f32.mrb[0].mxu0
    %v2071 = vadd.f32 0.0, %v2070
    %2072 = vmatprep.mubr.f32.mxu0 %v1881
    %2073 = vmatmul.mubr.f32.gmra.mrb[0].mxu0 %v1880
    %v2074 = vpop.f32.mrb[0].mxu0
    %v2075 = vadd.f32 0.0, %v2074
    %v2076 = vpop.f32.mrb[0].mxu0
    %v2077 = vadd.f32 0.0, %v2076
    %2078 = vmatprep.mubr.f32.mxu0 %v1883
    %2079 = vmatmul.mubr.f32.gmra.mrb[0].mxu0 %v1882
    %v2080 = vpop.f32.mrb[0].mxu0
    %v2081 = vadd.f32 0.0, %v2080
    %v2082 = vpop.f32.mrb[0].mxu0
    %v2083 = vadd.f32 0.0, %v2082
    %2084 = vmatprep.mubr.f32.mxu0 %v1885
    %2085 = vmatmul.mubr.f32.gmra.mrb[0].mxu0 %v1884
    %v2086 = vpop.f32.mrb[0].mxu0
    %v2087 = vadd.f32 0.0, %v2086
    %v2088 = vpop.f32.mrb[0].mxu0
    %v2089 = vadd.f32 0.0, %v2088
    %2090 = vmatprep.mubr.f32.mxu0 %v1887
    %2091 = vmatmul.mubr.f32.gmra.mrb[0].mxu0 %v1886
    %v2092 = vpop.f32.mrb[0].mxu0
    %v2093 = vadd.f32 0.0, %v2092
    %v2094 = vpop.f32.mrb[0].mxu0
    %v2095 = vadd.f32 0.0, %v2094
    %2096 = vmatprep.mubr.f32.mxu0 %v1889
    %2097 = vmatmul.mubr.f32.gmra.mrb[0].mxu0 %v1888
    %v2098 = vpop.f32.mrb[0].mxu0
    %v2099 = vadd.f32 0.0, %v2098
    %v2100 = vpop.f32.mrb[0].mxu0
    %v2101 = vadd.f32 0.0, %v2100
    %2102 = vmatprep.mubr.f32.mxu0 %v1891
    %2103 = vmatmul.mubr.f32.gmra.mrb[0].mxu0 %v1890
    %v2104 = vpop.f32.mrb[0].mxu0
    %v2105 = vadd.f32 0.0, %v2104
    %v2106 = vpop.f32.mrb[0].mxu0
    %v2107 = vadd.f32 0.0, %v2106
    %2108 = vmatprep.mubr.f32.mxu0 %v1893
    %2109 = vmatmul.mubr.f32.gmra.mrb[0].mxu0 %v1892
    %v2110 = vpop.f32.mrb[0].mxu0
    %v2111 = vadd.f32 0.0, %v2110
    %v2112 = vpop.f32.mrb[0].mxu0
    %v2113 = vadd.f32 0.0, %v2112
    %2114 = vmatprep.mubr.f32.mxu0 %v1895
    %2115 = vmatmul.mubr.f32.gmra.mrb[0].mxu0 %v1894
    %v2116 = vpop.f32.mrb[0].mxu0
    %v2117 = vadd.f32 0.0, %v2116
    %v2118 = vpop.f32.mrb[0].mxu0
    %v2119 = vadd.f32 0.0, %v2118
    %2120 = vmatprep.mubr.f32.mxu0 %v1897
    %2121 = vmatmul.mubr.f32.gmra.mrb[0].mxu0 %v1896
    %v2122 = vpop.f32.mrb[0].mxu0
    %v2123 = vadd.f32 0.0, %v2122
    %v2124 = vpop.f32.mrb[0].mxu0
    %v2125 = vadd.f32 0.0, %v2124
    %2126 = vmatprep.mubr.f32.mxu0 %v1899
    %2127 = vmatmul.mubr.f32.gmra.mrb[0].mxu0 %v1898
    %v2128 = vpop.f32.mrb[0].mxu0
    %v2129 = vadd.f32 0.0, %v2128
    %v2130 = vpop.f32.mrb[0].mxu0
    %v2131 = vadd.f32 0.0, %v2130
    %2132 = vmatprep.mubr.f32.mxu0 %v1901
    %2133 = vmatmul.mubr.f32.gmra.mrb[0].mxu0 %v1900
    %v2134 = vpop.f32.mrb[0].mxu0
    %v2135 = vadd.f32 0.0, %v2134
    %v2136 = vpop.f32.mrb[0].mxu0
    %v2137 = vadd.f32 0.0, %v2136
    %2138 = vmatprep.mubr.f32.mxu0 %v1903
    %2139 = vmatmul.mubr.f32.gmra.mrb[0].mxu0 %v1902
    %v2140 = vpop.f32.mrb[0].mxu0
    %v2141 = vadd.f32 0.0, %v2140
    %v2142 = vpop.f32.mrb[0].mxu0
    %v2143 = vadd.f32 0.0, %v2142
    %2144 = vmatprep.mubr.f32.mxu0 %v1905
    %2145 = vmatmul.mubr.f32.gmra.mrb[0].mxu0 %v1904
    %v2146 = vpop.f32.mrb[0].mxu0
    %v2147 = vadd.f32 0.0, %v2146
    %v2148 = vpop.f32.mrb[0].mxu0
    %v2149 = vadd.f32 0.0, %v2148
    %2150 = vmatprep.mubr.f32.mxu0 %v1907
    %2151 = vmatmul.mubr.f32.gmra.mrb[0].mxu0 %v1906
    %v2152 = vpop.f32.mrb[0].mxu0
    %v2153 = vadd.f32 0.0, %v2152
    %v2154 = vpop.f32.mrb[0].mxu0
    %v2155 = vadd.f32 0.0, %v2154
    %2156 = vmatprep.mubr.f32.mxu0 %v1909
    %2157 = vmatmul.mubr.f32.gmra.mrb[0].mxu0 %v1908
    %v2158 = vpop.f32.mrb[0].mxu0
    %v2159 = vadd.f32 0.0, %v2158
    %v2160 = vpop.f32.mrb[0].mxu0
    %v2161 = vadd.f32 0.0, %v2160
    %2162 = vmatprep.mubr.f32.mxu0 %v1911
    %2163 = vmatmul.mubr.f32.gmra.mrb[0].mxu0 %v1910
    %v2164 = vpop.f32.mrb[0].mxu0
    %v2165 = vadd.f32 0.0, %v2164
    %v2166 = vpop.f32.mrb[0].mxu0
    %v2167 = vadd.f32 0.0, %v2166
    %2168 = vmatprep.mubr.f32.mxu0 %v1913
    %2169 = vmatmul.mubr.f32.gmra.mrb[0].mxu0 %v1912
    %v2170 = vpop.f32.mrb[0].mxu0
    %v2171 = vadd.f32 0.0, %v2170
    %v2172 = vpop.f32.mrb[0].mxu0
    %v2173 = vadd.f32 0.0, %v2172
    %2174 = vmatprep.mubr.f32.mxu0 %v1915
    %2175 = vmatmul.mubr.f32.gmra.mrb[0].mxu0 %v1914
    %v2176 = vpop.f32.mrb[0].mxu0
    %v2177 = vadd.f32 0.0, %v2176
    %v2178 = vpop.f32.mrb[0].mxu0
    %v2179 = vadd.f32 0.0, %v2178
    %2180 = vmatprep.mubr.f32.mxu0 %v1917
    %2181 = vmatmul.mubr.f32.gmra.mrb[0].mxu0 %v1916
    %v2182 = vpop.f32.mrb[0].mxu0
    %v2183 = vadd.f32 0.0, %v2182
    %v2184 = vpop.f32.mrb[0].mxu0
    %v2185 = vadd.f32 0.0, %v2184
    %2186 = vmatprep.mubr.f32.mxu0 %v1919
    %2187 = vmatmul.mubr.f32.gmra.mrb[0].mxu0 %v1918
    %v2188 = vpop.f32.mrb[0].mxu0
    %v2189 = vadd.f32 0.0, %v2188
    %v2190 = vpop.f32.mrb[0].mxu0
    %v2191 = vadd.f32 0.0, %v2190
    %2192 = vdwg.mxu0
    %2193 = vst [vmem:[#allocation3] sm:$0xff] %v2051
    %2194 = vst [vmem:[#allocation3 + $0x8] sm:$0xff] %v2053
    %2195 = vst [vmem:[#allocation3 + $0x10] sm:$0xff] %v2057
    %2196 = vst [vmem:[#allocation3 + $0x18] sm:$0xff] %v2059
    %2197 = vst [vmem:[#allocation3 + $0x20] sm:$0xff] %v2063
    %2198 = vst [vmem:[#allocation3 + $0x28] sm:$0xff] %v2065
    %2199 = vst [vmem:[#allocation3 + $0x30] sm:$0xff] %v2069
    %2200 = vst [vmem:[#allocation3 + $0x38] sm:$0xff] %v2071
    %2201 = vst [vmem:[#allocation3 + $0x40] sm:$0xff] %v2075
    %2202 = vst [vmem:[#allocation3 + $0x48] sm:$0xff] %v2077
    %2203 = vst [vmem:[#allocation3 + $0x50] sm:$0xff] %v2081
    %2204 = vst [vmem:[#allocation3 + $0x58] sm:$0xff] %v2083
    %2205 = vst [vmem:[#allocation3 + $0x60] sm:$0xff] %v2087
    %2206 = vst [vmem:[#allocation3 + $0x68] sm:$0xff] %v2089
    %2207 = vst [vmem:[#allocation3 + $0x70] sm:$0xff] %v2093
    %2208 = vst [vmem:[#allocation3 + $0x78] sm:$0xff] %v2095
    %2209 = vst [vmem:[#allocation3 + $0x80] sm:$0xff] %v2099
    %2210 = vst [vmem:[#allocation3 + $0x88] sm:$0xff] %v2101
    %2211 = vst [vmem:[#allocation3 + $0x90] sm:$0xff] %v2105
    %2212 = vst [vmem:[#allocation3 + $0x98] sm:$0xff] %v2107
    %2213 = vst [vmem:[#allocation3 + $0xa0] sm:$0xff] %v2111
    %2214 = vst [vmem:[#allocation3 + $0xa8] sm:$0xff] %v2113
    %2215 = vst [vmem:[#allocation3 + $0xb0] sm:$0xff] %v2117
    %2216 = vst [vmem:[#allocation3 + $0xb8] sm:$0xff] %v2119
    %2217 = vst [vmem:[#allocation3 + $0xc0] sm:$0xff] %v2123
    %2218 = vst [vmem:[#allocation3 + $0xc8] sm:$0xff] %v2125
    %2219 = vst [vmem:[#allocation3 + $0xd0] sm:$0xff] %v2129
    %2220 = vst [vmem:[#allocation3 + $0xd8] sm:$0xff] %v2131
    %2221 = vst [vmem:[#allocation3 + $0xe0] sm:$0xff] %v2135
    %2222 = vst [vmem:[#allocation3 + $0xe8] sm:$0xff] %v2137
    %2223 = vst [vmem:[#allocation3 + $0xf0] sm:$0xff] %v2141
    %2224 = vst [vmem:[#allocation3 + $0xf8] sm:$0xff] %v2143
    %2225 = vst [vmem:[#allocation3 + $0x100] sm:$0xff] %v2147
    %2226 = vst [vmem:[#allocation3 + $0x108] sm:$0xff] %v2149
    %2227 = vst [vmem:[#allocation3 + $0x110] sm:$0xff] %v2153
    %2228 = vst [vmem:[#allocation3 + $0x118] sm:$0xff] %v2155
    %2229 = vst [vmem:[#allocation3 + $0x120] sm:$0xff] %v2159
    %2230 = vst [vmem:[#allocation3 + $0x128] sm:$0xff] %v2161
    %2231 = vst [vmem:[#allocation3 + $0x130] sm:$0xff] %v2165
    %2232 = vst [vmem:[#allocation3 + $0x138] sm:$0xff] %v2167
    %2233 = vst [vmem:[#allocation3 + $0x140] sm:$0xff] %v2171
    %2234 = vst [vmem:[#allocation3 + $0x148] sm:$0xff] %v2173
    %2235 = vst [vmem:[#allocation3 + $0x150] sm:$0xff] %v2177
    %2236 = vst [vmem:[#allocation3 + $0x158] sm:$0xff] %v2179
    %2237 = vst [vmem:[#allocation3 + $0x160] sm:$0xff] %v2183
    %2238 = vst [vmem:[#allocation3 + $0x168] sm:$0xff] %v2185
    %2239 = vst [vmem:[#allocation3 + $0x170] sm:$0xff] %v2189
    %2240 = vst [vmem:[#allocation3 + $0x178] sm:$0xff] %v2191
    %v2241 = vsel %vm589, 0.07504407, 0.0
    %v2242 = vadd.f32 %v2241, 0.0
    %v2243 = vld [vmem:[#allocation3] sm:$0xff]
    %v2244 = vld [vmem:[#allocation3 + $0x8] sm:$0xff]
    %v2245 = vadd.f32 %v2243, 0.0
    %v2246 = vadd.f32 %v2244, 0.0
    %v2247 = vmul.f32 %v2245, 0.1
    %v2248 = vmul.f32 %v2246, 0.1
    %v2249 = vadd.f32 %v2247, 0.0
    %v2250 = vadd.f32 %v2248, 0.0
    %vm2251 = vcmp.gt.f32.partialorder %v2249, 0.33
    %vm2252 = vcmp.gt.f32.partialorder %v2250, 0.33
    %v2253 = vsel %vm2251, 0.08272643, 0.0
    %v2254 = vsel %vm2252, 0.08272643, 0.0
    %v2255 = vadd.f32 %v2242, %v2253
    %v2256 = vadd.f32 %v2242, %v2254
    %v2257 = vsel %vm2251, 0.0, %v2249
    %v2258 = vsel %vm2252, 0.0, %v2250
    %v2259 = vmul.f32 %v2245, 0.8
    %v2260 = vmul.f32 %v2246, 0.8
    %v2261 = vld [vmem:[#allocation3 + $0x10] sm:$0xff]
    %v2262 = vld [vmem:[#allocation3 + $0x18] sm:$0xff]
    %v2263 = vadd.f32 %v2259, %v2261
    %v2264 = vadd.f32 %v2260, %v2262
    %v2265 = vsub.f32 %v2263, %v2257
    %v2266 = vsub.f32 %v2264, %v2258
    %v2267 = vmul.f32 %v2265, 0.1
    %v2268 = vmul.f32 %v2266, 0.1
    %v2269 = vadd.f32 %v2257, %v2267
    %v2270 = vadd.f32 %v2258, %v2268
    %vm2271 = vcmp.gt.f32.partialorder %v2269, 0.33
    %vm2272 = vcmp.gt.f32.partialorder %v2270, 0.33
    %v2273 = vsel %vm2271, 0.09109839, 0.0
    %v2274 = vsel %vm2272, 0.09109839, 0.0
    %v2275 = vadd.f32 %v2255, %v2273
    %v2276 = vadd.f32 %v2256, %v2274
    %v2277 = vsel %vm2271, 0.0, %v2269
    %v2278 = vsel %vm2272, 0.0, %v2270
    %v2279 = vmul.f32 %v2263, 0.8
    %v2280 = vmul.f32 %v2264, 0.8
    %v2281 = vld [vmem:[#allocation3 + $0x20] sm:$0xff]
    %v2282 = vld [vmem:[#allocation3 + $0x28] sm:$0xff]
    %v2283 = vadd.f32 %v2279, %v2281
    %v2284 = vadd.f32 %v2280, %v2282
    %v2285 = vsub.f32 %v2283, %v2277
    %v2286 = vsub.f32 %v2284, %v2278
    %v2287 = vmul.f32 %v2285, 0.1
    %v2288 = vmul.f32 %v2286, 0.1
    %v2289 = vadd.f32 %v2277, %v2287
    %v2290 = vadd.f32 %v2278, %v2288
    %vm2291 = vcmp.gt.f32.partialorder %v2289, 0.33
    %vm2292 = vcmp.gt.f32.partialorder %v2290, 0.33
    %v2293 = vsel %vm2291, 0.10019562, 0.0
    %v2294 = vsel %vm2292, 0.10019562, 0.0
    %v2295 = vadd.f32 %v2275, %v2293
    %v2296 = vadd.f32 %v2276, %v2294
    %v2297 = vsel %vm2291, 0.0, %v2289
    %v2298 = vsel %vm2292, 0.0, %v2290
    %v2299 = vmul.f32 %v2283, 0.8
    %v2300 = vmul.f32 %v2284, 0.8
    %v2301 = vld [vmem:[#allocation3 + $0x30] sm:$0xff]
    %v2302 = vld [vmem:[#allocation3 + $0x38] sm:$0xff]
    %v2303 = vadd.f32 %v2299, %v2301
    %v2304 = vadd.f32 %v2300, %v2302
    %v2305 = vsub.f32 %v2303, %v2297
    %v2306 = vsub.f32 %v2304, %v2298
    %v2307 = vmul.f32 %v2305, 0.1
    %v2308 = vmul.f32 %v2306, 0.1
    %v2309 = vadd.f32 %v2297, %v2307
    %v2310 = vadd.f32 %v2298, %v2308
    %vm2311 = vcmp.gt.f32.partialorder %v2309, 0.33
    %vm2312 = vcmp.gt.f32.partialorder %v2310, 0.33
    %v2313 = vsel %vm2311, 0.11004744, 0.0
    %v2314 = vsel %vm2312, 0.11004744, 0.0
    %v2315 = vadd.f32 %v2295, %v2313
    %v2316 = vadd.f32 %v2296, %v2314
    %v2317 = vsel %vm2311, 0.0, %v2309
    %v2318 = vsel %vm2312, 0.0, %v2310
    %v2319 = vmul.f32 %v2303, 0.8
    %v2320 = vmul.f32 %v2304, 0.8
    %v2321 = vld [vmem:[#allocation3 + $0x40] sm:$0xff]
    %v2322 = vld [vmem:[#allocation3 + $0x48] sm:$0xff]
    %v2323 = vadd.f32 %v2319, %v2321
    %v2324 = vadd.f32 %v2320, %v2322
    %v2325 = vsub.f32 %v2323, %v2317
    %v2326 = vsub.f32 %v2324, %v2318
    %v2327 = vmul.f32 %v2325, 0.1
    %v2328 = vmul.f32 %v2326, 0.1
    %v2329 = vadd.f32 %v2317, %v2327
    %v2330 = vadd.f32 %v2318, %v2328
    %vm2331 = vcmp.gt.f32.partialorder %v2329, 0.33
    %vm2332 = vcmp.gt.f32.partialorder %v2330, 0.33
    %v2333 = vsel %vm2331, 0.12067366, 0.0
    %v2334 = vsel %vm2332, 0.12067366, 0.0
    %v2335 = vadd.f32 %v2315, %v2333
    %v2336 = vadd.f32 %v2316, %v2334
    %v2337 = vsel %vm2331, 0.0, %v2329
    %v2338 = vsel %vm2332, 0.0, %v2330
    %v2339 = vmul.f32 %v2323, 0.8
    %v2340 = vmul.f32 %v2324, 0.8
    %v2341 = vld [vmem:[#allocation3 + $0x50] sm:$0xff]
    %v2342 = vld [vmem:[#allocation3 + $0x58] sm:$0xff]
    %v2343 = vadd.f32 %v2339, %v2341
    %v2344 = vadd.f32 %v2340, %v2342
    %v2345 = vsub.f32 %v2343, %v2337
    %v2346 = vsub.f32 %v2344, %v2338
    %v2347 = vmul.f32 %v2345, 0.1
    %v2348 = vmul.f32 %v2346, 0.1
    %v2349 = vadd.f32 %v2337, %v2347
    %v2350 = vadd.f32 %v2338, %v2348
    %vm2351 = vcmp.gt.f32.partialorder %v2349, 0.33
    %vm2352 = vcmp.gt.f32.partialorder %v2350, 0.33
    %v2353 = vsel %vm2351, 0.13208024, 0.0
    %v2354 = vsel %vm2352, 0.13208024, 0.0
    %v2355 = vadd.f32 %v2335, %v2353
    %v2356 = vadd.f32 %v2336, %v2354
    %v2357 = vsel %vm2351, 0.0, %v2349
    %v2358 = vsel %vm2352, 0.0, %v2350
    %v2359 = vmul.f32 %v2343, 0.8
    %v2360 = vmul.f32 %v2344, 0.8
    %v2361 = vld [vmem:[#allocation3 + $0x60] sm:$0xff]
    %v2362 = vld [vmem:[#allocation3 + $0x68] sm:$0xff]
    %v2363 = vadd.f32 %v2359, %v2361
    %v2364 = vadd.f32 %v2360, %v2362
    %v2365 = vsub.f32 %v2363, %v2357
    %v2366 = vsub.f32 %v2364, %v2358
    %v2367 = vmul.f32 %v2365, 0.1
    %v2368 = vmul.f32 %v2366, 0.1
    %v2369 = vadd.f32 %v2357, %v2367
    %v2370 = vadd.f32 %v2358, %v2368
    %vm2371 = vcmp.gt.f32.partialorder %v2369, 0.33
    %vm2372 = vcmp.gt.f32.partialorder %v2370, 0.33
    %v2373 = vsel %vm2371, 0.14425382, 0.0
    %v2374 = vsel %vm2372, 0.14425382, 0.0
    %v2375 = vadd.f32 %v2355, %v2373
    %v2376 = vadd.f32 %v2356, %v2374
    %v2377 = vsel %vm2371, 0.0, %v2369
    %v2378 = vsel %vm2372, 0.0, %v2370
    %v2379 = vmul.f32 %v2363, 0.8
    %v2380 = vmul.f32 %v2364, 0.8
    %v2381 = vld [vmem:[#allocation3 + $0x70] sm:$0xff]
    %v2382 = vld [vmem:[#allocation3 + $0x78] sm:$0xff]
    %v2383 = vadd.f32 %v2379, %v2381
    %v2384 = vadd.f32 %v2380, %v2382
    %v2385 = vsub.f32 %v2383, %v2377
    %v2386 = vsub.f32 %v2384, %v2378
    %v2387 = vmul.f32 %v2385, 0.1
    %v2388 = vmul.f32 %v2386, 0.1
    %v2389 = vadd.f32 %v2377, %v2387
    %v2390 = vadd.f32 %v2378, %v2388
    %vm2391 = vcmp.gt.f32.partialorder %v2389, 0.33
    %vm2392 = vcmp.gt.f32.partialorder %v2390, 0.33
    %v2393 = vsel %vm2391, 0.15715452, 0.0
    %v2394 = vsel %vm2392, 0.15715452, 0.0
    %v2395 = vadd.f32 %v2375, %v2393
    %v2396 = vadd.f32 %v2376, %v2394
    %v2397 = vsel %vm2391, 0.0, %v2389
    %v2398 = vsel %vm2392, 0.0, %v2390
    %v2399 = vmul.f32 %v2383, 0.8
    %v2400 = vmul.f32 %v2384, 0.8
    %v2401 = vld [vmem:[#allocation3 + $0x80] sm:$0xff]
    %v2402 = vld [vmem:[#allocation3 + $0x88] sm:$0xff]
    %v2403 = vadd.f32 %v2399, %v2401
    %v2404 = vadd.f32 %v2400, %v2402
    %v2405 = vsub.f32 %v2403, %v2397
    %v2406 = vsub.f32 %v2404, %v2398
    %v2407 = vmul.f32 %v2405, 0.1
    %v2408 = vmul.f32 %v2406, 0.1
    %v2409 = vadd.f32 %v2397, %v2407
    %v2410 = vadd.f32 %v2398, %v2408
    %vm2411 = vcmp.gt.f32.partialorder %v2409, 0.33
    %vm2412 = vcmp.gt.f32.partialorder %v2410, 0.33
    %v2413 = vsel %vm2411, 0.17070676, 0.0
    %v2414 = vsel %vm2412, 0.17070676, 0.0
    %v2415 = vadd.f32 %v2395, %v2413
    %v2416 = vadd.f32 %v2396, %v2414
    %v2417 = vsel %vm2411, 0.0, %v2409
    %v2418 = vsel %vm2412, 0.0, %v2410
    %v2419 = vmul.f32 %v2403, 0.8
    %v2420 = vmul.f32 %v2404, 0.8
    %v2421 = vld [vmem:[#allocation3 + $0x90] sm:$0xff]
    %v2422 = vld [vmem:[#allocation3 + $0x98] sm:$0xff]
    %v2423 = vadd.f32 %v2419, %v2421
    %v2424 = vadd.f32 %v2420, %v2422
    %v2425 = vsub.f32 %v2423, %v2417
    %v2426 = vsub.f32 %v2424, %v2418
    %v2427 = vmul.f32 %v2425, 0.1
    %v2428 = vmul.f32 %v2426, 0.1
    %v2429 = vadd.f32 %v2417, %v2427
    %v2430 = vadd.f32 %v2418, %v2428
    %vm2431 = vcmp.gt.f32.partialorder %v2429, 0.33
    %vm2432 = vcmp.gt.f32.partialorder %v2430, 0.33
    %v2433 = vsel %vm2431, 0.18478745, 0.0
    %v2434 = vsel %vm2432, 0.18478745, 0.0
    %v2435 = vadd.f32 %v2415, %v2433
    %v2436 = vadd.f32 %v2416, %v2434
    %v2437 = vsel %vm2431, 0.0, %v2429
    %v2438 = vsel %vm2432, 0.0, %v2430
    %v2439 = vmul.f32 %v2423, 0.8
    %v2440 = vmul.f32 %v2424, 0.8
    %v2441 = vld [vmem:[#allocation3 + $0xa0] sm:$0xff]
    %v2442 = vld [vmem:[#allocation3 + $0xa8] sm:$0xff]
    %v2443 = vadd.f32 %v2439, %v2441
    %v2444 = vadd.f32 %v2440, %v2442
    %v2445 = vsub.f32 %v2443, %v2437
    %v2446 = vsub.f32 %v2444, %v2438
    %v2447 = vmul.f32 %v2445, 0.1
    %v2448 = vmul.f32 %v2446, 0.1
    %v2449 = vadd.f32 %v2437, %v2447
    %v2450 = vadd.f32 %v2438, %v2448
    %vm2451 = vcmp.gt.f32.partialorder %v2449, 0.33
    %vm2452 = vcmp.gt.f32.partialorder %v2450, 0.33
    %v2453 = vsel %vm2451, 0.199211, 0.0
    %v2454 = vsel %vm2452, 0.199211, 0.0
    %v2455 = vadd.f32 %v2435, %v2453
    %v2456 = vadd.f32 %v2436, %v2454
    %v2457 = vsel %vm2451, 0.0, %v2449
    %v2458 = vsel %vm2452, 0.0, %v2450
    %v2459 = vmul.f32 %v2443, 0.8
    %v2460 = vmul.f32 %v2444, 0.8
    %v2461 = vld [vmem:[#allocation3 + $0xb0] sm:$0xff]
    %v2462 = vld [vmem:[#allocation3 + $0xb8] sm:$0xff]
    %v2463 = vadd.f32 %v2459, %v2461
    %v2464 = vadd.f32 %v2460, %v2462
    %v2465 = vsub.f32 %v2463, %v2457
    %v2466 = vsub.f32 %v2464, %v2458
    %v2467 = vmul.f32 %v2465, 0.1
    %v2468 = vmul.f32 %v2466, 0.1
    %v2469 = vadd.f32 %v2457, %v2467
    %v2470 = vadd.f32 %v2458, %v2468
    %vm2471 = vcmp.gt.f32.partialorder %v2469, 0.33
    %vm2472 = vcmp.gt.f32.partialorder %v2470, 0.33
    %v2473 = vsel %vm2471, 0.21371005, 0.0
    %v2474 = vsel %vm2472, 0.21371005, 0.0
    %v2475 = vadd.f32 %v2455, %v2473
    %v2476 = vadd.f32 %v2456, %v2474
    %v2477 = vsel %vm2471, 0.0, %v2469
    %v2478 = vsel %vm2472, 0.0, %v2470
    %v2479 = vmul.f32 %v2463, 0.8
    %v2480 = vmul.f32 %v2464, 0.8
    %v2481 = vld [vmem:[#allocation3 + $0xc0] sm:$0xff]
    %v2482 = vld [vmem:[#allocation3 + $0xc8] sm:$0xff]
    %v2483 = vadd.f32 %v2479, %v2481
    %v2484 = vadd.f32 %v2480, %v2482
    %v2485 = vsub.f32 %v2483, %v2477
    %v2486 = vsub.f32 %v2484, %v2478
    %v2487 = vmul.f32 %v2485, 0.1
    %v2488 = vmul.f32 %v2486, 0.1
    %v2489 = vadd.f32 %v2477, %v2487
    %v2490 = vadd.f32 %v2478, %v2488
    %vm2491 = vcmp.gt.f32.partialorder %v2489, 0.33
    %vm2492 = vcmp.gt.f32.partialorder %v2490, 0.33
    %v2493 = vsel %vm2491, 0.22791125, 0.0
    %v2494 = vsel %vm2492, 0.22791125, 0.0
    %v2495 = vadd.f32 %v2475, %v2493
    %v2496 = vadd.f32 %v2476, %v2494
    %v2497 = vsel %vm2491, 0.0, %v2489
    %v2498 = vsel %vm2492, 0.0, %v2490
    %v2499 = vmul.f32 %v2483, 0.8
    %v2500 = vmul.f32 %v2484, 0.8
    %v2501 = vld [vmem:[#allocation3 + $0xd0] sm:$0xff]
    %v2502 = vld [vmem:[#allocation3 + $0xd8] sm:$0xff]
    %v2503 = vadd.f32 %v2499, %v2501
    %v2504 = vadd.f32 %v2500, %v2502
    %v2505 = vsub.f32 %v2503, %v2497
    %v2506 = vsub.f32 %v2504, %v2498
    %v2507 = vmul.f32 %v2505, 0.1
    %v2508 = vmul.f32 %v2506, 0.1
    %v2509 = vadd.f32 %v2497, %v2507
    %v2510 = vadd.f32 %v2498, %v2508
    %vm2511 = vcmp.gt.f32.partialorder %v2509, 0.33
    %vm2512 = vcmp.gt.f32.partialorder %v2510, 0.33
    %v2513 = vsel %vm2511, 0.24130426, 0.0
    %v2514 = vsel %vm2512, 0.24130426, 0.0
    %v2515 = vadd.f32 %v2495, %v2513
    %v2516 = vadd.f32 %v2496, %v2514
    %v2517 = vsel %vm2511, 0.0, %v2509
    %v2518 = vsel %vm2512, 0.0, %v2510
    %v2519 = vmul.f32 %v2503, 0.8
    %v2520 = vmul.f32 %v2504, 0.8
    %v2521 = vld [vmem:[#allocation3 + $0xe0] sm:$0xff]
    %v2522 = vld [vmem:[#allocation3 + $0xe8] sm:$0xff]
    %v2523 = vadd.f32 %v2519, %v2521
    %v2524 = vadd.f32 %v2520, %v2522
    %v2525 = vsub.f32 %v2523, %v2517
    %v2526 = vsub.f32 %v2524, %v2518
    %v2527 = vmul.f32 %v2525, 0.1
    %v2528 = vmul.f32 %v2526, 0.1
    %v2529 = vadd.f32 %v2517, %v2527
    %v2530 = vadd.f32 %v2518, %v2528
    %vm2531 = vcmp.gt.f32.partialorder %v2529, 0.33
    %vm2532 = vcmp.gt.f32.partialorder %v2530, 0.33
    %v2533 = vsel %vm2531, 0.25320277, 0.0
    %v2534 = vsel %vm2532, 0.25320277, 0.0
    %v2535 = vadd.f32 %v2515, %v2533
    %v2536 = vadd.f32 %v2516, %v2534
    %v2537 = vsel %vm2531, 0.0, %v2529
    %v2538 = vsel %vm2532, 0.0, %v2530
    %v2539 = vmul.f32 %v2523, 0.8
    %v2540 = vmul.f32 %v2524, 0.8
    %v2541 = vld [vmem:[#allocation3 + $0xf0] sm:$0xff]
    %v2542 = vld [vmem:[#allocation3 + $0xf8] sm:$0xff]
    %v2543 = vadd.f32 %v2539, %v2541
    %v2544 = vadd.f32 %v2540, %v2542
    %v2545 = vsub.f32 %v2543, %v2537
    %v2546 = vsub.f32 %v2544, %v2538
    %v2547 = vmul.f32 %v2545, 0.1
    %v2548 = vmul.f32 %v2546, 0.1
    %v2549 = vadd.f32 %v2537, %v2547
    %v2550 = vadd.f32 %v2538, %v2548
    %vm2551 = vcmp.gt.f32.partialorder %v2549, 0.33
    %vm2552 = vcmp.gt.f32.partialorder %v2550, 0.33
    %v2553 = vsel %vm2551, 0.26269504, 0.0
    %v2554 = vsel %vm2552, 0.26269504, 0.0
    %v2555 = vadd.f32 %v2535, %v2553
    %v2556 = vadd.f32 %v2536, %v2554
    %v2557 = vsel %vm2551, 0.0, %v2549
    %v2558 = vsel %vm2552, 0.0, %v2550
    %v2559 = vmul.f32 %v2543, 0.8
    %v2560 = vmul.f32 %v2544, 0.8
    %v2561 = vld [vmem:[#allocation3 + $0x100] sm:$0xff]
    %v2562 = vld [vmem:[#allocation3 + $0x108] sm:$0xff]
    %v2563 = vadd.f32 %v2559, %v2561
    %v2564 = vadd.f32 %v2560, %v2562
    %v2565 = vsub.f32 %v2563, %v2557
    %v2566 = vsub.f32 %v2564, %v2558
    %v2567 = vmul.f32 %v2565, 0.1
    %v2568 = vmul.f32 %v2566, 0.1
    %v2569 = vadd.f32 %v2557, %v2567
    %v2570 = vadd.f32 %v2558, %v2568
    %vm2571 = vcmp.gt.f32.partialorder %v2569, 0.33
    %vm2572 = vcmp.gt.f32.partialorder %v2570, 0.33
    %v2573 = vsel %vm2571, 0.2685817, 0.0
    %v2574 = vsel %vm2572, 0.2685817, 0.0
    %v2575 = vadd.f32 %v2555, %v2573
    %v2576 = vadd.f32 %v2556, %v2574
    %v2577 = vsel %vm2571, 0.0, %v2569
    %v2578 = vsel %vm2572, 0.0, %v2570
    %v2579 = vmul.f32 %v2563, 0.8
    %v2580 = vmul.f32 %v2564, 0.8
    %v2581 = vld [vmem:[#allocation3 + $0x110] sm:$0xff]
    %v2582 = vld [vmem:[#allocation3 + $0x118] sm:$0xff]
    %v2583 = vadd.f32 %v2579, %v2581
    %v2584 = vadd.f32 %v2580, %v2582
    %v2585 = vsub.f32 %v2583, %v2577
    %v2586 = vsub.f32 %v2584, %v2578
    %v2587 = vmul.f32 %v2585, 0.1
    %v2588 = vmul.f32 %v2586, 0.1
    %v2589 = vadd.f32 %v2577, %v2587
    %v2590 = vadd.f32 %v2578, %v2588
    %vm2591 = vcmp.gt.f32.partialorder %v2589, 0.33
    %vm2592 = vcmp.gt.f32.partialorder %v2590, 0.33
    %v2593 = vsel %vm2591, 0.269297, 0.0
    %v2594 = vsel %vm2592, 0.269297, 0.0
    %v2595 = vadd.f32 %v2575, %v2593
    %v2596 = vadd.f32 %v2576, %v2594
    %v2597 = vsel %vm2591, 0.0, %v2589
    %v2598 = vsel %vm2592, 0.0, %v2590
    %v2599 = vmul.f32 %v2583, 0.8
    %v2600 = vmul.f32 %v2584, 0.8
    %v2601 = vld [vmem:[#allocation3 + $0x120] sm:$0xff]
    %v2602 = vld [vmem:[#allocation3 + $0x128] sm:$0xff]
    %v2603 = vadd.f32 %v2599, %v2601
    %v2604 = vadd.f32 %v2600, %v2602
    %v2605 = vsub.f32 %v2603, %v2597
    %v2606 = vsub.f32 %v2604, %v2598
    %v2607 = vmul.f32 %v2605, 0.1
    %v2608 = vmul.f32 %v2606, 0.1
    %v2609 = vadd.f32 %v2597, %v2607
    %v2610 = vadd.f32 %v2598, %v2608
    %vm2611 = vcmp.gt.f32.partialorder %v2609, 0.33
    %vm2612 = vcmp.gt.f32.partialorder %v2610, 0.33
    %v2613 = vsel %vm2611, 0.26281, 0.0
    %v2614 = vsel %vm2612, 0.26281, 0.0
    %v2615 = vadd.f32 %v2595, %v2613
    %v2616 = vadd.f32 %v2596, %v2614
    %v2617 = vsel %vm2611, 0.0, %v2609
    %v2618 = vsel %vm2612, 0.0, %v2610
    %v2619 = vmul.f32 %v2603, 0.8
    %v2620 = vmul.f32 %v2604, 0.8
    %v2621 = vld [vmem:[#allocation3 + $0x130] sm:$0xff]
    %v2622 = vld [vmem:[#allocation3 + $0x138] sm:$0xff]
    %v2623 = vadd.f32 %v2619, %v2621
    %v2624 = vadd.f32 %v2620, %v2622
    %v2625 = vsub.f32 %v2623, %v2617
    %v2626 = vsub.f32 %v2624, %v2618
    %v2627 = vmul.f32 %v2625, 0.1
    %v2628 = vmul.f32 %v2626, 0.1
    %v2629 = vadd.f32 %v2617, %v2627
    %v2630 = vadd.f32 %v2618, %v2628
    %vm2631 = vcmp.gt.f32.partialorder %v2629, 0.33
    %vm2632 = vcmp.gt.f32.partialorder %v2630, 0.33
    %v2633 = vsel %vm2631, 0.2465, 0.0
    %v2634 = vsel %vm2632, 0.2465, 0.0
    %v2635 = vadd.f32 %v2615, %v2633
    %v2636 = vadd.f32 %v2616, %v2634
    %v2637 = vsel %vm2631, 0.0, %v2629
    %v2638 = vsel %vm2632, 0.0, %v2630
    %v2639 = vmul.f32 %v2623, 0.8
    %v2640 = vmul.f32 %v2624, 0.8
    %v2641 = vld [vmem:[#allocation3 + $0x140] sm:$0xff]
    %v2642 = vld [vmem:[#allocation3 + $0x148] sm:$0xff]
    %v2643 = vadd.f32 %v2639, %v2641
    %v2644 = vadd.f32 %v2640, %v2642
    %v2645 = vsub.f32 %v2643, %v2637
    %v2646 = vsub.f32 %v2644, %v2638
    %v2647 = vmul.f32 %v2645, 0.1
    %v2648 = vmul.f32 %v2646, 0.1
    %v2649 = vadd.f32 %v2637, %v2647
    %v2650 = vadd.f32 %v2638, %v2648
    %vm2651 = vcmp.gt.f32.partialorder %v2649, 0.33
    %vm2652 = vcmp.gt.f32.partialorder %v2650, 0.33
    %v2653 = vsel %vm2651, 0.217, 0.0
    %v2654 = vsel %vm2652, 0.217, 0.0
    %v2655 = vadd.f32 %v2635, %v2653
    %v2656 = vadd.f32 %v2636, %v2654
    %v2657 = vsel %vm2651, 0.0, %v2649
    %v2658 = vsel %vm2652, 0.0, %v2650
    %v2659 = vmul.f32 %v2643, 0.8
    %v2660 = vmul.f32 %v2644, 0.8
    %v2661 = vld [vmem:[#allocation3 + $0x150] sm:$0xff]
    %v2662 = vld [vmem:[#allocation3 + $0x158] sm:$0xff]
    %v2663 = vadd.f32 %v2659, %v2661
    %v2664 = vadd.f32 %v2660, %v2662
    %v2665 = vsub.f32 %v2663, %v2657
    %v2666 = vsub.f32 %v2664, %v2658
    %v2667 = vmul.f32 %v2665, 0.1
    %v2668 = vmul.f32 %v2666, 0.1
    %v2669 = vadd.f32 %v2657, %v2667
    %v2670 = vadd.f32 %v2658, %v2668
    %vm2671 = vcmp.gt.f32.partialorder %v2669, 0.33
    %vm2672 = vcmp.gt.f32.partialorder %v2670, 0.33
    %v2673 = vsel %vm2671, 0.17, 0.0
    %v2674 = vsel %vm2672, 0.17, 0.0
    %v2675 = vadd.f32 %v2655, %v2673
    %v2676 = vadd.f32 %v2656, %v2674
    %v2677 = vsel %vm2671, 0.0, %v2669
    %v2678 = vsel %vm2672, 0.0, %v2670
    %v2679 = vmul.f32 %v2663, 0.8
    %v2680 = vmul.f32 %v2664, 0.8
    %v2681 = vld [vmem:[#allocation3 + $0x160] sm:$0xff]
    %v2682 = vld [vmem:[#allocation3 + $0x168] sm:$0xff]
    %v2683 = vadd.f32 %v2679, %v2681
    %v2684 = vadd.f32 %v2680, %v2682
    %v2685 = vsub.f32 %v2683, %v2677
    %v2686 = vsub.f32 %v2684, %v2678
    %v2687 = vmul.f32 %v2685, 0.1
    %v2688 = vmul.f32 %v2686, 0.1
    %v2689 = vadd.f32 %v2677, %v2687
    %v2690 = vadd.f32 %v2678, %v2688
    %vm2691 = vcmp.gt.f32.partialorder %v2689, 0.33
    %vm2692 = vcmp.gt.f32.partialorder %v2690, 0.33
    %v2693 = vsel %vm2691, 0.1, 0.0
    %v2694 = vsel %vm2692, 0.1, 0.0
    %v2695 = vadd.f32 %v2675, %v2693
    %v2696 = vadd.f32 %v2676, %v2694
    %v2697 = vld [vmem:[#allocation15] sm:$0xff]
    %v2698 = vld [vmem:[#allocation15 + $0x8] sm:$0xff]
    %v2699 = vld [vmem:[#allocation15 + $0x10] sm:$0xff]
    %v2700 = vld [vmem:[#allocation15 + $0x18] sm:$0xff]
    %v2701 = vld [vmem:[#allocation15 + $0x20] sm:$0xff]
    %v2702 = vld [vmem:[#allocation15 + $0x28] sm:$0xff]
    %v2703 = vld [vmem:[#allocation15 + $0x30] sm:$0xff]
    %v2704 = vld [vmem:[#allocation15 + $0x38] sm:$0xff]
    %v2705 = vld [vmem:[#allocation15 + $0x40] sm:$0xff]
    %v2706 = vld [vmem:[#allocation15 + $0x48] sm:$0xff]
    %v2707 = vld [vmem:[#allocation15 + $0x50] sm:$0xff]
    %v2708 = vld [vmem:[#allocation15 + $0x58] sm:$0xff]
    %v2709 = vld [vmem:[#allocation15 + $0x60] sm:$0xff]
    %v2710 = vld [vmem:[#allocation15 + $0x68] sm:$0xff]
    %v2711 = vld [vmem:[#allocation15 + $0x70] sm:$0xff]
    %v2712 = vld [vmem:[#allocation15 + $0x78] sm:$0xff]
    %v2713 = vld [vmem:[#allocation15 + $0x80] sm:$0xff]
    %v2714 = vld [vmem:[#allocation15 + $0x88] sm:$0xff]
    %v2715 = vld [vmem:[#allocation15 + $0x90] sm:$0xff]
    %v2716 = vld [vmem:[#allocation15 + $0x98] sm:$0xff]
    %v2717 = vld [vmem:[#allocation15 + $0xa0] sm:$0xff]
    %v2718 = vld [vmem:[#allocation15 + $0xa8] sm:$0xff]
    %v2719 = vld [vmem:[#allocation15 + $0xb0] sm:$0xff]
    %v2720 = vld [vmem:[#allocation15 + $0xb8] sm:$0xff]
    %v2721 = vld [vmem:[#allocation15 + $0xc0] sm:$0xff]
    %v2722 = vld [vmem:[#allocation15 + $0xc8] sm:$0xff]
    %v2723 = vld [vmem:[#allocation15 + $0xd0] sm:$0xff]
    %v2724 = vld [vmem:[#allocation15 + $0xd8] sm:$0xff]
    %v2725 = vld [vmem:[#allocation15 + $0xe0] sm:$0xff]
    %v2726 = vld [vmem:[#allocation15 + $0xe8] sm:$0xff]
    %v2727 = vld [vmem:[#allocation15 + $0xf0] sm:$0xff]
    %v2728 = vld [vmem:[#allocation15 + $0xf8] sm:$0xff]
    %2729 = vmatprep.subr.mxu0 0.0
    %2730 = vmatpush1.msra.mxu0 %v2697
    %2731 = vmatprep.subr.mxu0 0.0
    %2732 = vmatpush1.msra.mxu0 %v2698
    %2733 = vmatprep.subr.mxu0 0.0
    %2734 = vmatpush1.msra.mxu0 %v2699
    %2735 = vmatprep.subr.mxu0 0.0
    %2736 = vmatpush1.msra.mxu0 %v2700
    %2737 = vmatprep.subr.mxu0 0.0
    %2738 = vmatpush1.msra.mxu0 %v2701
    %2739 = vmatprep.subr.mxu0 0.0
    %2740 = vmatpush1.msra.mxu0 %v2702
    %2741 = vmatprep.subr.mxu0 0.0
    %2742 = vmatpush1.msra.mxu0 %v2703
    %2743 = vmatprep.subr.mxu0 0.0
    %2744 = vmatpush1.msra.mxu0 %v2704
    %2745 = vmatprep.subr.mxu0 0.0
    %2746 = vmatpush1.msra.mxu0 %v2705
    %2747 = vmatprep.subr.mxu0 0.0
    %2748 = vmatpush1.msra.mxu0 %v2706
    %2749 = vmatprep.subr.mxu0 0.0
    %2750 = vmatpush1.msra.mxu0 %v2707
    %2751 = vmatprep.subr.mxu0 0.0
    %2752 = vmatpush1.msra.mxu0 %v2708
    %2753 = vmatprep.subr.mxu0 0.0
    %2754 = vmatpush1.msra.mxu0 %v2709
    %2755 = vmatprep.subr.mxu0 0.0
    %2756 = vmatpush1.msra.mxu0 %v2710
    %2757 = vmatprep.subr.mxu0 0.0
    %2758 = vmatpush1.msra.mxu0 %v2711
    %2759 = vmatprep.subr.mxu0 0.0
    %2760 = vmatpush1.msra.mxu0 %v2712
    %2761 = vmatprep.subr.mxu0 0.0
    %2762 = vmatpush1.msra.mxu0 %v2713
    %2763 = vmatprep.subr.mxu0 0.0
    %2764 = vmatpush1.msra.mxu0 %v2714
    %2765 = vmatprep.subr.mxu0 0.0
    %2766 = vmatpush1.msra.mxu0 %v2715
    %2767 = vmatprep.subr.mxu0 0.0
    %2768 = vmatpush1.msra.mxu0 %v2716
    %2769 = vmatprep.subr.mxu0 0.0
    %2770 = vmatpush1.msra.mxu0 %v2717
    %2771 = vmatprep.subr.mxu0 0.0
    %2772 = vmatpush1.msra.mxu0 %v2718
    %2773 = vmatprep.subr.mxu0 0.0
    %2774 = vmatpush1.msra.mxu0 %v2719
    %2775 = vmatprep.subr.mxu0 0.0
    %2776 = vmatpush1.msra.mxu0 %v2720
    %2777 = vmatprep.subr.mxu0 0.0
    %2778 = vmatpush1.msra.mxu0 %v2721
    %2779 = vmatprep.subr.mxu0 0.0
    %2780 = vmatpush1.msra.mxu0 %v2722
    %2781 = vmatprep.subr.mxu0 0.0
    %2782 = vmatpush1.msra.mxu0 %v2723
    %2783 = vmatprep.subr.mxu0 0.0
    %2784 = vmatpush1.msra.mxu0 %v2724
    %2785 = vmatprep.subr.mxu0 0.0
    %2786 = vmatpush1.msra.mxu0 %v2725
    %2787 = vmatprep.subr.mxu0 0.0
    %2788 = vmatpush1.msra.mxu0 %v2726
    %2789 = vmatprep.subr.mxu0 0.0
    %2790 = vmatpush1.msra.mxu0 %v2727
    %2791 = vmatprep.subr.mxu0 0.0
    %2792 = vmatpush1.msra.mxu0 %v2728
    %2793 = vmatprep.mubr.f32.mxu0 %v2696
    %2794 = vmatmul.mubr.f32.gmra.mrb[0].mxu0 %v2695
    %v2795 = vpop.f32.mrb[0].mxu0
    %v2796 = vadd.f32 0.0, %v2795
    %v2797 = vpop.f32.mrb[0].mxu0
    %2798 = vdwg.mxu0
    %2799 = vst [vmem:[#allocation16] sm:$0xff] %v2796
    // Predicated region
    $region50: #{tpu_custom_call.1} parent=1 // pred_check
      _
    $region51: #{tpu_custom_call.1} parent=1 // pred_check_branch
      %2801 = sbr.rel (0) target = $region53
    $region52: #{tpu_custom_call.1} parent=1 // pred_region
      %s2803 = ssub.s32 128, 128
      %2804 = vsyncadd [#allocation7], %s2803
      %s2806 = sshll.u32 [#allocation16], 4
      %s2807 = int_to_ptr.vmem [resolvable:$true] %s2806
      %2809 = dma.vmem_to_hbm [thread:$0]  %s2807, 128, %s6, [#allocation7]
    $region53: #{tpu_custom_call.1} parent=1 // pred_fallthru
      _
    // Predicated region
    $region54: #{tpu_custom_call.1} parent=1 // pred_check
      _
    $region55: #{tpu_custom_call.1} parent=1 // pred_check_branch
      %2811 = sbr.rel (0) target = $region57
    $region56: #{tpu_custom_call.1} parent=1 // pred_region
      %2812 = dma.done [#allocation7], 128
    $region57: #{tpu_custom_call.1} parent=1 // pred_fallthru
      _
    %2813 = vsyncpa [#allocation6], 1
    %2814 = vsyncpa [#allocation11], 1
    %2815 = vsyncpa [#allocation14], 1
    %2816 = vsyncpa [#allocation7], 1
    %2817 = vsyncpa [#allocation8], 1

</llo_original>
